<compile_context>
chip_gen: v6e
topology: v6e:2x2x1
jax: 0.10.0
libtpu: 0.0.40
codegen_flags: <defaults>
</compile_context>

<pallas_src>
import functools

import jax
import jax.numpy as jnp
from jax.experimental import pallas as pl
from jax.experimental.pallas import tpu as pltpu

SLOPE = 0.01                   # leaky_relu negative slope
HID = 512                      # per-stream hidden width
K_IN = 7 * 7 * 64              # 3136 flatten width (NHWC order: h, w, c)
K_PAD = 3200                   # K_IN rounded up to a multiple of TK (and 128)
TK = 640                       # K tile for the fused stream matmul (5 steps)
HEAD_PAD = 128                 # lane-dense padded head width (1 value + A adv)
VMEM_LIMIT = 32 * 1024 * 1024  # safe on v5e / v6e / v7x


# ----------------------------------------------------------------------------
# Pallas kernels
# ----------------------------------------------------------------------------
def _matmul_bias_lrelu_kernel(x_ref, w_ref, b_ref, o_ref, *, slope):
    # x: (tm, K) bf16   w: (K, N) bf16   b: (1, N) f32   o: (tm, N) bf16
    y = jnp.dot(x_ref[...], w_ref[...], preferred_element_type=jnp.float32)
    y = y + b_ref[...]
    y = jnp.where(y > 0, y, slope * y)                  # leaky_relu
    o_ref[...] = y.astype(o_ref.dtype)


def _dueling_tail_kernel(x_ref, ws_ref, bs_ref, wh_ref, bh_ref, o_ref, acc_ref,
                         *, slope, nr_actions):
    """Fused tail: [value|advantage] stream matmul (K-tiled, f32 accumulator)
    -> leaky_relu -> [value|advantage] head matmul -> dueling combine."""
    k = pl.program_id(0)

    @pl.when(k == 0)
    def _():
        acc_ref[...] = jnp.zeros_like(acc_ref)

    acc_ref[...] += jnp.dot(x_ref[...], ws_ref[...],
                            preferred_element_type=jnp.float32)

    @pl.when(k == pl.num_programs(0) - 1)
    def _():
        h = acc_ref[...] + bs_ref[...]                  # (B, 2*HID) f32
        h = jnp.where(h > 0, h, slope * h)              # leaky_relu
        # head: column 0 = value, columns 1..A = advantage, rest zero-padded
        y = jnp.dot(h, wh_ref[...], preferred_element_type=jnp.float32)
        y = y + bh_ref[...]                             # (B, HEAD_PAD)
        bsz = y.shape[0]
        col = jax.lax.broadcasted_iota(jnp.int32, y.shape, 1)
        adv_mask = (col >= 1) & (col < 1 + nr_actions)
        # reference: q = value + (advantage - advantage.mean())  [full-tensor mean]
        adv_mean = jnp.sum(jnp.where(adv_mask, y, 0.0)) / (bsz * nr_actions)
        value = y[:, 0:1]
        q = value + (y - adv_mean)
        o_ref[...] = jnp.where(adv_mask, q, 0.0)        # lane-dense (B, 128) store


# ----------------------------------------------------------------------------
# im2col glue (plain JAX, NHWC -> no layout transposes between conv layers)
# TODO(synk): move patch extraction into the Pallas kernel (pl.ds gather from a
#             VMEM-resident input tile) to avoid materializing im2col in HBM.
# ----------------------------------------------------------------------------
def _im2col_nhwc(x, kh, kw, stride):
    """x: (B, H, W, C) -> (B*OH*OW, KH*KW*C), feature order (p, q, c)."""
    B, H, W, C = x.shape
    oh = (H - kh) // stride + 1
    ow = (W - kw) // stride + 1
    cols = []
    for p in range(kh):
        for q in range(kw):
            cols.append(
                x[:, p: p + stride * (oh - 1) + 1: stride,
                     q: q + stride * (ow - 1) + 1: stride, :])   # (B, oh, ow, C)
    cols = jnp.stack(cols, axis=3)                      # (B, oh, ow, kh*kw, C)
    cols = cols.reshape(B * oh * ow, kh * kw * C)
    return cols, oh, ow


def _pick_tm(m, max_tile=512):
    """Largest row tile <= max_tile that divides m and is a multiple of 16."""
    if m <= max_tile:
        return m
    for t in range((max_tile // 16) * 16, 0, -16):
        if m % t == 0:
            return t
    return m                                            # fall back: single block


# ----------------------------------------------------------------------------
# Wrappers
# ----------------------------------------------------------------------------
def conv2d_lrelu_nhwc(x, w_mat, b, kh, kw, stride, out_ch, *, slope=SLOPE):
    """x: (B,H,W,C), w_mat: (KH*KW*C, O) bf16, b: (O,) f32 -> (B,OH,OW,O) bf16."""
    B = x.shape[0]
    cols, oh, ow = _im2col_nhwc(x, kh, kw, stride)
    cols = cols.astype(jnp.bfloat16)
    M, K = cols.shape
    tm = _pick_tm(M)
    y = pl.pallas_call(
        functools.partial(_matmul_bias_lrelu_kernel, slope=slope),
        out_shape=jax.ShapeDtypeStruct((M, out_ch), jnp.bfloat16),
        grid=(M // tm,),
        in_specs=[pl.BlockSpec((tm, K), lambda i: (i, 0)),
                  pl.BlockSpec((K, out_ch), lambda i: (0, 0)),
                  pl.BlockSpec((1, out_ch), lambda i: (0, 0))],
        out_specs=pl.BlockSpec((tm, out_ch), lambda i: (i, 0)),
        compiler_params=pltpu.CompilerParams(
            dimension_semantics=("parallel",),
            vmem_limit_bytes=VMEM_LIMIT),
    )(cols, w_mat, b.reshape(1, out_ch))
    return y.reshape(B, oh, ow, out_ch)


def dueling_tail(flat, ws, bs, wh, bh, *, nr_actions, slope=SLOPE):
    """flat: (B, K_IN) bf16 -> q: (B, nr_actions) f32, one fused pallas_call."""
    B, k_in = flat.shape
    k_pad, n_streams = ws.shape
    flat_p = jnp.pad(flat.astype(jnp.bfloat16), ((0, 0), (0, k_pad - k_in)))
    tk = TK if k_pad % TK == 0 else k_pad
    n_k = k_pad // tk
    q_pad = pl.pallas_call(
        functools.partial(_dueling_tail_kernel, slope=slope,
                          nr_actions=nr_actions),
        out_shape=jax.ShapeDtypeStruct((B, HEAD_PAD), jnp.float32),
        grid=(n_k,),
        in_specs=[pl.BlockSpec((B, tk), lambda k: (0, k)),
                  pl.BlockSpec((tk, n_streams), lambda k: (k, 0)),
                  pl.BlockSpec((1, n_streams), lambda k: (0, 0)),
                  pl.BlockSpec((n_streams, HEAD_PAD), lambda k: (0, 0)),
                  pl.BlockSpec((1, HEAD_PAD), lambda k: (0, 0))],
        out_specs=pl.BlockSpec((B, HEAD_PAD), lambda k: (0, 0)),
        scratch_shapes=[pltpu.VMEM((B, n_streams), jnp.float32)],
        compiler_params=pltpu.CompilerParams(
            dimension_semantics=("arbitrary",),
            vmem_limit_bytes=VMEM_LIMIT),
    )(flat_p, ws, bs, wh, bh)
    return q_pad[:, 1:1 + nr_actions]


# ----------------------------------------------------------------------------
# Parameters (deterministic synthetic init, PyTorch-equivalent fan-in/gains)
# ----------------------------------------------------------------------------
def init_params(key, nr_actions):
    leaky_gain = float(jnp.sqrt(2.0 / (1.0 + SLOPE ** 2)))   # kaiming 'leaky_relu'
    linear_gain = 1.0                                        # kaiming 'linear'

    def kaiming(k, shape, fan_in, gain):
        return (gain / jnp.sqrt(fan_in)) * jax.random.normal(k, shape, jnp.float32)

    def bias(k, shape, fan_in):
        bound = 1.0 / jnp.sqrt(fan_in)
        return jax.random.uniform(k, shape, jnp.float32, -bound, bound)

    def conv_w(k, o, c, kh, kw):
        # PyTorch layout (O, C, KH, KW) -> im2col matmul layout (KH*KW*C, O), bf16
        w = kaiming(k, (o, c, kh, kw), c * kh * kw, leaky_gain)
        return w.transpose(2, 3, 1, 0).reshape(kh * kw * c, o).astype(jnp.bfloat16)

    ks = jax.random.split(key, 14)
    p = {}
    p["conv1_w"] = conv_w(ks[0], 32, 4, 8, 8)
    p["conv1_b"] = bias(ks[1], (32,), 4 * 8 * 8)
    p["conv2_w"] = conv_w(ks[2], 64, 32, 4, 4)
    p["conv2_b"] = bias(ks[3], (64,), 32 * 4 * 4)
    p["conv3_w"] = conv_w(ks[4], 64, 64, 3, 3)
    p["conv3_b"] = bias(ks[5], (64,), 64 * 3 * 3)

    # value_stream / advantage_stream fused along N -> (K_IN, 2*HID), rows laid
    # out in the NHWC flatten order (h, w, c); zero-padded to K_PAD rows, bf16.
    # (To load real PyTorch weights, permute rows (c,h,w) -> (h,w,c) first.)
    vs_w = kaiming(ks[6], (K_IN, HID), K_IN, leaky_gain)
    as_w = kaiming(ks[8], (K_IN, HID), K_IN, leaky_gain)
    ws = jnp.concatenate([vs_w, as_w], axis=1)
    p["streams_w"] = jnp.pad(ws, ((0, K_PAD - K_IN), (0, 0))).astype(jnp.bfloat16)
    vs_b = bias(ks[7], (HID,), K_IN)
    as_b = bias(ks[9], (HID,), K_IN)
    p["streams_b"] = jnp.concatenate([vs_b, as_b]).reshape(1, 2 * HID)

    # value_head (512->1) + advantage_head (512->A) packed into one lane-dense
    # (2*HID, 128) matrix: column 0 = value, columns 1..A = advantage, rest 0.
    vh_w = kaiming(ks[10], (HID, 1), HID, linear_gain)
    ah_w = kaiming(ks[12], (HID, nr_actions), HID, linear_gain)
    wh = jnp.zeros((2 * HID, HEAD_PAD), jnp.float32)
    wh = wh.at[:HID, 0:1].set(vh_w)
    wh = wh.at[HID:, 1:1 + nr_actions].set(ah_w)
    p["head_w"] = wh
    vh_b = bias(ks[11], (1,), HID)
    ah_b = bias(ks[13], (nr_actions,), HID)
    bh = jnp.zeros((1, HEAD_PAD), jnp.float32)
    bh = bh.at[0, 0:1].set(vh_b)
    bh = bh.at[0, 1:1 + nr_actions].set(ah_b)
    p["head_b"] = bh
    return p


# ----------------------------------------------------------------------------
# Forward pass (mirrors DuelingModel.forward)
# ----------------------------------------------------------------------------
def dueling_forward(x, p, *, nr_actions):
    # Single NCHW -> NHWC transpose at the boundary; everything downstream NHWC.
    x = jnp.transpose(x, (0, 2, 3, 1))
    x = conv2d_lrelu_nhwc(x, p["conv1_w"], p["conv1_b"], 8, 8, 4, 32)   # (B,20,20,32)
    x = conv2d_lrelu_nhwc(x, p["conv2_w"], p["conv2_b"], 4, 4, 2, 64)   # (B, 9, 9,64)
    x = conv2d_lrelu_nhwc(x, p["conv3_w"], p["conv3_b"], 3, 3, 1, 64)   # (B, 7, 7,64)
    B = x.shape[0]
    flat = x.reshape(B, K_IN)                                           # (h, w, c)
    return dueling_tail(flat, p["streams_w"], p["streams_b"],
                        p["head_w"], p["head_b"], nr_actions=nr_actions)


if __name__ == "__main__":
    nr_actions = 6
    key = jax.random.PRNGKey(0)
    kx, kp = jax.random.split(key)

    # Spatial size is forced to 84x84 by the 7*7*64 flatten in the module.
    x = jax.random.normal(kx, (2, 4, 84, 84), jnp.float32)
    params = init_params(kp, nr_actions)

    fwd = jax.jit(functools.partial(dueling_forward, nr_actions=nr_actions))
    q_values = jax.block_until_ready(fwd(x, params))

    assert q_values.shape == (2, nr_actions)
    assert bool(jnp.all(jnp.isfinite(q_values)))
    print("KERNEL_OK")
</pallas_src>

<mosaic_0001>
module attributes {stable_mosaic.version = 11 : i64} {
  func.func @_matmul_bias_lrelu_kernel(%arg0: i32, %arg1: memref<400x256xbf16, #tpu.memory_space<vmem>>, %arg2: memref<256x32xbf16, #tpu.memory_space<vmem>>, %arg3: memref<1x32xf32, #tpu.memory_space<vmem>>, %arg4: memref<400x32xbf16, #tpu.memory_space<vmem>>) attributes {dimension_semantics = [#tpu.dimension_semantics<parallel>], iteration_bounds = array<i64: 2>, scalar_prefetch = 0 : i64, scratch_operands = 0 : i64, tpu.core_type = #tpu.core_type<tc>, window_params = [{transform_indices = @transform_0, window_bounds = array<i64: 400, 256>}, {pipeline_mode = #tpu.pipeline_mode<synchronous>, transform_indices = @transform_1, window_bounds = array<i64: 256, 32>}, {pipeline_mode = #tpu.pipeline_mode<synchronous>, transform_indices = @transform_2, window_bounds = array<i64: 1, 32>}, {transform_indices = @transform_3, window_bounds = array<i64: 400, 32>}]} {
    %c0 = arith.constant 0 : index
    %c0_0 = arith.constant 0 : index
    %0 = vector.load %arg1[%c0, %c0_0] : memref<400x256xbf16, #tpu.memory_space<vmem>>, vector<400x256xbf16>
    %c0_1 = arith.constant 0 : index
    %c0_2 = arith.constant 0 : index
    %1 = vector.load %arg2[%c0_1, %c0_2] : memref<256x32xbf16, #tpu.memory_space<vmem>>, vector<256x32xbf16>
    %cst = arith.constant dense<0.000000e+00> : vector<400x32xf32>
    %2 = tpu.matmul %0, %1, %cst {dimension_numbers = #tpu.dot_dimension_numbers<[1], [0], [0], [1], [0, 0, 1, 1], [], []>} : vector<400x256xbf16>, vector<256x32xbf16>, vector<400x32xf32> -> vector<400x32xf32>
    %c0_3 = arith.constant 0 : index
    %c0_4 = arith.constant 0 : index
    %3 = vector.load %arg3[%c0_3, %c0_4] : memref<1x32xf32, #tpu.memory_space<vmem>>, vector<1x32xf32>
    %4 = vector.broadcast %3 : vector<1x32xf32> to vector<400x32xf32>
    %5 = arith.addf %2, %4 : vector<400x32xf32>
    %cst_5 = arith.constant 0.000000e+00 : f32
    %6 = vector.broadcast %cst_5 : f32 to vector<400x32xf32>
    %7 = arith.cmpf ogt, %5, %6 : vector<400x32xf32>
    %cst_6 = arith.constant 0.00999999977 : f32
    %8 = vector.broadcast %cst_6 : f32 to vector<400x32xf32>
    %9 = arith.mulf %8, %5 : vector<400x32xf32>
    %10 = arith.select %7, %5, %9 : vector<400x32xi1>, vector<400x32xf32>
    %11 = arith.truncf %10 : vector<400x32xf32> to vector<400x32xbf16>
    %c0_7 = arith.constant 0 : index
    %c0_8 = arith.constant 0 : index
    %12 = vector.load %arg4[%c0_7, %c0_8] : memref<400x32xbf16, #tpu.memory_space<vmem>>, vector<400x32xbf16>
    tpu.vector_store %arg4[%c0_7, %c0_8], %11 {strides = array<i32>} : memref<400x32xbf16, #tpu.memory_space<vmem>>, vector<400x32xbf16>,
    return
  }
  func.func @transform_0(%arg0: i32) -> (i32, i32) {
    %c0_i32 = arith.constant 0 : i32
    %c0_i32_0 = arith.constant 0 : i32
    return %arg0, %c0_i32 : i32, i32
  }
  func.func @transform_1(%arg0: i32) -> (i32, i32) {
    %c0_i32 = arith.constant 0 : i32
    %c0_i32_0 = arith.constant 0 : i32
    %c0_i32_1 = arith.constant 0 : i32
    return %c0_i32, %c0_i32_0 : i32, i32
  }
  func.func @transform_2(%arg0: i32) -> (i32, i32) {
    %c0_i32 = arith.constant 0 : i32
    %c0_i32_0 = arith.constant 0 : i32
    %c0_i32_1 = arith.constant 0 : i32
    return %c0_i32, %c0_i32_0 : i32, i32
  }
  func.func @transform_3(%arg0: i32) -> (i32, i32) {
    %c0_i32 = arith.constant 0 : i32
    %c0_i32_0 = arith.constant 0 : i32
    return %arg0, %c0_i32 : i32, i32
  }
}

module attributes {stable_mosaic.version = 11 : i64} {
  func.func @_matmul_bias_lrelu_kernel(%arg0: i32, %arg1: memref<162x512xbf16, #tpu.memory_space<vmem>>, %arg2: memref<512x64xbf16, #tpu.memory_space<vmem>>, %arg3: memref<1x64xf32, #tpu.memory_space<vmem>>, %arg4: memref<162x64xbf16, #tpu.memory_space<vmem>>) attributes {dimension_semantics = [#tpu.dimension_semantics<parallel>], iteration_bounds = array<i64: 1>, scalar_prefetch = 0 : i64, scratch_operands = 0 : i64, tpu.core_type = #tpu.core_type<tc>, window_params = [{transform_indices = @transform_0, window_bounds = array<i64: 162, 512>}, {pipeline_mode = #tpu.pipeline_mode<synchronous>, transform_indices = @transform_1, window_bounds = array<i64: 512, 64>}, {pipeline_mode = #tpu.pipeline_mode<synchronous>, transform_indices = @transform_2, window_bounds = array<i64: 1, 64>}, {transform_indices = @transform_3, window_bounds = array<i64: 162, 64>}]} {
    %c0 = arith.constant 0 : index
    %c0_0 = arith.constant 0 : index
    %0 = vector.load %arg1[%c0, %c0_0] : memref<162x512xbf16, #tpu.memory_space<vmem>>, vector<162x512xbf16>
    %c0_1 = arith.constant 0 : index
    %c0_2 = arith.constant 0 : index
    %1 = vector.load %arg2[%c0_1, %c0_2] : memref<512x64xbf16, #tpu.memory_space<vmem>>, vector<512x64xbf16>
    %cst = arith.constant dense<0.000000e+00> : vector<162x64xf32>
    %2 = tpu.matmul %0, %1, %cst {dimension_numbers = #tpu.dot_dimension_numbers<[1], [0], [0], [1], [0, 0, 1, 1], [], []>} : vector<162x512xbf16>, vector<512x64xbf16>, vector<162x64xf32> -> vector<162x64xf32>
    %c0_3 = arith.constant 0 : index
    %c0_4 = arith.constant 0 : index
    %3 = vector.load %arg3[%c0_3, %c0_4] : memref<1x64xf32, #tpu.memory_space<vmem>>, vector<1x64xf32>
    %4 = vector.broadcast %3 : vector<1x64xf32> to vector<162x64xf32>
    %5 = arith.addf %2, %4 : vector<162x64xf32>
    %cst_5 = arith.constant 0.000000e+00 : f32
    %6 = vector.broadcast %cst_5 : f32 to vector<162x64xf32>
    %7 = arith.cmpf ogt, %5, %6 : vector<162x64xf32>
    %cst_6 = arith.constant 0.00999999977 : f32
    %8 = vector.broadcast %cst_6 : f32 to vector<162x64xf32>
    %9 = arith.mulf %8, %5 : vector<162x64xf32>
    %10 = arith.select %7, %5, %9 : vector<162x64xi1>, vector<162x64xf32>
    %11 = arith.truncf %10 : vector<162x64xf32> to vector<162x64xbf16>
    %c0_7 = arith.constant 0 : index
    %c0_8 = arith.constant 0 : index
    %12 = vector.load %arg4[%c0_7, %c0_8] : memref<162x64xbf16, #tpu.memory_space<vmem>>, vector<162x64xbf16>
    tpu.vector_store %arg4[%c0_7, %c0_8], %11 {strides = array<i32>} : memref<162x64xbf16, #tpu.memory_space<vmem>>, vector<162x64xbf16>,
    return
  }
  func.func @transform_0(%arg0: i32) -> (i32, i32) {
    %c0_i32 = arith.constant 0 : i32
    %c0_i32_0 = arith.constant 0 : i32
    return %arg0, %c0_i32 : i32, i32
  }
  func.func @transform_1(%arg0: i32) -> (i32, i32) {
    %c0_i32 = arith.constant 0 : i32
    %c0_i32_0 = arith.constant 0 : i32
    %c0_i32_1 = arith.constant 0 : i32
    return %c0_i32, %c0_i32_0 : i32, i32
  }
  func.func @transform_2(%arg0: i32) -> (i32, i32) {
    %c0_i32 = arith.constant 0 : i32
    %c0_i32_0 = arith.constant 0 : i32
    %c0_i32_1 = arith.constant 0 : i32
    return %c0_i32, %c0_i32_0 : i32, i32
  }
  func.func @transform_3(%arg0: i32) -> (i32, i32) {
    %c0_i32 = arith.constant 0 : i32
    %c0_i32_0 = arith.constant 0 : i32
    return %arg0, %c0_i32 : i32, i32
  }
}

module attributes {stable_mosaic.version = 11 : i64} {
  func.func @_matmul_bias_lrelu_kernel(%arg0: i32, %arg1: memref<98x576xbf16, #tpu.memory_space<vmem>>, %arg2: memref<576x64xbf16, #tpu.memory_space<vmem>>, %arg3: memref<1x64xf32, #tpu.memory_space<vmem>>, %arg4: memref<98x64xbf16, #tpu.memory_space<vmem>>) attributes {dimension_semantics = [#tpu.dimension_semantics<parallel>], iteration_bounds = array<i64: 1>, scalar_prefetch = 0 : i64, scratch_operands = 0 : i64, tpu.core_type = #tpu.core_type<tc>, window_params = [{transform_indices = @transform_0, window_bounds = array<i64: 98, 576>}, {pipeline_mode = #tpu.pipeline_mode<synchronous>, transform_indices = @transform_1, window_bounds = array<i64: 576, 64>}, {pipeline_mode = #tpu.pipeline_mode<synchronous>, transform_indices = @transform_2, window_bounds = array<i64: 1, 64>}, {transform_indices = @transform_3, window_bounds = array<i64: 98, 64>}]} {
    %c0 = arith.constant 0 : index
    %c0_0 = arith.constant 0 : index
    %0 = vector.load %arg1[%c0, %c0_0] : memref<98x576xbf16, #tpu.memory_space<vmem>>, vector<98x576xbf16>
    %c0_1 = arith.constant 0 : index
    %c0_2 = arith.constant 0 : index
    %1 = vector.load %arg2[%c0_1, %c0_2] : memref<576x64xbf16, #tpu.memory_space<vmem>>, vector<576x64xbf16>
    %cst = arith.constant dense<0.000000e+00> : vector<98x64xf32>
    %2 = tpu.matmul %0, %1, %cst {dimension_numbers = #tpu.dot_dimension_numbers<[1], [0], [0], [1], [0, 0, 1, 1], [], []>} : vector<98x576xbf16>, vector<576x64xbf16>, vector<98x64xf32> -> vector<98x64xf32>
    %c0_3 = arith.constant 0 : index
    %c0_4 = arith.constant 0 : index
    %3 = vector.load %arg3[%c0_3, %c0_4] : memref<1x64xf32, #tpu.memory_space<vmem>>, vector<1x64xf32>
    %4 = vector.broadcast %3 : vector<1x64xf32> to vector<98x64xf32>
    %5 = arith.addf %2, %4 : vector<98x64xf32>
    %cst_5 = arith.constant 0.000000e+00 : f32
    %6 = vector.broadcast %cst_5 : f32 to vector<98x64xf32>
    %7 = arith.cmpf ogt, %5, %6 : vector<98x64xf32>
    %cst_6 = arith.constant 0.00999999977 : f32
    %8 = vector.broadcast %cst_6 : f32 to vector<98x64xf32>
    %9 = arith.mulf %8, %5 : vector<98x64xf32>
    %10 = arith.select %7, %5, %9 : vector<98x64xi1>, vector<98x64xf32>
    %11 = arith.truncf %10 : vector<98x64xf32> to vector<98x64xbf16>
    %c0_7 = arith.constant 0 : index
    %c0_8 = arith.constant 0 : index
    %12 = vector.load %arg4[%c0_7, %c0_8] : memref<98x64xbf16, #tpu.memory_space<vmem>>, vector<98x64xbf16>
    tpu.vector_store %arg4[%c0_7, %c0_8], %11 {strides = array<i32>} : memref<98x64xbf16, #tpu.memory_space<vmem>>, vector<98x64xbf16>,
    return
  }
  func.func @transform_0(%arg0: i32) -> (i32, i32) {
    %c0_i32 = arith.constant 0 : i32
    %c0_i32_0 = arith.constant 0 : i32
    return %arg0, %c0_i32 : i32, i32
  }
  func.func @transform_1(%arg0: i32) -> (i32, i32) {
    %c0_i32 = arith.constant 0 : i32
    %c0_i32_0 = arith.constant 0 : i32
    %c0_i32_1 = arith.constant 0 : i32
    return %c0_i32, %c0_i32_0 : i32, i32
  }
  func.func @transform_2(%arg0: i32) -> (i32, i32) {
    %c0_i32 = arith.constant 0 : i32
    %c0_i32_0 = arith.constant 0 : i32
    %c0_i32_1 = arith.constant 0 : i32
    return %c0_i32, %c0_i32_0 : i32, i32
  }
  func.func @transform_3(%arg0: i32) -> (i32, i32) {
    %c0_i32 = arith.constant 0 : i32
    %c0_i32_0 = arith.constant 0 : i32
    return %arg0, %c0_i32 : i32, i32
  }
}

module attributes {stable_mosaic.version = 11 : i64} {
  func.func @_dueling_tail_kernel(%arg0: i32, %arg1: memref<2x640xbf16, #tpu.memory_space<vmem>>, %arg2: memref<640x1024xbf16, #tpu.memory_space<vmem>>, %arg3: memref<1x1024xf32, #tpu.memory_space<vmem>>, %arg4: memref<1024x128xf32, #tpu.memory_space<vmem>>, %arg5: memref<1x128xf32, #tpu.memory_space<vmem>>, %arg6: memref<2x128xf32, #tpu.memory_space<vmem>>, %arg7: memref<2x1024xf32, #tpu.memory_space<vmem>>) attributes {dimension_semantics = [#tpu.dimension_semantics<arbitrary>], iteration_bounds = array<i64: 5>, scalar_prefetch = 0 : i64, scratch_operands = 1 : i64, tpu.core_type = #tpu.core_type<tc>, window_params = [{transform_indices = @transform_0, window_bounds = array<i64: 2, 640>}, {transform_indices = @transform_1, window_bounds = array<i64: 640, 1024>}, {pipeline_mode = #tpu.pipeline_mode<synchronous>, transform_indices = @transform_2, window_bounds = array<i64: 1, 1024>}, {pipeline_mode = #tpu.pipeline_mode<synchronous>, transform_indices = @transform_3, window_bounds = array<i64: 1024, 128>}, {pipeline_mode = #tpu.pipeline_mode<synchronous>, transform_indices = @transform_4, window_bounds = array<i64: 1, 128>}, {pipeline_mode = #tpu.pipeline_mode<synchronous>, transform_indices = @transform_5, window_bounds = array<i64: 2, 128>}]} {
    %c0_i32 = arith.constant 0 : i32
    %0 = arith.cmpi eq, %arg0, %c0_i32 : i32
    %1 = arith.extui %0 : i1 to i32
    %c0_i32_0 = arith.constant 0 : i32
    %2 = arith.cmpi ne, %1, %c0_i32_0 : i32
    scf.if %2 {
      %cst_9 = arith.constant 0.000000e+00 : f32
      %12 = vector.broadcast %cst_9 : f32 to vector<2x1024xf32>
      %c0_10 = arith.constant 0 : index
      %c0_11 = arith.constant 0 : index
      %13 = vector.load %arg7[%c0_10, %c0_11] : memref<2x1024xf32, #tpu.memory_space<vmem>>, vector<2x1024xf32>
      tpu.vector_store %arg7[%c0_10, %c0_11], %12 {strides = array<i32>} : memref<2x1024xf32, #tpu.memory_space<vmem>>, vector<2x1024xf32>,
    } else {
    }
    %c0 = arith.constant 0 : index
    %c0_1 = arith.constant 0 : index
    %3 = vector.load %arg7[%c0, %c0_1] : memref<2x1024xf32, #tpu.memory_space<vmem>>, vector<2x1024xf32>
    %c0_2 = arith.constant 0 : index
    %c0_3 = arith.constant 0 : index
    %4 = vector.load %arg1[%c0_2, %c0_3] : memref<2x640xbf16, #tpu.memory_space<vmem>>, vector<2x640xbf16>
    %c0_4 = arith.constant 0 : index
    %c0_5 = arith.constant 0 : index
    %5 = vector.load %arg2[%c0_4, %c0_5] : memref<640x1024xbf16, #tpu.memory_space<vmem>>, vector<640x1024xbf16>
    %cst = arith.constant dense<0.000000e+00> : vector<2x1024xf32>
    %6 = tpu.matmul %4, %5, %cst {dimension_numbers = #tpu.dot_dimension_numbers<[1], [0], [0], [1], [0, 0, 1, 1], [], []>} : vector<2x640xbf16>, vector<640x1024xbf16>, vector<2x1024xf32> -> vector<2x1024xf32>
    %7 = arith.addf %3, %6 : vector<2x1024xf32>
    %c0_6 = arith.constant 0 : index
    %c0_7 = arith.constant 0 : index
    %8 = vector.load %arg7[%c0_6, %c0_7] : memref<2x1024xf32, #tpu.memory_space<vmem>>, vector<2x1024xf32>
    tpu.vector_store %arg7[%c0_6, %c0_7], %7 {strides = array<i32>} : memref<2x1024xf32, #tpu.memory_space<vmem>>, vector<2x1024xf32>,
    %c4_i32 = arith.constant 4 : i32
    %9 = arith.cmpi eq, %arg0, %c4_i32 : i32
    %10 = arith.extui %9 : i1 to i32
    %c0_i32_8 = arith.constant 0 : i32
    %11 = arith.cmpi ne, %10, %c0_i32_8 : i32
    scf.if %11 {
      %c0_9 = arith.constant 0 : index
      %c0_10 = arith.constant 0 : index
      %12 = vector.load %arg7[%c0_9, %c0_10] : memref<2x1024xf32, #tpu.memory_space<vmem>>, vector<2x1024xf32>
      %c0_11 = arith.constant 0 : index
      %c0_12 = arith.constant 0 : index
      %13 = vector.load %arg3[%c0_11, %c0_12] : memref<1x1024xf32, #tpu.memory_space<vmem>>, vector<1x1024xf32>
      %14 = vector.broadcast %13 : vector<1x1024xf32> to vector<2x1024xf32>
      %15 = arith.addf %12, %14 : vector<2x1024xf32>
      %cst_13 = arith.constant 0.000000e+00 : f32
      %16 = vector.broadcast %cst_13 : f32 to vector<2x1024xf32>
      %17 = arith.cmpf ogt, %15, %16 : vector<2x1024xf32>
      %cst_14 = arith.constant 0.00999999977 : f32
      %18 = vector.broadcast %cst_14 : f32 to vector<2x1024xf32>
      %19 = arith.mulf %18, %15 : vector<2x1024xf32>
      %20 = arith.select %17, %15, %19 : vector<2x1024xi1>, vector<2x1024xf32>
      %c0_15 = arith.constant 0 : index
      %c0_16 = arith.constant 0 : index
      %21 = vector.load %arg4[%c0_15, %c0_16] : memref<1024x128xf32, #tpu.memory_space<vmem>>, vector<1024x128xf32>
      %cst_17 = arith.constant dense<0.000000e+00> : vector<2x128xf32>
      %22 = tpu.matmul %20, %21, %cst_17 {dimension_numbers = #tpu.dot_dimension_numbers<[1], [0], [0], [1], [0, 0, 1, 1], [], []>} : vector<2x1024xf32>, vector<1024x128xf32>, vector<2x128xf32> -> vector<2x128xf32>
      %c0_18 = arith.constant 0 : index
      %c0_19 = arith.constant 0 : index
      %23 = vector.load %arg5[%c0_18, %c0_19] : memref<1x128xf32, #tpu.memory_space<vmem>>, vector<1x128xf32>
      %24 = vector.broadcast %23 : vector<1x128xf32> to vector<2x128xf32>
      %25 = arith.addf %22, %24 : vector<2x128xf32>
      %26 = tpu.iota {dimensions = array<i32: 1>} : vector<2x128xi32>
      %c1_i32 = arith.constant 1 : i32
      %27 = vector.broadcast %c1_i32 : i32 to vector<2x128xi32>
      %28 = arith.cmpi sge, %26, %27 : vector<2x128xi32>
      %c7_i32 = arith.constant 7 : i32
      %29 = vector.broadcast %c7_i32 : i32 to vector<2x128xi32>
      %30 = arith.cmpi slt, %26, %29 : vector<2x128xi32>
      %31 = arith.andi %28, %30 : vector<2x128xi1>
      %cst_20 = arith.constant 0.000000e+00 : f32
      %32 = vector.broadcast %cst_20 : f32 to vector<2x128xf32>
      %33 = arith.select %31, %25, %32 : vector<2x128xi1>, vector<2x128xf32>
      %34 = vector.shape_cast %33 : vector<2x128xf32> to vector<1x2x128xf32>
      %cst_21 = arith.constant dense<0.000000e+00> : vector<1xf32>
      %35 = vector.multi_reduction <add>, %34, %cst_21 [1, 2] : vector<1x2x128xf32> to vector<1xf32>
      %36 = vector.shape_cast %35 : vector<1xf32> to vector<1x1x1xf32>
      %37 = vector.extract %36[0, 0, 0] : f32 from vector<1x1x1xf32>
      %cst_22 = arith.constant 1.200000e+01 : f32
      %38 = arith.divf %37, %cst_22 : f32
      %39 = vector.extract_strided_slice %25 {offsets = [0, 0], sizes = [2, 1], strides = [1, 1]} : vector<2x128xf32> to vector<2x1xf32>
      %40 = vector.broadcast %38 : f32 to vector<2x128xf32>
      %41 = arith.subf %25, %40 : vector<2x128xf32>
      %42 = vector.broadcast %39 : vector<2x1xf32> to vector<2x128xf32>
      %43 = arith.addf %42, %41 : vector<2x128xf32>
      %cst_23 = arith.constant 0.000000e+00 : f32
      %44 = vector.broadcast %cst_23 : f32 to vector<2x128xf32>
      %45 = arith.select %31, %43, %44 : vector<2x128xi1>, vector<2x128xf32>
      %c0_24 = arith.constant 0 : index
      %c0_25 = arith.constant 0 : index
      %46 = vector.load %arg6[%c0_24, %c0_25] : memref<2x128xf32, #tpu.memory_space<vmem>>, vector<2x128xf32>
      tpu.vector_store %arg6[%c0_24, %c0_25], %45 {strides = array<i32>} : memref<2x128xf32, #tpu.memory_space<vmem>>, vector<2x128xf32>,
    } else {
    }
    return
  }
  func.func @transform_0(%arg0: i32) -> (i32, i32) {
    %c0_i32 = arith.constant 0 : i32
    %c0_i32_0 = arith.constant 0 : i32
    return %c0_i32, %arg0 : i32, i32
  }
  func.func @transform_1(%arg0: i32) -> (i32, i32) {
    %c0_i32 = arith.constant 0 : i32
    %c0_i32_0 = arith.constant 0 : i32
    return %arg0, %c0_i32 : i32, i32
  }
  func.func @transform_2(%arg0: i32) -> (i32, i32) {
    %c0_i32 = arith.constant 0 : i32
    %c0_i32_0 = arith.constant 0 : i32
    %c0_i32_1 = arith.constant 0 : i32
    return %c0_i32, %c0_i32_0 : i32, i32
  }
  func.func @transform_3(%arg0: i32) -> (i32, i32) {
    %c0_i32 = arith.constant 0 : i32
    %c0_i32_0 = arith.constant 0 : i32
    %c0_i32_1 = arith.constant 0 : i32
    return %c0_i32, %c0_i32_0 : i32, i32
  }
  func.func @transform_4(%arg0: i32) -> (i32, i32) {
    %c0_i32 = arith.constant 0 : i32
    %c0_i32_0 = arith.constant 0 : i32
    %c0_i32_1 = arith.constant 0 : i32
    return %c0_i32, %c0_i32_0 : i32, i32
  }
  func.func @transform_5(%arg0: i32) -> (i32, i32) {
    %c0_i32 = arith.constant 0 : i32
    %c0_i32_0 = arith.constant 0 : i32
    %c0_i32_1 = arith.constant 0 : i32
    return %c0_i32, %c0_i32_0 : i32, i32
  }
}

</mosaic_0001>

<llo_original>
// kernel: dueling_forward.4
$region0: #{dueling_forward.4}
  #allocation0 [shape = 'u32[]', space=smem, size = 0x4, offset = 0x4, fixed_abs, tag = 'smem constant byte address 0x4 - core index']
  #allocation1 [shape = 'u32[144,128]{1,0:T(1,128)}', space=vmem, size = 0x12000, scoped, tag = 'internal scratch']
  %s0 = inlined_call_operand.vmem [shape: bf16[800,256], index: 0, kind: input, shape index: {}]
  %s1 = inlined_call_operand.vmem [shape: bf16[256,32], index: 1, kind: input, shape index: {}]
  %s2 = inlined_call_operand.vmem [shape: f32[1,32], index: 2, kind: input, shape index: {}]
  %s3 = inlined_call_operand.vmem [shape: bf16[800,32], index: 3, kind: output, shape index: {}]
  %s4 = sld [smem:[#allocation0]]
  $region45: #{dueling_forward.4} parent=0
    _
  %s6 = ssub.s32 1, %s4
  %s7 = scalar_select 0, %s6, %s4
  loop: start=0, step=1, limit=4
  $region2: #{dueling_forward.4} parent=0 // loop_pre_header
    _
  $region3: #{dueling_forward.4} parent=0 // loop_header
    %s9 = sphi 0, %s13
    %p10 = scmp.ge.s32.totalorder %s9, 4
    %s19 = sphi 0, %s21
    %s22 = sphi 0, %s19
    %s23 = sphi 0, %s22
    %s39 = sphi 0, %s23
    %s43 = sphi 0, %s43
    %s45 = sphi 0, %s43
    %s46 = sphi 0, %s45
    %s60 = sphi 0, %s46
    %s64 = sphi 0, %s64
    %s66 = sphi 0, %s64
    %s67 = sphi 0, %s66
    %s81 = sphi 0, %s67
    %s87 = sphi 0, %s89
    %s90 = sphi 0, %s87
    %s91 = sphi 0, %s90
    %s107 = sphi 0, %s91
  $region4: #{dueling_forward.4} parent=0 // loop_header_branch
    %12 = sbr.rel (%p10) target = $region8
  $region5: #{dueling_forward.4} parent=0 // loop_body
    %s14 = ssub.s32 %s9, 1
    %s15 = ssub.s32 %s9, 2
    %s16 = sadd.s32 %s9, 1
    %s17 = ssub.s32 %s9, %s16
    %p18 = scmp.eq.s32.totalorder %s17, 0
    %s20 = sadd.s32 %s19, 1
    %s21 = scalar_select %p18, %s19, %s20
    %p24 = pneg %p18
    %p25 = scmp.eq.s32.totalorder %s9, 1
    %p26 = por %p24, %p25
    %p27 = scmp.ne.s32.totalorder %s19, %s22
    %p28 = scmp.eq.s32.totalorder %s9, 0
    %p29 = por %p27, %p28
    %p30 = scmp.ne.s32.totalorder %s19, %s22
    %p31 = scmp.eq.s32.totalorder %s14, 1
    %p32 = por %p30, %p31
    %p33 = scmp.ne.s32.totalorder %s22, %s23
    %p34 = scmp.eq.s32.totalorder %s14, 0
    %p35 = por %p33, %p34
    %p36 = scmp.ne.s32.totalorder %s22, %s23
    %p37 = scmp.eq.s32.totalorder %s15, 1
    %p38 = por %p36, %p37
    %p40 = scmp.ne.s32.totalorder %s23, %s39
    %p41 = scmp.eq.s32.totalorder %s15, 0
    %p42 = por %p40, %p41
    %s44 = sadd.s32 %s43, 1
    %p47 = scmp.eq.s32.totalorder %s9, 1
    %p48 = scmp.ne.s32.totalorder %s43, %s45
    %p49 = scmp.eq.s32.totalorder %s9, 0
    %p50 = por %p48, %p49
    %p51 = scmp.ne.s32.totalorder %s43, %s45
    %p52 = scmp.eq.s32.totalorder %s14, 1
    %p53 = por %p51, %p52
    %p54 = scmp.ne.s32.totalorder %s45, %s46
    %p55 = scmp.eq.s32.totalorder %s14, 0
    %p56 = por %p54, %p55
    %p57 = scmp.ne.s32.totalorder %s45, %s46
    %p58 = scmp.eq.s32.totalorder %s15, 1
    %p59 = por %p57, %p58
    %p61 = scmp.ne.s32.totalorder %s46, %s60
    %p62 = scmp.eq.s32.totalorder %s15, 0
    %p63 = por %p61, %p62
    %s65 = sadd.s32 %s64, 1
    %p68 = scmp.eq.s32.totalorder %s9, 1
    %p69 = scmp.ne.s32.totalorder %s64, %s66
    %p70 = scmp.eq.s32.totalorder %s9, 0
    %p71 = por %p69, %p70
    %p72 = scmp.ne.s32.totalorder %s64, %s66
    %p73 = scmp.eq.s32.totalorder %s14, 1
    %p74 = por %p72, %p73
    %p75 = scmp.ne.s32.totalorder %s66, %s67
    %p76 = scmp.eq.s32.totalorder %s14, 0
    %p77 = por %p75, %p76
    %p78 = scmp.ne.s32.totalorder %s66, %s67
    %p79 = scmp.eq.s32.totalorder %s15, 1
    %p80 = por %p78, %p79
    %p82 = scmp.ne.s32.totalorder %s67, %s81
    %p83 = scmp.eq.s32.totalorder %s15, 0
    %p84 = por %p82, %p83
    %s85 = ssub.s32 %s9, %s16
    %p86 = scmp.eq.s32.totalorder %s85, 0
    %s88 = sadd.s32 %s87, 1
    %s89 = scalar_select %p86, %s87, %s88
    %p92 = pneg %p86
    %p93 = scmp.eq.s32.totalorder %s9, 1
    %p94 = por %p92, %p93
    %p95 = scmp.ne.s32.totalorder %s87, %s90
    %p96 = scmp.eq.s32.totalorder %s9, 0
    %p97 = por %p95, %p96
    %p98 = scmp.ne.s32.totalorder %s87, %s90
    %p99 = scmp.eq.s32.totalorder %s14, 1
    %p100 = por %p98, %p99
    %p101 = scmp.ne.s32.totalorder %s90, %s91
    %p102 = scmp.eq.s32.totalorder %s14, 0
    %p103 = por %p101, %p102
    %p104 = scmp.ne.s32.totalorder %s90, %s91
    %p105 = scmp.eq.s32.totalorder %s15, 1
    %p106 = por %p104, %p105
    %p108 = scmp.ne.s32.totalorder %s91, %s107
    %p109 = scmp.eq.s32.totalorder %s15, 0
    %p110 = por %p108, %p109
    %p111 = scmp.le.s32.totalorder 1, %s9
    %p112 = scmp.lt.s32.totalorder %s9, 3
    %p113 = pnand %p111, %p112
    %p114 = pneg %p113
    // Predicated region
    $region9: #{dueling_forward.4} parent=5 // pred_check
      _
    $region10: #{dueling_forward.4} parent=5 // pred_check_branch
      %116 = sbr.rel (%p113) target = $region12
    $region11: #{dueling_forward.4} parent=5 // pred_region
      %s117 = ssub.s32 %s9, 1
      // Predicated region
      $region13: #{dueling_forward.4} parent=11 // pred_check
        %p118 = pneg %p56
      $region14: #{dueling_forward.4} parent=11 // pred_check_branch
        %120 = sbr.rel (%p118) target = $region16
      $region15: #{dueling_forward.4} parent=11 // pred_region
        _
      $region16: #{dueling_forward.4} parent=11 // pred_fallthru
        _
      // Predicated region
      $region17: #{dueling_forward.4} parent=11 // pred_check
        %p121 = pneg %p77
      $region18: #{dueling_forward.4} parent=11 // pred_check_branch
        %123 = sbr.rel (%p121) target = $region20
      $region19: #{dueling_forward.4} parent=11 // pred_region
        _
      $region20: #{dueling_forward.4} parent=11 // pred_fallthru
        _
    $region12: #{dueling_forward.4} parent=5 // pred_fallthru
      _
    %p124 = scmp.lt.s32.totalorder %s9, 2
    // Predicated region
    $region21: #{dueling_forward.4} parent=5 // pred_check
      %p125 = pneg %p124
    $region22: #{dueling_forward.4} parent=5 // pred_check_branch
      %127 = sbr.rel (%p125) target = $region24
    $region23: #{dueling_forward.4} parent=5 // pred_region
      // Predicated region
      $region25: #{dueling_forward.4} parent=23 // pred_check
        %p128 = pneg %p29
      $region26: #{dueling_forward.4} parent=23 // pred_check_branch
        %130 = sbr.rel (%p128) target = $region28
      $region27: #{dueling_forward.4} parent=23 // pred_region
        %s131 = smul.u32 50, %s9
        %p132 = scmp.lt.s32.totalorder %s131, 99
        %s133 = scalar_select %p132, %s131, 99
        %s134 = smul.addr %s133, 2
        %s135 = smul.addr %s134, 4
        %s136 = scalar_lea.vmem %s0, %s135
        %s137 = smul.u32 50, %s9
      $region28: #{dueling_forward.4} parent=23 // pred_fallthru
        _
    $region24: #{dueling_forward.4} parent=5 // pred_fallthru
      _
    %p138 = scmp.le.s32.totalorder 1, %s9
    %p139 = scmp.lt.s32.totalorder %s9, 3
    %p140 = pnand %p138, %p139
    %p141 = pneg %p140
    // Predicated region
    $region29: #{dueling_forward.4} parent=5 // pred_check
      _
    $region30: #{dueling_forward.4} parent=5 // pred_check_branch
      %143 = sbr.rel (%p140) target = $region32
    $region31: #{dueling_forward.4} parent=5 // pred_region
      %s144 = ssub.s32 %s9, 1
      %s145 = smul.u32 50, %s14
      %p146 = scmp.lt.s32.totalorder %s145, 99
      %s147 = scalar_select %p146, %s145, 99
      %s148 = smul.addr %s147, 2
      %s149 = smul.addr %s148, 4
      %s150 = scalar_lea.vmem %s0, %s149
      %p151 = pneg %p35
      %p152 = pneg %p32
      %p153 = pneg %p56
      %p154 = pneg %p53
      %p155 = pneg %p77
      %p156 = pneg %p74
      %p157 = pneg %p103
      %p158 = pneg %p100
      %s159 = smul.u32 50, %s14
      %p160 = scmp.lt.s32.totalorder %s159, 99
      %s161 = scalar_select %p160, %s159, 99
      %s162 = smul.addr %s161, 4
      %s163 = scalar_lea.vmem %s3, %s162
      %s164 = smul.u32 50, %s14
      %p165 = scmp.lt.s32.totalorder %s164, 99
      %s166 = scalar_select %p165, %s164, 99
      %s167 = smul.addr %s166, 2
      %s168 = smul.addr %s167, 4
      %s169 = scalar_lea.vmem %s0, %s168
      %s170 = smul.u32 50, %s14
      %s171 = smul.u32 50, %s14
      %p172 = scmp.lt.s32.totalorder %s171, 99
      %s173 = scalar_select %p172, %s171, 99
      %s174 = smul.addr %s173, 4
      %s175 = scalar_lea.vmem %s3, %s174
      %s176 = smul.u32 50, %s14
      %v178 = vld [vmem:[%s169] sm:$0xff]
      %v179 = vld [vmem:[%s169 + $0x8] sm:$0xff]
      %v180 = vld [vmem:[%s169 + $0x10] sm:$0xff]
      %v181 = vld [vmem:[%s169 + $0x18] sm:$0xff]
      %v182 = vld [vmem:[%s169 + $0x20] sm:$0xff]
      %v183 = vld [vmem:[%s169 + $0x28] sm:$0xff]
      %v184 = vld [vmem:[%s169 + $0x30] sm:$0xff]
      %v185 = vld [vmem:[%s169 + $0x38] sm:$0xff]
      %v186 = vld [vmem:[%s169 + $0x40] sm:$0xff]
      %v187 = vld [vmem:[%s169 + $0x48] sm:$0xff]
      %v188 = vld [vmem:[%s169 + $0x50] sm:$0xff]
      %v189 = vld [vmem:[%s169 + $0x58] sm:$0xff]
      %v190 = vld [vmem:[%s169 + $0x60] sm:$0xff]
      %v191 = vld [vmem:[%s169 + $0x68] sm:$0xff]
      %v192 = vld [vmem:[%s169 + $0x70] sm:$0xff]
      %v193 = vld [vmem:[%s169 + $0x78] sm:$0xff]
      %v194 = vld [vmem:[%s169 + $0x80] sm:$0xff]
      %v195 = vld [vmem:[%s169 + $0x88] sm:$0xff]
      %v196 = vld [vmem:[%s169 + $0x90] sm:$0xff]
      %v197 = vld [vmem:[%s169 + $0x98] sm:$0xff]
      %v198 = vld [vmem:[%s169 + $0xa0] sm:$0xff]
      %v199 = vld [vmem:[%s169 + $0xa8] sm:$0xff]
      %v200 = vld [vmem:[%s169 + $0xb0] sm:$0xff]
      %v201 = vld [vmem:[%s169 + $0xb8] sm:$0xff]
      %v202 = vld [vmem:[%s169 + $0xc0] sm:$0xff]
      %v203 = vld [vmem:[%s169 + $0xc8] sm:$0xff]
      %v204 = vld [vmem:[%s169 + $0xd0] sm:$0xff]
      %v205 = vld [vmem:[%s169 + $0xd8] sm:$0xff]
      %v206 = vld [vmem:[%s169 + $0xe0] sm:$0xff]
      %v207 = vld [vmem:[%s169 + $0xe8] sm:$0xff]
      %v208 = vld [vmem:[%s169 + $0xf0] sm:$0xff]
      %v209 = vld [vmem:[%s169 + $0xf8] sm:$0xff]
      %v210 = vld [vmem:[%s169 + $0x100] sm:$0xff]
      %v211 = vld [vmem:[%s169 + $0x108] sm:$0xff]
      %v212 = vld [vmem:[%s169 + $0x110] sm:$0xff]
      %v213 = vld [vmem:[%s169 + $0x118] sm:$0xff]
      %v214 = vld [vmem:[%s169 + $0x120] sm:$0xff]
      %v215 = vld [vmem:[%s169 + $0x128] sm:$0xff]
      %v216 = vld [vmem:[%s169 + $0x130] sm:$0xff]
      %v217 = vld [vmem:[%s169 + $0x138] sm:$0xff]
      %v218 = vld [vmem:[%s169 + $0x140] sm:$0xff]
      %v219 = vld [vmem:[%s169 + $0x148] sm:$0xff]
      %v220 = vld [vmem:[%s169 + $0x150] sm:$0xff]
      %v221 = vld [vmem:[%s169 + $0x158] sm:$0xff]
      %v222 = vld [vmem:[%s169 + $0x160] sm:$0xff]
      %v223 = vld [vmem:[%s169 + $0x168] sm:$0xff]
      %v224 = vld [vmem:[%s169 + $0x170] sm:$0xff]
      %v225 = vld [vmem:[%s169 + $0x178] sm:$0xff]
      %v226 = vld [vmem:[%s169 + $0x180] sm:$0xff]
      %v227 = vld [vmem:[%s169 + $0x188] sm:$0xff]
      %v228 = vld [vmem:[%s1] sm:$0xf]
      %v229 = vld [vmem:[%s1 + $0x4] sm:$0xf]
      %v230 = vld [vmem:[%s1 + $0x8] sm:$0xf]
      %v231 = vld [vmem:[%s1 + $0xc] sm:$0xf]
      %v232 = vld [vmem:[%s1 + $0x10] sm:$0xf]
      %v233 = vld [vmem:[%s1 + $0x14] sm:$0xf]
      %v234 = vld [vmem:[%s1 + $0x18] sm:$0xf]
      %v235 = vld [vmem:[%s1 + $0x1c] sm:$0xf]
      %v236 = vld [vmem:[%s1 + $0x20] sm:$0xf]
      %v237 = vld [vmem:[%s1 + $0x24] sm:$0xf]
      %v238 = vld [vmem:[%s1 + $0x28] sm:$0xf]
      %v239 = vld [vmem:[%s1 + $0x2c] sm:$0xf]
      %v240 = vld [vmem:[%s1 + $0x30] sm:$0xf]
      %v241 = vld [vmem:[%s1 + $0x34] sm:$0xf]
      %v242 = vld [vmem:[%s1 + $0x38] sm:$0xf]
      %v243 = vld [vmem:[%s1 + $0x3c] sm:$0xf]
      %v244 = vld [vmem:[%s1 + $0x40] sm:$0xf]
      %v245 = vld [vmem:[%s1 + $0x44] sm:$0xf]
      %v246 = vld [vmem:[%s1 + $0x48] sm:$0xf]
      %v247 = vld [vmem:[%s1 + $0x4c] sm:$0xf]
      %v248 = vld [vmem:[%s1 + $0x50] sm:$0xf]
      %v249 = vld [vmem:[%s1 + $0x54] sm:$0xf]
      %v250 = vld [vmem:[%s1 + $0x58] sm:$0xf]
      %v251 = vld [vmem:[%s1 + $0x5c] sm:$0xf]
      %v252 = vld [vmem:[%s1 + $0x60] sm:$0xf]
      %v253 = vld [vmem:[%s1 + $0x64] sm:$0xf]
      %v254 = vld [vmem:[%s1 + $0x68] sm:$0xf]
      %v255 = vld [vmem:[%s1 + $0x6c] sm:$0xf]
      %v256 = vld [vmem:[%s1 + $0x70] sm:$0xf]
      %v257 = vld [vmem:[%s1 + $0x74] sm:$0xf]
      %v258 = vld [vmem:[%s1 + $0x78] sm:$0xf]
      %v259 = vld [vmem:[%s1 + $0x7c] sm:$0xf]
      %v260 = vld [vmem:[%s2] sm:$0x1]
      %v262 = vlaneseq
      %v263 = vshrl.u32 %v262, 7
      %v264 = vsub.s32 0, %v263
      %v265 = vrot.slane %v260, %v264
      %v317 = vunpack.c.l.b16 %v178
      %v318 = vunpack.c.h.b16 %v178
      %v319 = vunpack.c.l.b16 %v179
      %v320 = vunpack.c.h.b16 %v179
      %v321 = vunpack.c.l.b16 %v180
      %v322 = vunpack.c.h.b16 %v180
      %v323 = vunpack.c.l.b16 %v181
      %v324 = vunpack.c.h.b16 %v181
      %v325 = vunpack.c.l.b16 %v182
      %v326 = vunpack.c.h.b16 %v182
      %v327 = vunpack.c.l.b16 %v183
      %v328 = vunpack.c.h.b16 %v183
      %v329 = vunpack.c.l.b16 %v184
      %v330 = vunpack.c.h.b16 %v184
      %v331 = vunpack.c.l.b16 %v185
      %v332 = vunpack.c.h.b16 %v185
      %v333 = vunpack.c.l.b16 %v186
      %v334 = vunpack.c.h.b16 %v186
      %v335 = vunpack.c.l.b16 %v187
      %v336 = vunpack.c.h.b16 %v187
      %v337 = vunpack.c.l.b16 %v188
      %v338 = vunpack.c.h.b16 %v188
      %v339 = vunpack.c.l.b16 %v189
      %v340 = vunpack.c.h.b16 %v189
      %v341 = vunpack.c.l.b16 %v190
      %v342 = vunpack.c.h.b16 %v190
      %v343 = vunpack.c.l.b16 %v191
      %v344 = vunpack.c.h.b16 %v191
      %v345 = vunpack.c.l.b16 %v192
      %v346 = vunpack.c.h.b16 %v192
      %v347 = vunpack.c.l.b16 %v193
      %v348 = vunpack.c.h.b16 %v193
      %v349 = vunpack.c.l.b16 %v194
      %v350 = vunpack.c.h.b16 %v194
      %v351 = vunpack.c.l.b16 %v195
      %v352 = vunpack.c.h.b16 %v195
      %v353 = vunpack.c.l.b16 %v196
      %v354 = vunpack.c.h.b16 %v196
      %v355 = vunpack.c.l.b16 %v197
      %v356 = vunpack.c.h.b16 %v197
      %v357 = vunpack.c.l.b16 %v198
      %v358 = vunpack.c.h.b16 %v198
      %v359 = vunpack.c.l.b16 %v199
      %v360 = vunpack.c.h.b16 %v199
      %v361 = vunpack.c.l.b16 %v200
      %v362 = vunpack.c.h.b16 %v200
      %v363 = vunpack.c.l.b16 %v201
      %v364 = vunpack.c.h.b16 %v201
      %v365 = vunpack.c.l.b16 %v202
      %v366 = vunpack.c.h.b16 %v202
      %v367 = vunpack.c.l.b16 %v203
      %v368 = vunpack.c.h.b16 %v203
      %v369 = vunpack.c.l.b16 %v204
      %v370 = vunpack.c.h.b16 %v204
      %v371 = vunpack.c.l.b16 %v205
      %v372 = vunpack.c.h.b16 %v205
      %v373 = vunpack.c.l.b16 %v206
      %v374 = vunpack.c.h.b16 %v206
      %v375 = vunpack.c.l.b16 %v207
      %v376 = vunpack.c.h.b16 %v207
      %v377 = vunpack.c.l.b16 %v208
      %v378 = vunpack.c.h.b16 %v208
      %v379 = vunpack.c.l.b16 %v209
      %v380 = vunpack.c.h.b16 %v209
      %v381 = vunpack.c.l.b16 %v210
      %v382 = vunpack.c.h.b16 %v210
      %v383 = vunpack.c.l.b16 %v211
      %v384 = vunpack.c.h.b16 %v211
      %v385 = vunpack.c.l.b16 %v212
      %v386 = vunpack.c.h.b16 %v212
      %v387 = vunpack.c.l.b16 %v213
      %v388 = vunpack.c.h.b16 %v213
      %v389 = vunpack.c.l.b16 %v214
      %v390 = vunpack.c.h.b16 %v214
      %v391 = vunpack.c.l.b16 %v215
      %v392 = vunpack.c.h.b16 %v215
      %v393 = vunpack.c.l.b16 %v216
      %v394 = vunpack.c.h.b16 %v216
      %v395 = vunpack.c.l.b16 %v217
      %v396 = vunpack.c.h.b16 %v217
      %v397 = vunpack.c.l.b16 %v218
      %v398 = vunpack.c.h.b16 %v218
      %v399 = vunpack.c.l.b16 %v219
      %v400 = vunpack.c.h.b16 %v219
      %v401 = vunpack.c.l.b16 %v220
      %v402 = vunpack.c.h.b16 %v220
      %v403 = vunpack.c.l.b16 %v221
      %v404 = vunpack.c.h.b16 %v221
      %v405 = vunpack.c.l.b16 %v222
      %v406 = vunpack.c.h.b16 %v222
      %v407 = vunpack.c.l.b16 %v223
      %v408 = vunpack.c.h.b16 %v223
      %v409 = vunpack.c.l.b16 %v224
      %v410 = vunpack.c.h.b16 %v224
      %v411 = vunpack.c.l.b16 %v225
      %v412 = vunpack.c.h.b16 %v225
      %v413 = vunpack.c.l.b16 %v226
      %v414 = vunpack.c.h.b16 %v226
      %v415 = vunpack.c.l.b16 %v227
      %v416 = vunpack.c.h.b16 %v227
      %v417 = vpack.c.b16 %v319, %v317
      %v418 = vpack.c.b16 %v320, %v318
      %v419 = vpack.c.b16 %v323, %v321
      %v420 = vpack.c.b16 %v324, %v322
      %v421 = vpack.c.b16 %v327, %v325
      %v422 = vpack.c.b16 %v328, %v326
      %v423 = vpack.c.b16 %v331, %v329
      %v424 = vpack.c.b16 %v332, %v330
      %v425 = vpack.c.b16 %v335, %v333
      %v426 = vpack.c.b16 %v336, %v334
      %v427 = vpack.c.b16 %v339, %v337
      %v428 = vpack.c.b16 %v340, %v338
      %v429 = vpack.c.b16 %v343, %v341
      %v430 = vpack.c.b16 %v344, %v342
      %v431 = vpack.c.b16 %v347, %v345
      %v432 = vpack.c.b16 %v348, %v346
      %v433 = vpack.c.b16 %v351, %v349
      %v434 = vpack.c.b16 %v352, %v350
      %v435 = vpack.c.b16 %v355, %v353
      %v436 = vpack.c.b16 %v356, %v354
      %v437 = vpack.c.b16 %v359, %v357
      %v438 = vpack.c.b16 %v360, %v358
      %v439 = vpack.c.b16 %v363, %v361
      %v440 = vpack.c.b16 %v364, %v362
      %v441 = vpack.c.b16 %v367, %v365
      %v442 = vpack.c.b16 %v368, %v366
      %v443 = vpack.c.b16 %v371, %v369
      %v444 = vpack.c.b16 %v372, %v370
      %v445 = vpack.c.b16 %v375, %v373
      %v446 = vpack.c.b16 %v376, %v374
      %v447 = vpack.c.b16 %v379, %v377
      %v448 = vpack.c.b16 %v380, %v378
      %v449 = vpack.c.b16 %v383, %v381
      %v450 = vpack.c.b16 %v384, %v382
      %v451 = vpack.c.b16 %v387, %v385
      %v452 = vpack.c.b16 %v388, %v386
      %v453 = vpack.c.b16 %v391, %v389
      %v454 = vpack.c.b16 %v392, %v390
      %v455 = vpack.c.b16 %v395, %v393
      %v456 = vpack.c.b16 %v396, %v394
      %v457 = vpack.c.b16 %v399, %v397
      %v458 = vpack.c.b16 %v400, %v398
      %v459 = vpack.c.b16 %v403, %v401
      %v460 = vpack.c.b16 %v404, %v402
      %v461 = vpack.c.b16 %v407, %v405
      %v462 = vpack.c.b16 %v408, %v406
      %v463 = vpack.c.b16 %v411, %v409
      %v464 = vpack.c.b16 %v412, %v410
      %v465 = vpack.c.b16 %v415, %v413
      %v466 = vpack.c.b16 %v416, %v414
      %v549 = vunpack.c.l.b16 %v228
      %v550 = vunpack.c.l.b16 %v229
      %v551 = vunpack.c.l.b16 %v230
      %v552 = vunpack.c.l.b16 %v231
      %v553 = vunpack.c.l.b16 %v232
      %v554 = vunpack.c.l.b16 %v233
      %v555 = vunpack.c.l.b16 %v234
      %v556 = vunpack.c.l.b16 %v235
      %v557 = vunpack.c.l.b16 %v236
      %v558 = vunpack.c.l.b16 %v237
      %v559 = vunpack.c.l.b16 %v238
      %v560 = vunpack.c.l.b16 %v239
      %v561 = vunpack.c.l.b16 %v240
      %v562 = vunpack.c.l.b16 %v241
      %v563 = vunpack.c.l.b16 %v242
      %v564 = vunpack.c.l.b16 %v243
      %v565 = vunpack.c.l.b16 %v244
      %v566 = vunpack.c.l.b16 %v245
      %v567 = vunpack.c.l.b16 %v246
      %v568 = vunpack.c.l.b16 %v247
      %v569 = vunpack.c.l.b16 %v248
      %v570 = vunpack.c.l.b16 %v249
      %v571 = vunpack.c.l.b16 %v250
      %v572 = vunpack.c.l.b16 %v251
      %v573 = vunpack.c.l.b16 %v252
      %v574 = vunpack.c.l.b16 %v253
      %v575 = vunpack.c.l.b16 %v254
      %v576 = vunpack.c.l.b16 %v255
      %v577 = vunpack.c.l.b16 %v256
      %v578 = vunpack.c.l.b16 %v257
      %v579 = vunpack.c.l.b16 %v258
      %v580 = vunpack.c.l.b16 %v259
      %v581 = vpack.c.b16 %v550, %v549
      %v582 = vpack.c.b16 %v552, %v551
      %v583 = vpack.c.b16 %v554, %v553
      %v584 = vpack.c.b16 %v556, %v555
      %v585 = vpack.c.b16 %v558, %v557
      %v586 = vpack.c.b16 %v560, %v559
      %v587 = vpack.c.b16 %v562, %v561
      %v588 = vpack.c.b16 %v564, %v563
      %v589 = vpack.c.b16 %v566, %v565
      %v590 = vpack.c.b16 %v568, %v567
      %v591 = vpack.c.b16 %v570, %v569
      %v592 = vpack.c.b16 %v572, %v571
      %v593 = vpack.c.b16 %v574, %v573
      %v594 = vpack.c.b16 %v576, %v575
      %v595 = vpack.c.b16 %v578, %v577
      %v596 = vpack.c.b16 %v580, %v579
      %613 = vmatprep.subr.bf16.mxu0 0
      %614 = vmatpush1.bf16.msra.mxu0 %v588
      %615 = vmatprep.subr.bf16.mxu0 0
      %616 = vmatpush1.bf16.msra.mxu0 %v587
      %617 = vmatprep.subr.bf16.mxu0 0
      %618 = vmatpush1.bf16.msra.mxu0 %v586
      %619 = vmatprep.subr.bf16.mxu0 0
      %620 = vmatpush1.bf16.msra.mxu0 %v585
      %621 = vmatprep.subr.bf16.mxu0 0
      %622 = vmatpush1.bf16.msra.mxu0 %v584
      %623 = vmatprep.subr.bf16.mxu0 0
      %624 = vmatpush1.bf16.msra.mxu0 %v583
      %625 = vmatprep.subr.bf16.mxu0 0
      %626 = vmatpush1.bf16.msra.mxu0 %v582
      %627 = vmatprep.subr.bf16.mxu0 0
      %628 = vmatpush1.bf16.msra.mxu0 %v581
      %629 = vmatprep.subr.bf16.mxu0 0
      %630 = vmatpush2.bf16.msra.mxu0 %v596
      %631 = vmatprep.subr.bf16.mxu0 0
      %632 = vmatpush2.bf16.msra.mxu0 %v595
      %633 = vmatprep.subr.bf16.mxu0 0
      %634 = vmatpush2.bf16.msra.mxu0 %v594
      %635 = vmatprep.subr.bf16.mxu0 0
      %636 = vmatpush2.bf16.msra.mxu0 %v593
      %637 = vmatprep.subr.bf16.mxu0 0
      %638 = vmatpush2.bf16.msra.mxu0 %v592
      %639 = vmatprep.subr.bf16.mxu0 0
      %640 = vmatpush2.bf16.msra.mxu0 %v591
      %641 = vmatprep.subr.bf16.mxu0 0
      %642 = vmatpush2.bf16.msra.mxu0 %v590
      %643 = vmatprep.subr.bf16.mxu0 0
      %644 = vmatpush2.bf16.msra.mxu0 %v589
      %645 = vmatprep.mubr.bf16.mxu0 %v418
      %646 = vmatmul.mubr.bf16.gmra.mxu0 %v417
      %v647 = vpop.f32.mrf.mxu0
      %v648 = vadd.f32 %v265, %v647
      %v649 = vpop.f32.mrf.mxu0
      %v650 = vpop.f32.mrf.mxu0
      %v651 = vadd.f32 %v265, %v650
      %v652 = vpop.f32.mrf.mxu0
      %653 = vmatprep.mubr.bf16.mxu0 %v420
      %654 = vmatmul.mubr.bf16.gmra.mxu0 %v419
      %v655 = vpop.f32.mrf.mxu0
      %v656 = vadd.f32 %v265, %v655
      %v657 = vpop.f32.mrf.mxu0
      %v658 = vpop.f32.mrf.mxu0
      %v659 = vadd.f32 %v265, %v658
      %v660 = vpop.f32.mrf.mxu0
      %661 = vmatprep.mubr.bf16.mxu0 %v422
      %662 = vmatmul.mubr.bf16.gmra.mxu0 %v421
      %v663 = vpop.f32.mrf.mxu0
      %v664 = vadd.f32 %v265, %v663
      %v665 = vpop.f32.mrf.mxu0
      %v666 = vpop.f32.mrf.mxu0
      %v667 = vadd.f32 %v265, %v666
      %v668 = vpop.f32.mrf.mxu0
      %669 = vmatprep.mubr.bf16.mxu0 %v424
      %670 = vmatmul.mubr.bf16.gmra.mxu0 %v423
      %v671 = vpop.f32.mrf.mxu0
      %v672 = vadd.f32 %v265, %v671
      %v673 = vpop.f32.mrf.mxu0
      %v674 = vpop.f32.mrf.mxu0
      %v675 = vadd.f32 %v265, %v674
      %v676 = vpop.f32.mrf.mxu0
      %677 = vmatprep.mubr.bf16.mxu0 %v426
      %678 = vmatmul.mubr.bf16.gmra.mxu0 %v425
      %v679 = vpop.f32.mrf.mxu0
      %v680 = vadd.f32 %v265, %v679
      %v681 = vpop.f32.mrf.mxu0
      %v682 = vpop.f32.mrf.mxu0
      %v683 = vadd.f32 %v265, %v682
      %v684 = vpop.f32.mrf.mxu0
      %685 = vmatprep.mubr.bf16.mxu0 %v428
      %686 = vmatmul.mubr.bf16.gmra.mxu0 %v427
      %v687 = vpop.f32.mrf.mxu0
      %v688 = vadd.f32 %v265, %v687
      %v689 = vpop.f32.mrf.mxu0
      %v690 = vpop.f32.mrf.mxu0
      %v691 = vadd.f32 %v265, %v690
      %v692 = vpop.f32.mrf.mxu0
      %693 = vmatprep.mubr.bf16.mxu0 %v430
      %694 = vmatmul.mubr.bf16.gmra.mxu0 %v429
      %v695 = vpop.f32.mrf.mxu0
      %v696 = vadd.f32 %v265, %v695
      %v697 = vpop.f32.mrf.mxu0
      %v698 = vpop.f32.mrf.mxu0
      %v699 = vadd.f32 %v265, %v698
      %v700 = vpop.f32.mrf.mxu0
      %701 = vmatprep.mubr.bf16.mxu0 %v432
      %702 = vmatmul.mubr.bf16.gmra.mxu0 %v431
      %v703 = vpop.f32.mrf.mxu0
      %v704 = vadd.f32 %v265, %v703
      %v705 = vpop.f32.mrf.mxu0
      %v706 = vpop.f32.mrf.mxu0
      %v707 = vadd.f32 %v265, %v706
      %v708 = vpop.f32.mrf.mxu0
      %709 = vmatprep.mubr.bf16.mxu0 %v434
      %710 = vmatmul.mubr.bf16.gmra.mxu0 %v433
      %v711 = vpop.f32.mrf.mxu0
      %v712 = vadd.f32 %v265, %v711
      %v713 = vpop.f32.mrf.mxu0
      %v714 = vpop.f32.mrf.mxu0
      %v715 = vadd.f32 %v265, %v714
      %v716 = vpop.f32.mrf.mxu0
      %717 = vmatprep.mubr.bf16.mxu0 %v436
      %718 = vmatmul.mubr.bf16.gmra.mxu0 %v435
      %v719 = vpop.f32.mrf.mxu0
      %v720 = vadd.f32 %v265, %v719
      %v721 = vpop.f32.mrf.mxu0
      %v722 = vpop.f32.mrf.mxu0
      %v723 = vadd.f32 %v265, %v722
      %v724 = vpop.f32.mrf.mxu0
      %725 = vmatprep.mubr.bf16.mxu0 %v438
      %726 = vmatmul.mubr.bf16.gmra.mxu0 %v437
      %v727 = vpop.f32.mrf.mxu0
      %v728 = vadd.f32 %v265, %v727
      %v729 = vpop.f32.mrf.mxu0
      %v730 = vpop.f32.mrf.mxu0
      %v731 = vadd.f32 %v265, %v730
      %v732 = vpop.f32.mrf.mxu0
      %733 = vmatprep.mubr.bf16.mxu0 %v440
      %734 = vmatmul.mubr.bf16.gmra.mxu0 %v439
      %v735 = vpop.f32.mrf.mxu0
      %v736 = vadd.f32 %v265, %v735
      %v737 = vpop.f32.mrf.mxu0
      %v738 = vpop.f32.mrf.mxu0
      %v739 = vadd.f32 %v265, %v738
      %v740 = vpop.f32.mrf.mxu0
      %741 = vmatprep.mubr.bf16.mxu0 %v442
      %742 = vmatmul.mubr.bf16.gmra.mxu0 %v441
      %v743 = vpop.f32.mrf.mxu0
      %v744 = vadd.f32 %v265, %v743
      %v745 = vpop.f32.mrf.mxu0
      %v746 = vpop.f32.mrf.mxu0
      %v747 = vadd.f32 %v265, %v746
      %v748 = vpop.f32.mrf.mxu0
      %749 = vmatprep.mubr.bf16.mxu0 %v444
      %750 = vmatmul.mubr.bf16.gmra.mxu0 %v443
      %v751 = vpop.f32.mrf.mxu0
      %v752 = vadd.f32 %v265, %v751
      %v753 = vpop.f32.mrf.mxu0
      %v754 = vpop.f32.mrf.mxu0
      %v755 = vadd.f32 %v265, %v754
      %v756 = vpop.f32.mrf.mxu0
      %757 = vmatprep.mubr.bf16.mxu0 %v446
      %758 = vmatmul.mubr.bf16.gmra.mxu0 %v445
      %v759 = vpop.f32.mrf.mxu0
      %v760 = vadd.f32 %v265, %v759
      %v761 = vpop.f32.mrf.mxu0
      %v762 = vpop.f32.mrf.mxu0
      %v763 = vadd.f32 %v265, %v762
      %v764 = vpop.f32.mrf.mxu0
      %765 = vmatprep.mubr.bf16.mxu0 %v448
      %766 = vmatmul.mubr.bf16.gmra.mxu0 %v447
      %v767 = vpop.f32.mrf.mxu0
      %v768 = vadd.f32 %v265, %v767
      %v769 = vpop.f32.mrf.mxu0
      %v770 = vpop.f32.mrf.mxu0
      %v771 = vadd.f32 %v265, %v770
      %v772 = vpop.f32.mrf.mxu0
      %773 = vmatprep.mubr.bf16.mxu0 %v450
      %774 = vmatmul.mubr.bf16.gmra.mxu0 %v449
      %v775 = vpop.f32.mrf.mxu0
      %v776 = vadd.f32 %v265, %v775
      %v777 = vpop.f32.mrf.mxu0
      %v778 = vpop.f32.mrf.mxu0
      %v779 = vadd.f32 %v265, %v778
      %v780 = vpop.f32.mrf.mxu0
      %781 = vmatprep.mubr.bf16.mxu0 %v452
      %782 = vmatmul.mubr.bf16.gmra.mxu0 %v451
      %v783 = vpop.f32.mrf.mxu0
      %v784 = vadd.f32 %v265, %v783
      %v785 = vpop.f32.mrf.mxu0
      %v786 = vpop.f32.mrf.mxu0
      %v787 = vadd.f32 %v265, %v786
      %v788 = vpop.f32.mrf.mxu0
      %789 = vmatprep.mubr.bf16.mxu0 %v454
      %790 = vmatmul.mubr.bf16.gmra.mxu0 %v453
      %v791 = vpop.f32.mrf.mxu0
      %v792 = vadd.f32 %v265, %v791
      %v793 = vpop.f32.mrf.mxu0
      %v794 = vpop.f32.mrf.mxu0
      %v795 = vadd.f32 %v265, %v794
      %v796 = vpop.f32.mrf.mxu0
      %797 = vmatprep.mubr.bf16.mxu0 %v456
      %798 = vmatmul.mubr.bf16.gmra.mxu0 %v455
      %v799 = vpop.f32.mrf.mxu0
      %v800 = vadd.f32 %v265, %v799
      %v801 = vpop.f32.mrf.mxu0
      %v802 = vpop.f32.mrf.mxu0
      %v803 = vadd.f32 %v265, %v802
      %v804 = vpop.f32.mrf.mxu0
      %805 = vmatprep.mubr.bf16.mxu0 %v458
      %806 = vmatmul.mubr.bf16.gmra.mxu0 %v457
      %v807 = vpop.f32.mrf.mxu0
      %v808 = vadd.f32 %v265, %v807
      %v809 = vpop.f32.mrf.mxu0
      %v810 = vpop.f32.mrf.mxu0
      %v811 = vadd.f32 %v265, %v810
      %v812 = vpop.f32.mrf.mxu0
      %813 = vmatprep.mubr.bf16.mxu0 %v460
      %814 = vmatmul.mubr.bf16.gmra.mxu0 %v459
      %v815 = vpop.f32.mrf.mxu0
      %v816 = vadd.f32 %v265, %v815
      %v817 = vpop.f32.mrf.mxu0
      %v818 = vpop.f32.mrf.mxu0
      %v819 = vadd.f32 %v265, %v818
      %v820 = vpop.f32.mrf.mxu0
      %821 = vmatprep.mubr.bf16.mxu0 %v462
      %822 = vmatmul.mubr.bf16.gmra.mxu0 %v461
      %v823 = vpop.f32.mrf.mxu0
      %v824 = vadd.f32 %v265, %v823
      %v825 = vpop.f32.mrf.mxu0
      %v826 = vpop.f32.mrf.mxu0
      %v827 = vadd.f32 %v265, %v826
      %v828 = vpop.f32.mrf.mxu0
      %829 = vmatprep.mubr.bf16.mxu0 %v464
      %830 = vmatmul.mubr.bf16.gmra.mxu0 %v463
      %v831 = vpop.f32.mrf.mxu0
      %v832 = vadd.f32 %v265, %v831
      %v833 = vpop.f32.mrf.mxu0
      %v834 = vpop.f32.mrf.mxu0
      %v835 = vadd.f32 %v265, %v834
      %v836 = vpop.f32.mrf.mxu0
      %837 = vmatprep.mubr.bf16.mxu0 %v466
      %838 = vmatmul.mubr.bf16.gmra.mxu0 %v465
      %v839 = vpop.f32.mrf.mxu0
      %v840 = vadd.f32 %v265, %v839
      %v841 = vpop.f32.mrf.mxu0
      %v842 = vpop.f32.mrf.mxu0
      %v843 = vadd.f32 %v265, %v842
      %v844 = vpop.f32.mrf.mxu0
      %845 = vdwg.mxu0
      %vm846 = vcmp.gt.f32.partialorder %v648, 0.0
      %vm847 = vcmp.gt.f32.partialorder %v651, 0.0
      %vm848 = vcmp.gt.f32.partialorder %v656, 0.0
      %vm849 = vcmp.gt.f32.partialorder %v659, 0.0
      %vm850 = vcmp.gt.f32.partialorder %v664, 0.0
      %vm851 = vcmp.gt.f32.partialorder %v667, 0.0
      %vm852 = vcmp.gt.f32.partialorder %v672, 0.0
      %vm853 = vcmp.gt.f32.partialorder %v675, 0.0
      %vm854 = vcmp.gt.f32.partialorder %v680, 0.0
      %vm855 = vcmp.gt.f32.partialorder %v683, 0.0
      %vm856 = vcmp.gt.f32.partialorder %v688, 0.0
      %vm857 = vcmp.gt.f32.partialorder %v691, 0.0
      %vm858 = vcmp.gt.f32.partialorder %v696, 0.0
      %vm859 = vcmp.gt.f32.partialorder %v699, 0.0
      %vm860 = vcmp.gt.f32.partialorder %v704, 0.0
      %vm861 = vcmp.gt.f32.partialorder %v707, 0.0
      %vm862 = vcmp.gt.f32.partialorder %v712, 0.0
      %vm863 = vcmp.gt.f32.partialorder %v715, 0.0
      %vm864 = vcmp.gt.f32.partialorder %v720, 0.0
      %vm865 = vcmp.gt.f32.partialorder %v723, 0.0
      %vm866 = vcmp.gt.f32.partialorder %v728, 0.0
      %vm867 = vcmp.gt.f32.partialorder %v731, 0.0
      %vm868 = vcmp.gt.f32.partialorder %v736, 0.0
      %vm869 = vcmp.gt.f32.partialorder %v739, 0.0
      %vm870 = vcmp.gt.f32.partialorder %v744, 0.0
      %vm871 = vcmp.gt.f32.partialorder %v747, 0.0
      %vm872 = vcmp.gt.f32.partialorder %v752, 0.0
      %vm873 = vcmp.gt.f32.partialorder %v755, 0.0
      %vm874 = vcmp.gt.f32.partialorder %v760, 0.0
      %vm875 = vcmp.gt.f32.partialorder %v763, 0.0
      %vm876 = vcmp.gt.f32.partialorder %v768, 0.0
      %vm877 = vcmp.gt.f32.partialorder %v771, 0.0
      %vm878 = vcmp.gt.f32.partialorder %v776, 0.0
      %vm879 = vcmp.gt.f32.partialorder %v779, 0.0
      %vm880 = vcmp.gt.f32.partialorder %v784, 0.0
      %vm881 = vcmp.gt.f32.partialorder %v787, 0.0
      %vm882 = vcmp.gt.f32.partialorder %v792, 0.0
      %vm883 = vcmp.gt.f32.partialorder %v795, 0.0
      %vm884 = vcmp.gt.f32.partialorder %v800, 0.0
      %vm885 = vcmp.gt.f32.partialorder %v803, 0.0
      %vm886 = vcmp.gt.f32.partialorder %v808, 0.0
      %vm887 = vcmp.gt.f32.partialorder %v811, 0.0
      %vm888 = vcmp.gt.f32.partialorder %v816, 0.0
      %vm889 = vcmp.gt.f32.partialorder %v819, 0.0
      %vm890 = vcmp.gt.f32.partialorder %v824, 0.0
      %vm891 = vcmp.gt.f32.partialorder %v827, 0.0
      %vm892 = vcmp.gt.f32.partialorder %v832, 0.0
      %vm893 = vcmp.gt.f32.partialorder %v835, 0.0
      %vm894 = vcmp.gt.f32.partialorder %v840, 0.0
      %vm895 = vcmp.gt.f32.partialorder %v843, 0.0
      %v896 = vmul.f32 %v648, 0.01
      %v897 = vmul.f32 %v651, 0.01
      %v898 = vmul.f32 %v656, 0.01
      %v899 = vmul.f32 %v659, 0.01
      %v900 = vmul.f32 %v664, 0.01
      %v901 = vmul.f32 %v667, 0.01
      %v902 = vmul.f32 %v672, 0.01
      %v903 = vmul.f32 %v675, 0.01
      %v904 = vmul.f32 %v680, 0.01
      %v905 = vmul.f32 %v683, 0.01
      %v906 = vmul.f32 %v688, 0.01
      %v907 = vmul.f32 %v691, 0.01
      %v908 = vmul.f32 %v696, 0.01
      %v909 = vmul.f32 %v699, 0.01
      %v910 = vmul.f32 %v704, 0.01
      %v911 = vmul.f32 %v707, 0.01
      %v912 = vmul.f32 %v712, 0.01
      %v913 = vmul.f32 %v715, 0.01
      %v914 = vmul.f32 %v720, 0.01
      %v915 = vmul.f32 %v723, 0.01
      %v916 = vmul.f32 %v728, 0.01
      %v917 = vmul.f32 %v731, 0.01
      %v918 = vmul.f32 %v736, 0.01
      %v919 = vmul.f32 %v739, 0.01
      %v920 = vmul.f32 %v744, 0.01
      %v921 = vmul.f32 %v747, 0.01
      %v922 = vmul.f32 %v752, 0.01
      %v923 = vmul.f32 %v755, 0.01
      %v924 = vmul.f32 %v760, 0.01
      %v925 = vmul.f32 %v763, 0.01
      %v926 = vmul.f32 %v768, 0.01
      %v927 = vmul.f32 %v771, 0.01
      %v928 = vmul.f32 %v776, 0.01
      %v929 = vmul.f32 %v779, 0.01
      %v930 = vmul.f32 %v784, 0.01
      %v931 = vmul.f32 %v787, 0.01
      %v932 = vmul.f32 %v792, 0.01
      %v933 = vmul.f32 %v795, 0.01
      %v934 = vmul.f32 %v800, 0.01
      %v935 = vmul.f32 %v803, 0.01
      %v936 = vmul.f32 %v808, 0.01
      %v937 = vmul.f32 %v811, 0.01
      %v938 = vmul.f32 %v816, 0.01
      %v939 = vmul.f32 %v819, 0.01
      %v940 = vmul.f32 %v824, 0.01
      %v941 = vmul.f32 %v827, 0.01
      %v942 = vmul.f32 %v832, 0.01
      %v943 = vmul.f32 %v835, 0.01
      %v944 = vmul.f32 %v840, 0.01
      %v945 = vmul.f32 %v843, 0.01
      %v946 = vsel %vm846, %v648, %v896
      %v947 = vsel %vm847, %v651, %v897
      %v948 = vsel %vm848, %v656, %v898
      %v949 = vsel %vm849, %v659, %v899
      %v950 = vsel %vm850, %v664, %v900
      %v951 = vsel %vm851, %v667, %v901
      %v952 = vsel %vm852, %v672, %v902
      %v953 = vsel %vm853, %v675, %v903
      %v954 = vsel %vm854, %v680, %v904
      %v955 = vsel %vm855, %v683, %v905
      %v956 = vsel %vm856, %v688, %v906
      %v957 = vsel %vm857, %v691, %v907
      %v958 = vsel %vm858, %v696, %v908
      %v959 = vsel %vm859, %v699, %v909
      %v960 = vsel %vm860, %v704, %v910
      %v961 = vsel %vm861, %v707, %v911
      %v962 = vsel %vm862, %v712, %v912
      %v963 = vsel %vm863, %v715, %v913
      %v964 = vsel %vm864, %v720, %v914
      %v965 = vsel %vm865, %v723, %v915
      %v966 = vsel %vm866, %v728, %v916
      %v967 = vsel %vm867, %v731, %v917
      %v968 = vsel %vm868, %v736, %v918
      %v969 = vsel %vm869, %v739, %v919
      %v970 = vsel %vm870, %v744, %v920
      %v971 = vsel %vm871, %v747, %v921
      %v972 = vsel %vm872, %v752, %v922
      %v973 = vsel %vm873, %v755, %v923
      %v974 = vsel %vm874, %v760, %v924
      %v975 = vsel %vm875, %v763, %v925
      %v976 = vsel %vm876, %v768, %v926
      %v977 = vsel %vm877, %v771, %v927
      %v978 = vsel %vm878, %v776, %v928
      %v979 = vsel %vm879, %v779, %v929
      %v980 = vsel %vm880, %v784, %v930
      %v981 = vsel %vm881, %v787, %v931
      %v982 = vsel %vm882, %v792, %v932
      %v983 = vsel %vm883, %v795, %v933
      %v984 = vsel %vm884, %v800, %v934
      %v985 = vsel %vm885, %v803, %v935
      %v986 = vsel %vm886, %v808, %v936
      %v987 = vsel %vm887, %v811, %v937
      %v988 = vsel %vm888, %v816, %v938
      %v989 = vsel %vm889, %v819, %v939
      %v990 = vsel %vm890, %v824, %v940
      %v991 = vsel %vm891, %v827, %v941
      %v992 = vsel %vm892, %v832, %v942
      %v993 = vsel %vm893, %v835, %v943
      %v994 = vsel %vm894, %v840, %v944
      %v995 = vsel %vm895, %v843, %v945
      %v996 = vpack.c.bf16 %v947, %v946
      %v997 = vpack.c.bf16 %v949, %v948
      %v998 = vpack.c.bf16 %v951, %v950
      %v999 = vpack.c.bf16 %v953, %v952
      %v1000 = vpack.c.bf16 %v955, %v954
      %v1001 = vpack.c.bf16 %v957, %v956
      %v1002 = vpack.c.bf16 %v959, %v958
      %v1003 = vpack.c.bf16 %v961, %v960
      %v1004 = vpack.c.bf16 %v963, %v962
      %v1005 = vpack.c.bf16 %v965, %v964
      %v1006 = vpack.c.bf16 %v967, %v966
      %v1007 = vpack.c.bf16 %v969, %v968
      %v1008 = vpack.c.bf16 %v971, %v970
      %v1009 = vpack.c.bf16 %v973, %v972
      %v1010 = vpack.c.bf16 %v975, %v974
      %v1011 = vpack.c.bf16 %v977, %v976
      %v1012 = vpack.c.bf16 %v979, %v978
      %v1013 = vpack.c.bf16 %v981, %v980
      %v1014 = vpack.c.bf16 %v983, %v982
      %v1015 = vpack.c.bf16 %v985, %v984
      %v1016 = vpack.c.bf16 %v987, %v986
      %v1017 = vpack.c.bf16 %v989, %v988
      %v1018 = vpack.c.bf16 %v991, %v990
      %v1019 = vpack.c.bf16 %v993, %v992
      %v1020 = vpack.c.bf16 %v995, %v994
      %v1046 = vunpack.c.l.b16 %v996
      %v1047 = vunpack.c.h.b16 %v996
      %v1048 = vunpack.c.l.b16 %v997
      %v1049 = vunpack.c.h.b16 %v997
      %v1050 = vunpack.c.l.b16 %v998
      %v1051 = vunpack.c.h.b16 %v998
      %v1052 = vunpack.c.l.b16 %v999
      %v1053 = vunpack.c.h.b16 %v999
      %v1054 = vunpack.c.l.b16 %v1000
      %v1055 = vunpack.c.h.b16 %v1000
      %v1056 = vunpack.c.l.b16 %v1001
      %v1057 = vunpack.c.h.b16 %v1001
      %v1058 = vunpack.c.l.b16 %v1002
      %v1059 = vunpack.c.h.b16 %v1002
      %v1060 = vunpack.c.l.b16 %v1003
      %v1061 = vunpack.c.h.b16 %v1003
      %v1062 = vunpack.c.l.b16 %v1004
      %v1063 = vunpack.c.h.b16 %v1004
      %v1064 = vunpack.c.l.b16 %v1005
      %v1065 = vunpack.c.h.b16 %v1005
      %v1066 = vunpack.c.l.b16 %v1006
      %v1067 = vunpack.c.h.b16 %v1006
      %v1068 = vunpack.c.l.b16 %v1007
      %v1069 = vunpack.c.h.b16 %v1007
      %v1070 = vunpack.c.l.b16 %v1008
      %v1071 = vunpack.c.h.b16 %v1008
      %v1072 = vunpack.c.l.b16 %v1009
      %v1073 = vunpack.c.h.b16 %v1009
      %v1074 = vunpack.c.l.b16 %v1010
      %v1075 = vunpack.c.h.b16 %v1010
      %v1076 = vunpack.c.l.b16 %v1011
      %v1077 = vunpack.c.h.b16 %v1011
      %v1078 = vunpack.c.l.b16 %v1012
      %v1079 = vunpack.c.h.b16 %v1012
      %v1080 = vunpack.c.l.b16 %v1013
      %v1081 = vunpack.c.h.b16 %v1013
      %v1082 = vunpack.c.l.b16 %v1014
      %v1083 = vunpack.c.h.b16 %v1014
      %v1084 = vunpack.c.l.b16 %v1015
      %v1085 = vunpack.c.h.b16 %v1015
      %v1086 = vunpack.c.l.b16 %v1016
      %v1087 = vunpack.c.h.b16 %v1016
      %v1088 = vunpack.c.l.b16 %v1017
      %v1089 = vunpack.c.h.b16 %v1017
      %v1090 = vunpack.c.l.b16 %v1018
      %v1091 = vunpack.c.h.b16 %v1018
      %v1092 = vunpack.c.l.b16 %v1019
      %v1093 = vunpack.c.h.b16 %v1019
      %v1094 = vunpack.c.l.b16 %v1020
      %v1095 = vunpack.c.h.b16 %v1020
      %v1096 = vpack.c.b16 %v1046, %v1046
      %v1097 = vpack.c.b16 %v1047, %v1047
      %v1098 = vpack.c.b16 %v1048, %v1048
      %v1099 = vpack.c.b16 %v1049, %v1049
      %v1100 = vpack.c.b16 %v1050, %v1050
      %v1101 = vpack.c.b16 %v1051, %v1051
      %v1102 = vpack.c.b16 %v1052, %v1052
      %v1103 = vpack.c.b16 %v1053, %v1053
      %v1104 = vpack.c.b16 %v1054, %v1054
      %v1105 = vpack.c.b16 %v1055, %v1055
      %v1106 = vpack.c.b16 %v1056, %v1056
      %v1107 = vpack.c.b16 %v1057, %v1057
      %v1108 = vpack.c.b16 %v1058, %v1058
      %v1109 = vpack.c.b16 %v1059, %v1059
      %v1110 = vpack.c.b16 %v1060, %v1060
      %v1111 = vpack.c.b16 %v1061, %v1061
      %v1112 = vpack.c.b16 %v1062, %v1062
      %v1113 = vpack.c.b16 %v1063, %v1063
      %v1114 = vpack.c.b16 %v1064, %v1064
      %v1115 = vpack.c.b16 %v1065, %v1065
      %v1116 = vpack.c.b16 %v1066, %v1066
      %v1117 = vpack.c.b16 %v1067, %v1067
      %v1118 = vpack.c.b16 %v1068, %v1068
      %v1119 = vpack.c.b16 %v1069, %v1069
      %v1120 = vpack.c.b16 %v1070, %v1070
      %v1121 = vpack.c.b16 %v1071, %v1071
      %v1122 = vpack.c.b16 %v1072, %v1072
      %v1123 = vpack.c.b16 %v1073, %v1073
      %v1124 = vpack.c.b16 %v1074, %v1074
      %v1125 = vpack.c.b16 %v1075, %v1075
      %v1126 = vpack.c.b16 %v1076, %v1076
      %v1127 = vpack.c.b16 %v1077, %v1077
      %v1128 = vpack.c.b16 %v1078, %v1078
      %v1129 = vpack.c.b16 %v1079, %v1079
      %v1130 = vpack.c.b16 %v1080, %v1080
      %v1131 = vpack.c.b16 %v1081, %v1081
      %v1132 = vpack.c.b16 %v1082, %v1082
      %v1133 = vpack.c.b16 %v1083, %v1083
      %v1134 = vpack.c.b16 %v1084, %v1084
      %v1135 = vpack.c.b16 %v1085, %v1085
      %v1136 = vpack.c.b16 %v1086, %v1086
      %v1137 = vpack.c.b16 %v1087, %v1087
      %v1138 = vpack.c.b16 %v1088, %v1088
      %v1139 = vpack.c.b16 %v1089, %v1089
      %v1140 = vpack.c.b16 %v1090, %v1090
      %v1141 = vpack.c.b16 %v1091, %v1091
      %v1142 = vpack.c.b16 %v1092, %v1092
      %v1143 = vpack.c.b16 %v1093, %v1093
      %v1144 = vpack.c.b16 %v1094, %v1094
      %v1145 = vpack.c.b16 %v1095, %v1095
      %vm1196 = vcmask 257024
      %1197 = vst.msk [vmem:[%s175] sm:$0xf] %vm1196, %v1096
      %1198 = vst.msk [vmem:[%s175 + $0x4] sm:$0xf] %vm1196, %v1097
      %1199 = vst.msk [vmem:[%s175 + $0x8] sm:$0xf] %vm1196, %v1098
      %1200 = vst.msk [vmem:[%s175 + $0xc] sm:$0xf] %vm1196, %v1099
      %1201 = vst.msk [vmem:[%s175 + $0x10] sm:$0xf] %vm1196, %v1100
      %1202 = vst.msk [vmem:[%s175 + $0x14] sm:$0xf] %vm1196, %v1101
      %1203 = vst.msk [vmem:[%s175 + $0x18] sm:$0xf] %vm1196, %v1102
      %1204 = vst.msk [vmem:[%s175 + $0x1c] sm:$0xf] %vm1196, %v1103
      %1205 = vst.msk [vmem:[%s175 + $0x20] sm:$0xf] %vm1196, %v1104
      %1206 = vst.msk [vmem:[%s175 + $0x24] sm:$0xf] %vm1196, %v1105
      %1207 = vst.msk [vmem:[%s175 + $0x28] sm:$0xf] %vm1196, %v1106
      %1208 = vst.msk [vmem:[%s175 + $0x2c] sm:$0xf] %vm1196, %v1107
      %1209 = vst.msk [vmem:[%s175 + $0x30] sm:$0xf] %vm1196, %v1108
      %1210 = vst.msk [vmem:[%s175 + $0x34] sm:$0xf] %vm1196, %v1109
      %1211 = vst.msk [vmem:[%s175 + $0x38] sm:$0xf] %vm1196, %v1110
      %1212 = vst.msk [vmem:[%s175 + $0x3c] sm:$0xf] %vm1196, %v1111
      %1213 = vst.msk [vmem:[%s175 + $0x40] sm:$0xf] %vm1196, %v1112
      %1214 = vst.msk [vmem:[%s175 + $0x44] sm:$0xf] %vm1196, %v1113
      %1215 = vst.msk [vmem:[%s175 + $0x48] sm:$0xf] %vm1196, %v1114
      %1216 = vst.msk [vmem:[%s175 + $0x4c] sm:$0xf] %vm1196, %v1115
      %1217 = vst.msk [vmem:[%s175 + $0x50] sm:$0xf] %vm1196, %v1116
      %1218 = vst.msk [vmem:[%s175 + $0x54] sm:$0xf] %vm1196, %v1117
      %1219 = vst.msk [vmem:[%s175 + $0x58] sm:$0xf] %vm1196, %v1118
      %1220 = vst.msk [vmem:[%s175 + $0x5c] sm:$0xf] %vm1196, %v1119
      %1221 = vst.msk [vmem:[%s175 + $0x60] sm:$0xf] %vm1196, %v1120
      %1222 = vst.msk [vmem:[%s175 + $0x64] sm:$0xf] %vm1196, %v1121
      %1223 = vst.msk [vmem:[%s175 + $0x68] sm:$0xf] %vm1196, %v1122
      %1224 = vst.msk [vmem:[%s175 + $0x6c] sm:$0xf] %vm1196, %v1123
      %1225 = vst.msk [vmem:[%s175 + $0x70] sm:$0xf] %vm1196, %v1124
      %1226 = vst.msk [vmem:[%s175 + $0x74] sm:$0xf] %vm1196, %v1125
      %1227 = vst.msk [vmem:[%s175 + $0x78] sm:$0xf] %vm1196, %v1126
      %1228 = vst.msk [vmem:[%s175 + $0x7c] sm:$0xf] %vm1196, %v1127
      %1229 = vst.msk [vmem:[%s175 + $0x80] sm:$0xf] %vm1196, %v1128
      %1230 = vst.msk [vmem:[%s175 + $0x84] sm:$0xf] %vm1196, %v1129
      %1231 = vst.msk [vmem:[%s175 + $0x88] sm:$0xf] %vm1196, %v1130
      %1232 = vst.msk [vmem:[%s175 + $0x8c] sm:$0xf] %vm1196, %v1131
      %1233 = vst.msk [vmem:[%s175 + $0x90] sm:$0xf] %vm1196, %v1132
      %1234 = vst.msk [vmem:[%s175 + $0x94] sm:$0xf] %vm1196, %v1133
      %1235 = vst.msk [vmem:[%s175 + $0x98] sm:$0xf] %vm1196, %v1134
      %1236 = vst.msk [vmem:[%s175 + $0x9c] sm:$0xf] %vm1196, %v1135
      %1237 = vst.msk [vmem:[%s175 + $0xa0] sm:$0xf] %vm1196, %v1136
      %1238 = vst.msk [vmem:[%s175 + $0xa4] sm:$0xf] %vm1196, %v1137
      %1239 = vst.msk [vmem:[%s175 + $0xa8] sm:$0xf] %vm1196, %v1138
      %1240 = vst.msk [vmem:[%s175 + $0xac] sm:$0xf] %vm1196, %v1139
      %1241 = vst.msk [vmem:[%s175 + $0xb0] sm:$0xf] %vm1196, %v1140
      %1242 = vst.msk [vmem:[%s175 + $0xb4] sm:$0xf] %vm1196, %v1141
      %1243 = vst.msk [vmem:[%s175 + $0xb8] sm:$0xf] %vm1196, %v1142
      %1244 = vst.msk [vmem:[%s175 + $0xbc] sm:$0xf] %vm1196, %v1143
      %1245 = vst.msk [vmem:[%s175 + $0xc0] sm:$0xf] %vm1196, %v1144
      %1246 = vst.msk [vmem:[%s175 + $0xc4] sm:$0xf] %vm1196, %v1145
      %s1247 = smul.u32 50, %s14
      %p1248 = scmp.lt.s32.totalorder %s1247, 99
      %s1249 = scalar_select %p1248, %s1247, 99
      %s1250 = smul.addr %s1249, 4
      %s1251 = scalar_lea.vmem %s3, %s1250
      // Predicated region
      $region33: #{dueling_forward.4} parent=31 // pred_check
        %p1252 = pneg %p100
      $region34: #{dueling_forward.4} parent=31 // pred_check_branch
        %1254 = sbr.rel (%p1252) target = $region36
      $region35: #{dueling_forward.4} parent=31 // pred_region
        %s1255 = smul.u32 50, %s14
      $region36: #{dueling_forward.4} parent=31 // pred_fallthru
        _
    $region32: #{dueling_forward.4} parent=5 // pred_fallthru
      _
    %p1256 = scmp.le.s32.totalorder 2, %s9
    // Predicated region
    $region37: #{dueling_forward.4} parent=5 // pred_check
      %p1257 = pneg %p1256
    $region38: #{dueling_forward.4} parent=5 // pred_check_branch
      %1259 = sbr.rel (%p1257) target = $region40
    $region39: #{dueling_forward.4} parent=5 // pred_region
      %s1260 = ssub.s32 %s9, 2
      // Predicated region
      $region41: #{dueling_forward.4} parent=39 // pred_check
        %p1261 = pneg %p106
      $region42: #{dueling_forward.4} parent=39 // pred_check_branch
        %1263 = sbr.rel (%p1261) target = $region44
      $region43: #{dueling_forward.4} parent=39 // pred_region
        %s1264 = smul.u32 50, %s15
        %p1265 = scmp.lt.s32.totalorder %s1264, 99
        %s1266 = scalar_select %p1265, %s1264, 99
        %s1267 = smul.addr %s1266, 4
        %s1268 = scalar_lea.vmem %s3, %s1267
      $region44: #{dueling_forward.4} parent=39 // pred_fallthru
        _
    $region40: #{dueling_forward.4} parent=5 // pred_fallthru
      _
  $region6: #{dueling_forward.4} parent=0 // loop_footer
    %s13 = sadd.s32 1, %s9
  $region7: #{dueling_forward.4} parent=0 // loop_footer_branch
    %8 = sbr.rel target = $region3
  $region8: #{dueling_forward.4} parent=0 // loop_exit
    _

// kernel: dueling_forward.5
$region0: #{dueling_forward.5}
  #allocation0 [shape = 'u32[]', space=smem, size = 0x4, offset = 0x4, fixed_abs, tag = 'smem constant byte address 0x4 - core index']
  #allocation1 [shape = 'u32[144,128]{1,0:T(1,128)}', space=vmem, size = 0x12000, scoped, tag = 'internal scratch']
  %s0 = inlined_call_operand.vmem [shape: bf16[162,512], index: 0, kind: input, shape index: {}]
  %s1 = inlined_call_operand.vmem [shape: bf16[512,64], index: 1, kind: input, shape index: {}]
  %s2 = inlined_call_operand.vmem [shape: f32[1,64], index: 2, kind: input, shape index: {}]
  %s3 = inlined_call_operand.vmem [shape: bf16[162,64], index: 3, kind: output, shape index: {}]
  %s4 = sld [smem:[#allocation0]]
  $region22: #{dueling_forward.5} parent=0
    _
  %s6 = ssub.s32 1, %s4
  %s7 = scalar_select 0, %s6, %s4
  // Predicated region
  $region2: #{dueling_forward.5} parent=0 // pred_check
    _
  $region3: #{dueling_forward.5} parent=0 // pred_check_branch
    %9 = sbr.rel (0) target = $region5
  $region4: #{dueling_forward.5} parent=0 // pred_region
    _
  $region5: #{dueling_forward.5} parent=0 // pred_fallthru
    _
  // Predicated region
  $region6: #{dueling_forward.5} parent=0 // pred_check
    _
  $region7: #{dueling_forward.5} parent=0 // pred_check_branch
    %11 = sbr.rel (0) target = $region9
  $region8: #{dueling_forward.5} parent=0 // pred_region
    _
  $region9: #{dueling_forward.5} parent=0 // pred_fallthru
    _
  // Predicated region
  $region10: #{dueling_forward.5} parent=0 // pred_check
    _
  $region11: #{dueling_forward.5} parent=0 // pred_check_branch
    %13 = sbr.rel (0) target = $region13
  $region12: #{dueling_forward.5} parent=0 // pred_region
    _
  $region13: #{dueling_forward.5} parent=0 // pred_fallthru
    _
  %v15 = vld [vmem:[%s0] sm:$0xff]
  %v16 = vld [vmem:[%s0 + $0x8] sm:$0xff]
  %v17 = vld [vmem:[%s0 + $0x10] sm:$0xff]
  %v18 = vld [vmem:[%s0 + $0x18] sm:$0xff]
  %v19 = vld [vmem:[%s0 + $0x20] sm:$0xff]
  %v20 = vld [vmem:[%s0 + $0x28] sm:$0xff]
  %v21 = vld [vmem:[%s0 + $0x30] sm:$0xff]
  %v22 = vld [vmem:[%s0 + $0x38] sm:$0xff]
  %v23 = vld [vmem:[%s0 + $0x40] sm:$0xff]
  %v24 = vld [vmem:[%s0 + $0x48] sm:$0xff]
  %v25 = vld [vmem:[%s0 + $0x50] sm:$0xff]
  %v26 = vld [vmem:[%s0 + $0x58] sm:$0xff]
  %v27 = vld [vmem:[%s0 + $0x60] sm:$0xff]
  %v28 = vld [vmem:[%s0 + $0x68] sm:$0xff]
  %v29 = vld [vmem:[%s0 + $0x70] sm:$0xff]
  %v30 = vld [vmem:[%s0 + $0x78] sm:$0xff]
  %v31 = vld [vmem:[%s0 + $0x80] sm:$0xff]
  %v32 = vld [vmem:[%s0 + $0x88] sm:$0xff]
  %v33 = vld [vmem:[%s0 + $0x90] sm:$0xff]
  %v34 = vld [vmem:[%s0 + $0x98] sm:$0xff]
  %v35 = vld [vmem:[%s0 + $0xa0] sm:$0xff]
  %v36 = vld [vmem:[%s0 + $0xa8] sm:$0xff]
  %v37 = vld [vmem:[%s0 + $0xb0] sm:$0xff]
  %v38 = vld [vmem:[%s0 + $0xb8] sm:$0xff]
  %v39 = vld [vmem:[%s0 + $0xc0] sm:$0xff]
  %v40 = vld [vmem:[%s0 + $0xc8] sm:$0xff]
  %v41 = vld [vmem:[%s0 + $0xd0] sm:$0xff]
  %v42 = vld [vmem:[%s0 + $0xd8] sm:$0xff]
  %v43 = vld [vmem:[%s0 + $0xe0] sm:$0xff]
  %v44 = vld [vmem:[%s0 + $0xe8] sm:$0xff]
  %v45 = vld [vmem:[%s0 + $0xf0] sm:$0xff]
  %v46 = vld [vmem:[%s0 + $0xf8] sm:$0xff]
  %v47 = vld [vmem:[%s0 + $0x100] sm:$0xff]
  %v48 = vld [vmem:[%s0 + $0x108] sm:$0xff]
  %v49 = vld [vmem:[%s0 + $0x110] sm:$0xff]
  %v50 = vld [vmem:[%s0 + $0x118] sm:$0xff]
  %v51 = vld [vmem:[%s0 + $0x120] sm:$0xff]
  %v52 = vld [vmem:[%s0 + $0x128] sm:$0xff]
  %v53 = vld [vmem:[%s0 + $0x130] sm:$0xff]
  %v54 = vld [vmem:[%s0 + $0x138] sm:$0xff]
  %v55 = vld [vmem:[%s0 + $0x140] sm:$0x11]
  %v56 = vld [vmem:[%s0 + $0x148] sm:$0x11]
  %v57 = vld [vmem:[%s1] sm:$0xf]
  %v58 = vld [vmem:[%s1 + $0x4] sm:$0xf]
  %v59 = vld [vmem:[%s1 + $0x8] sm:$0xf]
  %v60 = vld [vmem:[%s1 + $0xc] sm:$0xf]
  %v61 = vld [vmem:[%s1 + $0x10] sm:$0xf]
  %v62 = vld [vmem:[%s1 + $0x14] sm:$0xf]
  %v63 = vld [vmem:[%s1 + $0x18] sm:$0xf]
  %v64 = vld [vmem:[%s1 + $0x1c] sm:$0xf]
  %v65 = vld [vmem:[%s1 + $0x20] sm:$0xf]
  %v66 = vld [vmem:[%s1 + $0x24] sm:$0xf]
  %v67 = vld [vmem:[%s1 + $0x28] sm:$0xf]
  %v68 = vld [vmem:[%s1 + $0x2c] sm:$0xf]
  %v69 = vld [vmem:[%s1 + $0x30] sm:$0xf]
  %v70 = vld [vmem:[%s1 + $0x34] sm:$0xf]
  %v71 = vld [vmem:[%s1 + $0x38] sm:$0xf]
  %v72 = vld [vmem:[%s1 + $0x3c] sm:$0xf]
  %v73 = vld [vmem:[%s1 + $0x40] sm:$0xf]
  %v74 = vld [vmem:[%s1 + $0x44] sm:$0xf]
  %v75 = vld [vmem:[%s1 + $0x48] sm:$0xf]
  %v76 = vld [vmem:[%s1 + $0x4c] sm:$0xf]
  %v77 = vld [vmem:[%s1 + $0x50] sm:$0xf]
  %v78 = vld [vmem:[%s1 + $0x54] sm:$0xf]
  %v79 = vld [vmem:[%s1 + $0x58] sm:$0xf]
  %v80 = vld [vmem:[%s1 + $0x5c] sm:$0xf]
  %v81 = vld [vmem:[%s1 + $0x60] sm:$0xf]
  %v82 = vld [vmem:[%s1 + $0x64] sm:$0xf]
  %v83 = vld [vmem:[%s1 + $0x68] sm:$0xf]
  %v84 = vld [vmem:[%s1 + $0x6c] sm:$0xf]
  %v85 = vld [vmem:[%s1 + $0x70] sm:$0xf]
  %v86 = vld [vmem:[%s1 + $0x74] sm:$0xf]
  %v87 = vld [vmem:[%s1 + $0x78] sm:$0xf]
  %v88 = vld [vmem:[%s1 + $0x7c] sm:$0xf]
  %v89 = vld [vmem:[%s1 + $0x80] sm:$0xf]
  %v90 = vld [vmem:[%s1 + $0x84] sm:$0xf]
  %v91 = vld [vmem:[%s1 + $0x88] sm:$0xf]
  %v92 = vld [vmem:[%s1 + $0x8c] sm:$0xf]
  %v93 = vld [vmem:[%s1 + $0x90] sm:$0xf]
  %v94 = vld [vmem:[%s1 + $0x94] sm:$0xf]
  %v95 = vld [vmem:[%s1 + $0x98] sm:$0xf]
  %v96 = vld [vmem:[%s1 + $0x9c] sm:$0xf]
  %v97 = vld [vmem:[%s1 + $0xa0] sm:$0xf]
  %v98 = vld [vmem:[%s1 + $0xa4] sm:$0xf]
  %v99 = vld [vmem:[%s1 + $0xa8] sm:$0xf]
  %v100 = vld [vmem:[%s1 + $0xac] sm:$0xf]
  %v101 = vld [vmem:[%s1 + $0xb0] sm:$0xf]
  %v102 = vld [vmem:[%s1 + $0xb4] sm:$0xf]
  %v103 = vld [vmem:[%s1 + $0xb8] sm:$0xf]
  %v104 = vld [vmem:[%s1 + $0xbc] sm:$0xf]
  %v105 = vld [vmem:[%s1 + $0xc0] sm:$0xf]
  %v106 = vld [vmem:[%s1 + $0xc4] sm:$0xf]
  %v107 = vld [vmem:[%s1 + $0xc8] sm:$0xf]
  %v108 = vld [vmem:[%s1 + $0xcc] sm:$0xf]
  %v109 = vld [vmem:[%s1 + $0xd0] sm:$0xf]
  %v110 = vld [vmem:[%s1 + $0xd4] sm:$0xf]
  %v111 = vld [vmem:[%s1 + $0xd8] sm:$0xf]
  %v112 = vld [vmem:[%s1 + $0xdc] sm:$0xf]
  %v113 = vld [vmem:[%s1 + $0xe0] sm:$0xf]
  %v114 = vld [vmem:[%s1 + $0xe4] sm:$0xf]
  %v115 = vld [vmem:[%s1 + $0xe8] sm:$0xf]
  %v116 = vld [vmem:[%s1 + $0xec] sm:$0xf]
  %v117 = vld [vmem:[%s1 + $0xf0] sm:$0xf]
  %v118 = vld [vmem:[%s1 + $0xf4] sm:$0xf]
  %v119 = vld [vmem:[%s1 + $0xf8] sm:$0xf]
  %v120 = vld [vmem:[%s1 + $0xfc] sm:$0xf]
  %v121 = vld [vmem:[%s2] sm:$0x1]
  %v123 = vlaneseq
  %v124 = vshrl.u32 %v123, 7
  %v125 = vsub.s32 0, %v124
  %v126 = vrot.slane %v121, %v125
  %v170 = vunpack.c.l.b16 %v15
  %v171 = vunpack.c.h.b16 %v15
  %v172 = vunpack.c.l.b16 %v16
  %v173 = vunpack.c.h.b16 %v16
  %v174 = vunpack.c.l.b16 %v17
  %v175 = vunpack.c.h.b16 %v17
  %v176 = vunpack.c.l.b16 %v18
  %v177 = vunpack.c.h.b16 %v18
  %v178 = vunpack.c.l.b16 %v19
  %v179 = vunpack.c.h.b16 %v19
  %v180 = vunpack.c.l.b16 %v20
  %v181 = vunpack.c.h.b16 %v20
  %v182 = vunpack.c.l.b16 %v21
  %v183 = vunpack.c.h.b16 %v21
  %v184 = vunpack.c.l.b16 %v22
  %v185 = vunpack.c.h.b16 %v22
  %v186 = vunpack.c.l.b16 %v23
  %v187 = vunpack.c.h.b16 %v23
  %v188 = vunpack.c.l.b16 %v24
  %v189 = vunpack.c.h.b16 %v24
  %v190 = vunpack.c.l.b16 %v25
  %v191 = vunpack.c.h.b16 %v25
  %v192 = vunpack.c.l.b16 %v26
  %v193 = vunpack.c.h.b16 %v26
  %v194 = vunpack.c.l.b16 %v27
  %v195 = vunpack.c.h.b16 %v27
  %v196 = vunpack.c.l.b16 %v28
  %v197 = vunpack.c.h.b16 %v28
  %v198 = vunpack.c.l.b16 %v29
  %v199 = vunpack.c.h.b16 %v29
  %v200 = vunpack.c.l.b16 %v30
  %v201 = vunpack.c.h.b16 %v30
  %v202 = vunpack.c.l.b16 %v31
  %v203 = vunpack.c.h.b16 %v31
  %v204 = vunpack.c.l.b16 %v32
  %v205 = vunpack.c.h.b16 %v32
  %v206 = vunpack.c.l.b16 %v33
  %v207 = vunpack.c.h.b16 %v33
  %v208 = vunpack.c.l.b16 %v34
  %v209 = vunpack.c.h.b16 %v34
  %v210 = vunpack.c.l.b16 %v35
  %v211 = vunpack.c.h.b16 %v35
  %v212 = vunpack.c.l.b16 %v36
  %v213 = vunpack.c.h.b16 %v36
  %v214 = vunpack.c.l.b16 %v37
  %v215 = vunpack.c.h.b16 %v37
  %v216 = vunpack.c.l.b16 %v38
  %v217 = vunpack.c.h.b16 %v38
  %v218 = vunpack.c.l.b16 %v39
  %v219 = vunpack.c.h.b16 %v39
  %v220 = vunpack.c.l.b16 %v40
  %v221 = vunpack.c.h.b16 %v40
  %v222 = vunpack.c.l.b16 %v41
  %v223 = vunpack.c.h.b16 %v41
  %v224 = vunpack.c.l.b16 %v42
  %v225 = vunpack.c.h.b16 %v42
  %v226 = vunpack.c.l.b16 %v43
  %v227 = vunpack.c.h.b16 %v43
  %v228 = vunpack.c.l.b16 %v44
  %v229 = vunpack.c.h.b16 %v44
  %v230 = vunpack.c.l.b16 %v45
  %v231 = vunpack.c.h.b16 %v45
  %v232 = vunpack.c.l.b16 %v46
  %v233 = vunpack.c.h.b16 %v46
  %v234 = vunpack.c.l.b16 %v47
  %v235 = vunpack.c.h.b16 %v47
  %v236 = vunpack.c.l.b16 %v48
  %v237 = vunpack.c.h.b16 %v48
  %v238 = vunpack.c.l.b16 %v49
  %v239 = vunpack.c.h.b16 %v49
  %v240 = vunpack.c.l.b16 %v50
  %v241 = vunpack.c.h.b16 %v50
  %v242 = vunpack.c.l.b16 %v51
  %v243 = vunpack.c.h.b16 %v51
  %v244 = vunpack.c.l.b16 %v52
  %v245 = vunpack.c.h.b16 %v52
  %v246 = vunpack.c.l.b16 %v53
  %v247 = vunpack.c.h.b16 %v53
  %v248 = vunpack.c.l.b16 %v54
  %v249 = vunpack.c.h.b16 %v54
  %v250 = vunpack.c.l.b16 %v55
  %v251 = vunpack.c.h.b16 %v55
  %v252 = vunpack.c.l.b16 %v56
  %v253 = vunpack.c.h.b16 %v56
  %v254 = vpack.c.b16 %v174, %v170
  %v255 = vpack.c.b16 %v175, %v171
  %v256 = vpack.c.b16 %v176, %v172
  %v257 = vpack.c.b16 %v177, %v173
  %v258 = vpack.c.b16 %v182, %v178
  %v259 = vpack.c.b16 %v183, %v179
  %v260 = vpack.c.b16 %v184, %v180
  %v261 = vpack.c.b16 %v185, %v181
  %v262 = vpack.c.b16 %v190, %v186
  %v263 = vpack.c.b16 %v191, %v187
  %v264 = vpack.c.b16 %v192, %v188
  %v265 = vpack.c.b16 %v193, %v189
  %v266 = vpack.c.b16 %v198, %v194
  %v267 = vpack.c.b16 %v199, %v195
  %v268 = vpack.c.b16 %v200, %v196
  %v269 = vpack.c.b16 %v201, %v197
  %v270 = vpack.c.b16 %v206, %v202
  %v271 = vpack.c.b16 %v207, %v203
  %v272 = vpack.c.b16 %v208, %v204
  %v273 = vpack.c.b16 %v209, %v205
  %v274 = vpack.c.b16 %v214, %v210
  %v275 = vpack.c.b16 %v215, %v211
  %v276 = vpack.c.b16 %v216, %v212
  %v277 = vpack.c.b16 %v217, %v213
  %v278 = vpack.c.b16 %v222, %v218
  %v279 = vpack.c.b16 %v223, %v219
  %v280 = vpack.c.b16 %v224, %v220
  %v281 = vpack.c.b16 %v225, %v221
  %v282 = vpack.c.b16 %v230, %v226
  %v283 = vpack.c.b16 %v231, %v227
  %v284 = vpack.c.b16 %v232, %v228
  %v285 = vpack.c.b16 %v233, %v229
  %v286 = vpack.c.b16 %v238, %v234
  %v287 = vpack.c.b16 %v239, %v235
  %v288 = vpack.c.b16 %v240, %v236
  %v289 = vpack.c.b16 %v241, %v237
  %v290 = vpack.c.b16 %v246, %v242
  %v291 = vpack.c.b16 %v247, %v243
  %v292 = vpack.c.b16 %v248, %v244
  %v293 = vpack.c.b16 %v249, %v245
  %v294 = vpack.c.b16 %v250, %v250
  %v295 = vpack.c.b16 %v251, %v251
  %v296 = vpack.c.b16 %v252, %v252
  %v297 = vpack.c.b16 %v253, %v253
  %v406 = vunpack.c.l.b16 %v57
  %v407 = vunpack.c.l.b16 %v58
  %v408 = vunpack.c.l.b16 %v59
  %v409 = vunpack.c.l.b16 %v60
  %v410 = vunpack.c.l.b16 %v61
  %v411 = vunpack.c.l.b16 %v62
  %v412 = vunpack.c.l.b16 %v63
  %v413 = vunpack.c.l.b16 %v64
  %v414 = vunpack.c.l.b16 %v65
  %v415 = vunpack.c.l.b16 %v66
  %v416 = vunpack.c.l.b16 %v67
  %v417 = vunpack.c.l.b16 %v68
  %v418 = vunpack.c.l.b16 %v69
  %v419 = vunpack.c.l.b16 %v70
  %v420 = vunpack.c.l.b16 %v71
  %v421 = vunpack.c.l.b16 %v72
  %v422 = vunpack.c.l.b16 %v73
  %v423 = vunpack.c.l.b16 %v74
  %v424 = vunpack.c.l.b16 %v75
  %v425 = vunpack.c.l.b16 %v76
  %v426 = vunpack.c.l.b16 %v77
  %v427 = vunpack.c.l.b16 %v78
  %v428 = vunpack.c.l.b16 %v79
  %v429 = vunpack.c.l.b16 %v80
  %v430 = vunpack.c.l.b16 %v81
  %v431 = vunpack.c.l.b16 %v82
  %v432 = vunpack.c.l.b16 %v83
  %v433 = vunpack.c.l.b16 %v84
  %v434 = vunpack.c.l.b16 %v85
  %v435 = vunpack.c.l.b16 %v86
  %v436 = vunpack.c.l.b16 %v87
  %v437 = vunpack.c.l.b16 %v88
  %v438 = vunpack.c.l.b16 %v89
  %v439 = vunpack.c.l.b16 %v90
  %v440 = vunpack.c.l.b16 %v91
  %v441 = vunpack.c.l.b16 %v92
  %v442 = vunpack.c.l.b16 %v93
  %v443 = vunpack.c.l.b16 %v94
  %v444 = vunpack.c.l.b16 %v95
  %v445 = vunpack.c.l.b16 %v96
  %v446 = vunpack.c.l.b16 %v97
  %v447 = vunpack.c.l.b16 %v98
  %v448 = vunpack.c.l.b16 %v99
  %v449 = vunpack.c.l.b16 %v100
  %v450 = vunpack.c.l.b16 %v101
  %v451 = vunpack.c.l.b16 %v102
  %v452 = vunpack.c.l.b16 %v103
  %v453 = vunpack.c.l.b16 %v104
  %v454 = vunpack.c.l.b16 %v105
  %v455 = vunpack.c.l.b16 %v106
  %v456 = vunpack.c.l.b16 %v107
  %v457 = vunpack.c.l.b16 %v108
  %v458 = vunpack.c.l.b16 %v109
  %v459 = vunpack.c.l.b16 %v110
  %v460 = vunpack.c.l.b16 %v111
  %v461 = vunpack.c.l.b16 %v112
  %v462 = vunpack.c.l.b16 %v113
  %v463 = vunpack.c.l.b16 %v114
  %v464 = vunpack.c.l.b16 %v115
  %v465 = vunpack.c.l.b16 %v116
  %v466 = vunpack.c.l.b16 %v117
  %v467 = vunpack.c.l.b16 %v118
  %v468 = vunpack.c.l.b16 %v119
  %v469 = vunpack.c.l.b16 %v120
  %v470 = vpack.c.b16 %v407, %v406
  %v471 = vpack.c.b16 %v409, %v408
  %v472 = vpack.c.b16 %v411, %v410
  %v473 = vpack.c.b16 %v413, %v412
  %v474 = vpack.c.b16 %v415, %v414
  %v475 = vpack.c.b16 %v417, %v416
  %v476 = vpack.c.b16 %v419, %v418
  %v477 = vpack.c.b16 %v421, %v420
  %v478 = vpack.c.b16 %v423, %v422
  %v479 = vpack.c.b16 %v425, %v424
  %v480 = vpack.c.b16 %v427, %v426
  %v481 = vpack.c.b16 %v429, %v428
  %v482 = vpack.c.b16 %v431, %v430
  %v483 = vpack.c.b16 %v433, %v432
  %v484 = vpack.c.b16 %v435, %v434
  %v485 = vpack.c.b16 %v437, %v436
  %v486 = vpack.c.b16 %v439, %v438
  %v487 = vpack.c.b16 %v441, %v440
  %v488 = vpack.c.b16 %v443, %v442
  %v489 = vpack.c.b16 %v445, %v444
  %v490 = vpack.c.b16 %v447, %v446
  %v491 = vpack.c.b16 %v449, %v448
  %v492 = vpack.c.b16 %v451, %v450
  %v493 = vpack.c.b16 %v453, %v452
  %v494 = vpack.c.b16 %v455, %v454
  %v495 = vpack.c.b16 %v457, %v456
  %v496 = vpack.c.b16 %v459, %v458
  %v497 = vpack.c.b16 %v461, %v460
  %v498 = vpack.c.b16 %v463, %v462
  %v499 = vpack.c.b16 %v465, %v464
  %v500 = vpack.c.b16 %v467, %v466
  %v501 = vpack.c.b16 %v469, %v468
  %534 = vmatprep.subr.bf16.mxu0 0
  %535 = vmatpush1.bf16.msra.mxu0 %v477
  %536 = vmatprep.subr.bf16.mxu0 0
  %537 = vmatpush1.bf16.msra.mxu0 %v476
  %538 = vmatprep.subr.bf16.mxu0 0
  %539 = vmatpush1.bf16.msra.mxu0 %v475
  %540 = vmatprep.subr.bf16.mxu0 0
  %541 = vmatpush1.bf16.msra.mxu0 %v474
  %542 = vmatprep.subr.bf16.mxu0 0
  %543 = vmatpush1.bf16.msra.mxu0 %v473
  %544 = vmatprep.subr.bf16.mxu0 0
  %545 = vmatpush1.bf16.msra.mxu0 %v472
  %546 = vmatprep.subr.bf16.mxu0 0
  %547 = vmatpush1.bf16.msra.mxu0 %v471
  %548 = vmatprep.subr.bf16.mxu0 0
  %549 = vmatpush1.bf16.msra.mxu0 %v470
  %550 = vmatprep.subr.bf16.mxu0 0
  %551 = vmatpush2.bf16.msra.mxu0 %v485
  %552 = vmatprep.subr.bf16.mxu0 0
  %553 = vmatpush2.bf16.msra.mxu0 %v484
  %554 = vmatprep.subr.bf16.mxu0 0
  %555 = vmatpush2.bf16.msra.mxu0 %v483
  %556 = vmatprep.subr.bf16.mxu0 0
  %557 = vmatpush2.bf16.msra.mxu0 %v482
  %558 = vmatprep.subr.bf16.mxu0 0
  %559 = vmatpush2.bf16.msra.mxu0 %v481
  %560 = vmatprep.subr.bf16.mxu0 0
  %561 = vmatpush2.bf16.msra.mxu0 %v480
  %562 = vmatprep.subr.bf16.mxu0 0
  %563 = vmatpush2.bf16.msra.mxu0 %v479
  %564 = vmatprep.subr.bf16.mxu0 0
  %565 = vmatpush2.bf16.msra.mxu0 %v478
  %566 = vmatprep.mubr.bf16.mxu0 %v255
  %567 = vmatmul.mubr.bf16.gmra.mxu0 %v254
  %v568 = vpop.f32.mrf.mxu0
  %v569 = vadd.f32 %v126, %v568
  %v570 = vpop.f32.mrf.mxu0
  %v571 = vpop.f32.mrf.mxu0
  %v572 = vadd.f32 %v126, %v571
  %v573 = vpop.f32.mrf.mxu0
  %574 = vmatprep.mubr.bf16.mxu0 %v259
  %575 = vmatmul.mubr.bf16.gmra.mxu0 %v258
  %v576 = vpop.f32.mrf.mxu0
  %v577 = vadd.f32 %v126, %v576
  %v578 = vpop.f32.mrf.mxu0
  %v579 = vpop.f32.mrf.mxu0
  %v580 = vadd.f32 %v126, %v579
  %v581 = vpop.f32.mrf.mxu0
  %582 = vmatprep.mubr.bf16.mxu0 %v263
  %583 = vmatmul.mubr.bf16.gmra.mxu0 %v262
  %v584 = vpop.f32.mrf.mxu0
  %v585 = vadd.f32 %v126, %v584
  %v586 = vpop.f32.mrf.mxu0
  %v587 = vpop.f32.mrf.mxu0
  %v588 = vadd.f32 %v126, %v587
  %v589 = vpop.f32.mrf.mxu0
  %590 = vmatprep.mubr.bf16.mxu0 %v267
  %591 = vmatmul.mubr.bf16.gmra.mxu0 %v266
  %v592 = vpop.f32.mrf.mxu0
  %v593 = vadd.f32 %v126, %v592
  %v594 = vpop.f32.mrf.mxu0
  %v595 = vpop.f32.mrf.mxu0
  %v596 = vadd.f32 %v126, %v595
  %v597 = vpop.f32.mrf.mxu0
  %598 = vmatprep.mubr.bf16.mxu0 %v271
  %599 = vmatmul.mubr.bf16.gmra.mxu0 %v270
  %v600 = vpop.f32.mrf.mxu0
  %v601 = vadd.f32 %v126, %v600
  %v602 = vpop.f32.mrf.mxu0
  %v603 = vpop.f32.mrf.mxu0
  %v604 = vadd.f32 %v126, %v603
  %v605 = vpop.f32.mrf.mxu0
  %606 = vmatprep.mubr.bf16.mxu0 %v275
  %607 = vmatmul.mubr.bf16.gmra.mxu0 %v274
  %v608 = vpop.f32.mrf.mxu0
  %v609 = vadd.f32 %v126, %v608
  %v610 = vpop.f32.mrf.mxu0
  %v611 = vpop.f32.mrf.mxu0
  %v612 = vadd.f32 %v126, %v611
  %v613 = vpop.f32.mrf.mxu0
  %614 = vmatprep.mubr.bf16.mxu0 %v279
  %615 = vmatmul.mubr.bf16.gmra.mxu0 %v278
  %v616 = vpop.f32.mrf.mxu0
  %v617 = vadd.f32 %v126, %v616
  %v618 = vpop.f32.mrf.mxu0
  %v619 = vpop.f32.mrf.mxu0
  %v620 = vadd.f32 %v126, %v619
  %v621 = vpop.f32.mrf.mxu0
  %622 = vmatprep.mubr.bf16.mxu0 %v283
  %623 = vmatmul.mubr.bf16.gmra.mxu0 %v282
  %v624 = vpop.f32.mrf.mxu0
  %v625 = vadd.f32 %v126, %v624
  %v626 = vpop.f32.mrf.mxu0
  %v627 = vpop.f32.mrf.mxu0
  %v628 = vadd.f32 %v126, %v627
  %v629 = vpop.f32.mrf.mxu0
  %630 = vmatprep.mubr.bf16.mxu0 %v287
  %631 = vmatmul.mubr.bf16.gmra.mxu0 %v286
  %v632 = vpop.f32.mrf.mxu0
  %v633 = vadd.f32 %v126, %v632
  %v634 = vpop.f32.mrf.mxu0
  %v635 = vpop.f32.mrf.mxu0
  %v636 = vadd.f32 %v126, %v635
  %v637 = vpop.f32.mrf.mxu0
  %638 = vmatprep.mubr.bf16.mxu0 %v291
  %639 = vmatmul.mubr.bf16.gmra.mxu0 %v290
  %v640 = vpop.f32.mrf.mxu0
  %v641 = vadd.f32 %v126, %v640
  %v642 = vpop.f32.mrf.mxu0
  %v643 = vpop.f32.mrf.mxu0
  %v644 = vadd.f32 %v126, %v643
  %v645 = vpop.f32.mrf.mxu0
  %646 = vmatprep.mubr.bf16.mxu0 %v295
  %647 = vmatmul.mubr.bf16.gmra.mxu0 %v294
  %v648 = vpop.f32.mrf.mxu0
  %v649 = vadd.f32 %v126, %v648
  %v650 = vpop.f32.mrf.mxu0
  %v651 = vpop.f32.mrf.mxu0
  %v652 = vpop.f32.mrf.mxu0
  %653 = vdwg.mxu0
  %654 = vmatprep.subr.bf16.mxu0 0
  %655 = vmatpush1.bf16.msra.mxu0 %v493
  %656 = vmatprep.subr.bf16.mxu0 0
  %657 = vmatpush1.bf16.msra.mxu0 %v492
  %658 = vmatprep.subr.bf16.mxu0 0
  %659 = vmatpush1.bf16.msra.mxu0 %v491
  %660 = vmatprep.subr.bf16.mxu0 0
  %661 = vmatpush1.bf16.msra.mxu0 %v490
  %662 = vmatprep.subr.bf16.mxu0 0
  %663 = vmatpush1.bf16.msra.mxu0 %v489
  %664 = vmatprep.subr.bf16.mxu0 0
  %665 = vmatpush1.bf16.msra.mxu0 %v488
  %666 = vmatprep.subr.bf16.mxu0 0
  %667 = vmatpush1.bf16.msra.mxu0 %v487
  %668 = vmatprep.subr.bf16.mxu0 0
  %669 = vmatpush1.bf16.msra.mxu0 %v486
  %670 = vmatprep.subr.bf16.mxu0 0
  %671 = vmatpush2.bf16.msra.mxu0 %v501
  %672 = vmatprep.subr.bf16.mxu0 0
  %673 = vmatpush2.bf16.msra.mxu0 %v500
  %674 = vmatprep.subr.bf16.mxu0 0
  %675 = vmatpush2.bf16.msra.mxu0 %v499
  %676 = vmatprep.subr.bf16.mxu0 0
  %677 = vmatpush2.bf16.msra.mxu0 %v498
  %678 = vmatprep.subr.bf16.mxu0 0
  %679 = vmatpush2.bf16.msra.mxu0 %v497
  %680 = vmatprep.subr.bf16.mxu0 0
  %681 = vmatpush2.bf16.msra.mxu0 %v496
  %682 = vmatprep.subr.bf16.mxu0 0
  %683 = vmatpush2.bf16.msra.mxu0 %v495
  %684 = vmatprep.subr.bf16.mxu0 0
  %685 = vmatpush2.bf16.msra.mxu0 %v494
  %686 = vmatprep.mubr.bf16.mxu0 %v257
  %687 = vmatmul.mubr.bf16.gmra.mxu0 %v256
  %v688 = vpop.f32.mrf.mxu0
  %v689 = vadd.f32 %v569, %v688
  %v690 = vpop.f32.mrf.mxu0
  %v691 = vpop.f32.mrf.mxu0
  %v692 = vadd.f32 %v572, %v691
  %v693 = vpop.f32.mrf.mxu0
  %694 = vmatprep.mubr.bf16.mxu0 %v261
  %695 = vmatmul.mubr.bf16.gmra.mxu0 %v260
  %v696 = vpop.f32.mrf.mxu0
  %v697 = vadd.f32 %v577, %v696
  %v698 = vpop.f32.mrf.mxu0
  %v699 = vpop.f32.mrf.mxu0
  %v700 = vadd.f32 %v580, %v699
  %v701 = vpop.f32.mrf.mxu0
  %702 = vmatprep.mubr.bf16.mxu0 %v265
  %703 = vmatmul.mubr.bf16.gmra.mxu0 %v264
  %v704 = vpop.f32.mrf.mxu0
  %v705 = vadd.f32 %v585, %v704
  %v706 = vpop.f32.mrf.mxu0
  %v707 = vpop.f32.mrf.mxu0
  %v708 = vadd.f32 %v588, %v707
  %v709 = vpop.f32.mrf.mxu0
  %710 = vmatprep.mubr.bf16.mxu0 %v269
  %711 = vmatmul.mubr.bf16.gmra.mxu0 %v268
  %v712 = vpop.f32.mrf.mxu0
  %v713 = vadd.f32 %v593, %v712
  %v714 = vpop.f32.mrf.mxu0
  %v715 = vpop.f32.mrf.mxu0
  %v716 = vadd.f32 %v596, %v715
  %v717 = vpop.f32.mrf.mxu0
  %718 = vmatprep.mubr.bf16.mxu0 %v273
  %719 = vmatmul.mubr.bf16.gmra.mxu0 %v272
  %v720 = vpop.f32.mrf.mxu0
  %v721 = vadd.f32 %v601, %v720
  %v722 = vpop.f32.mrf.mxu0
  %v723 = vpop.f32.mrf.mxu0
  %v724 = vadd.f32 %v604, %v723
  %v725 = vpop.f32.mrf.mxu0
  %726 = vmatprep.mubr.bf16.mxu0 %v277
  %727 = vmatmul.mubr.bf16.gmra.mxu0 %v276
  %v728 = vpop.f32.mrf.mxu0
  %v729 = vadd.f32 %v609, %v728
  %v730 = vpop.f32.mrf.mxu0
  %v731 = vpop.f32.mrf.mxu0
  %v732 = vadd.f32 %v612, %v731
  %v733 = vpop.f32.mrf.mxu0
  %734 = vmatprep.mubr.bf16.mxu0 %v281
  %735 = vmatmul.mubr.bf16.gmra.mxu0 %v280
  %v736 = vpop.f32.mrf.mxu0
  %v737 = vadd.f32 %v617, %v736
  %v738 = vpop.f32.mrf.mxu0
  %v739 = vpop.f32.mrf.mxu0
  %v740 = vadd.f32 %v620, %v739
  %v741 = vpop.f32.mrf.mxu0
  %742 = vmatprep.mubr.bf16.mxu0 %v285
  %743 = vmatmul.mubr.bf16.gmra.mxu0 %v284
  %v744 = vpop.f32.mrf.mxu0
  %v745 = vadd.f32 %v625, %v744
  %v746 = vpop.f32.mrf.mxu0
  %v747 = vpop.f32.mrf.mxu0
  %v748 = vadd.f32 %v628, %v747
  %v749 = vpop.f32.mrf.mxu0
  %750 = vmatprep.mubr.bf16.mxu0 %v289
  %751 = vmatmul.mubr.bf16.gmra.mxu0 %v288
  %v752 = vpop.f32.mrf.mxu0
  %v753 = vadd.f32 %v633, %v752
  %v754 = vpop.f32.mrf.mxu0
  %v755 = vpop.f32.mrf.mxu0
  %v756 = vadd.f32 %v636, %v755
  %v757 = vpop.f32.mrf.mxu0
  %758 = vmatprep.mubr.bf16.mxu0 %v293
  %759 = vmatmul.mubr.bf16.gmra.mxu0 %v292
  %v760 = vpop.f32.mrf.mxu0
  %v761 = vadd.f32 %v641, %v760
  %v762 = vpop.f32.mrf.mxu0
  %v763 = vpop.f32.mrf.mxu0
  %v764 = vadd.f32 %v644, %v763
  %v765 = vpop.f32.mrf.mxu0
  %766 = vmatprep.mubr.bf16.mxu0 %v297
  %767 = vmatmul.mubr.bf16.gmra.mxu0 %v296
  %v768 = vpop.f32.mrf.mxu0
  %v769 = vadd.f32 %v649, %v768
  %v770 = vpop.f32.mrf.mxu0
  %v771 = vpop.f32.mrf.mxu0
  %v772 = vpop.f32.mrf.mxu0
  %773 = vdwg.mxu0
  %vm774 = vcmp.gt.f32.partialorder %v689, 0.0
  %vm775 = vcmp.gt.f32.partialorder %v692, 0.0
  %vm776 = vcmp.gt.f32.partialorder %v697, 0.0
  %vm777 = vcmp.gt.f32.partialorder %v700, 0.0
  %vm778 = vcmp.gt.f32.partialorder %v705, 0.0
  %vm779 = vcmp.gt.f32.partialorder %v708, 0.0
  %vm780 = vcmp.gt.f32.partialorder %v713, 0.0
  %vm781 = vcmp.gt.f32.partialorder %v716, 0.0
  %vm782 = vcmp.gt.f32.partialorder %v721, 0.0
  %vm783 = vcmp.gt.f32.partialorder %v724, 0.0
  %vm784 = vcmp.gt.f32.partialorder %v729, 0.0
  %vm785 = vcmp.gt.f32.partialorder %v732, 0.0
  %vm786 = vcmp.gt.f32.partialorder %v737, 0.0
  %vm787 = vcmp.gt.f32.partialorder %v740, 0.0
  %vm788 = vcmp.gt.f32.partialorder %v745, 0.0
  %vm789 = vcmp.gt.f32.partialorder %v748, 0.0
  %vm790 = vcmp.gt.f32.partialorder %v753, 0.0
  %vm791 = vcmp.gt.f32.partialorder %v756, 0.0
  %vm792 = vcmp.gt.f32.partialorder %v761, 0.0
  %vm793 = vcmp.gt.f32.partialorder %v764, 0.0
  %vm794 = vcmp.gt.f32.partialorder %v769, 0.0
  %v795 = vmul.f32 %v689, 0.01
  %v796 = vmul.f32 %v692, 0.01
  %v797 = vmul.f32 %v697, 0.01
  %v798 = vmul.f32 %v700, 0.01
  %v799 = vmul.f32 %v705, 0.01
  %v800 = vmul.f32 %v708, 0.01
  %v801 = vmul.f32 %v713, 0.01
  %v802 = vmul.f32 %v716, 0.01
  %v803 = vmul.f32 %v721, 0.01
  %v804 = vmul.f32 %v724, 0.01
  %v805 = vmul.f32 %v729, 0.01
  %v806 = vmul.f32 %v732, 0.01
  %v807 = vmul.f32 %v737, 0.01
  %v808 = vmul.f32 %v740, 0.01
  %v809 = vmul.f32 %v745, 0.01
  %v810 = vmul.f32 %v748, 0.01
  %v811 = vmul.f32 %v753, 0.01
  %v812 = vmul.f32 %v756, 0.01
  %v813 = vmul.f32 %v761, 0.01
  %v814 = vmul.f32 %v764, 0.01
  %v815 = vmul.f32 %v769, 0.01
  %v816 = vsel %vm774, %v689, %v795
  %v817 = vsel %vm775, %v692, %v796
  %v818 = vsel %vm776, %v697, %v797
  %v819 = vsel %vm777, %v700, %v798
  %v820 = vsel %vm778, %v705, %v799
  %v821 = vsel %vm779, %v708, %v800
  %v822 = vsel %vm780, %v713, %v801
  %v823 = vsel %vm781, %v716, %v802
  %v824 = vsel %vm782, %v721, %v803
  %v825 = vsel %vm783, %v724, %v804
  %v826 = vsel %vm784, %v729, %v805
  %v827 = vsel %vm785, %v732, %v806
  %v828 = vsel %vm786, %v737, %v807
  %v829 = vsel %vm787, %v740, %v808
  %v830 = vsel %vm788, %v745, %v809
  %v831 = vsel %vm789, %v748, %v810
  %v832 = vsel %vm790, %v753, %v811
  %v833 = vsel %vm791, %v756, %v812
  %v834 = vsel %vm792, %v761, %v813
  %v835 = vsel %vm793, %v764, %v814
  %v836 = vsel %vm794, %v769, %v815
  %v837 = vpack.c.bf16 %v817, %v816
  %v838 = vpack.c.bf16 %v819, %v818
  %v839 = vpack.c.bf16 %v821, %v820
  %v840 = vpack.c.bf16 %v823, %v822
  %v841 = vpack.c.bf16 %v825, %v824
  %v842 = vpack.c.bf16 %v827, %v826
  %v843 = vpack.c.bf16 %v829, %v828
  %v844 = vpack.c.bf16 %v831, %v830
  %v845 = vpack.c.bf16 %v833, %v832
  %v846 = vpack.c.bf16 %v835, %v834
  %v847 = vpack.c.bf16 %v836, %v836
  %v859 = vunpack.c.l.b16 %v837
  %v860 = vunpack.c.h.b16 %v837
  %v861 = vunpack.c.l.b16 %v838
  %v862 = vunpack.c.h.b16 %v838
  %v863 = vunpack.c.l.b16 %v839
  %v864 = vunpack.c.h.b16 %v839
  %v865 = vunpack.c.l.b16 %v840
  %v866 = vunpack.c.h.b16 %v840
  %v867 = vunpack.c.l.b16 %v841
  %v868 = vunpack.c.h.b16 %v841
  %v869 = vunpack.c.l.b16 %v842
  %v870 = vunpack.c.h.b16 %v842
  %v871 = vunpack.c.l.b16 %v843
  %v872 = vunpack.c.h.b16 %v843
  %v873 = vunpack.c.l.b16 %v844
  %v874 = vunpack.c.h.b16 %v844
  %v875 = vunpack.c.l.b16 %v845
  %v876 = vunpack.c.h.b16 %v845
  %v877 = vunpack.c.l.b16 %v846
  %v878 = vunpack.c.h.b16 %v846
  %v879 = vunpack.c.l.b16 %v847
  %v880 = vpack.c.b16 %v859, %v859
  %v881 = vpack.c.b16 %v860, %v860
  %v882 = vpack.c.b16 %v861, %v861
  %v883 = vpack.c.b16 %v862, %v862
  %v884 = vpack.c.b16 %v863, %v863
  %v885 = vpack.c.b16 %v864, %v864
  %v886 = vpack.c.b16 %v865, %v865
  %v887 = vpack.c.b16 %v866, %v866
  %v888 = vpack.c.b16 %v867, %v867
  %v889 = vpack.c.b16 %v868, %v868
  %v890 = vpack.c.b16 %v869, %v869
  %v891 = vpack.c.b16 %v870, %v870
  %v892 = vpack.c.b16 %v871, %v871
  %v893 = vpack.c.b16 %v872, %v872
  %v894 = vpack.c.b16 %v873, %v873
  %v895 = vpack.c.b16 %v874, %v874
  %v896 = vpack.c.b16 %v875, %v875
  %v897 = vpack.c.b16 %v876, %v876
  %v898 = vpack.c.b16 %v877, %v877
  %v899 = vpack.c.b16 %v878, %v878
  %v900 = vpack.c.b16 %v879, %v879
  %vm922 = vcmask 519168
  %923 = vst.msk [vmem:[%s3] sm:$0xf] %vm922, %v880
  %924 = vst.msk [vmem:[%s3 + $0x4] sm:$0xf] %vm922, %v881
  %925 = vst.msk [vmem:[%s3 + $0x8] sm:$0xf] %vm922, %v882
  %926 = vst.msk [vmem:[%s3 + $0xc] sm:$0xf] %vm922, %v883
  %927 = vst.msk [vmem:[%s3 + $0x10] sm:$0xf] %vm922, %v884
  %928 = vst.msk [vmem:[%s3 + $0x14] sm:$0xf] %vm922, %v885
  %929 = vst.msk [vmem:[%s3 + $0x18] sm:$0xf] %vm922, %v886
  %930 = vst.msk [vmem:[%s3 + $0x1c] sm:$0xf] %vm922, %v887
  %931 = vst.msk [vmem:[%s3 + $0x20] sm:$0xf] %vm922, %v888
  %932 = vst.msk [vmem:[%s3 + $0x24] sm:$0xf] %vm922, %v889
  %933 = vst.msk [vmem:[%s3 + $0x28] sm:$0xf] %vm922, %v890
  %934 = vst.msk [vmem:[%s3 + $0x2c] sm:$0xf] %vm922, %v891
  %935 = vst.msk [vmem:[%s3 + $0x30] sm:$0xf] %vm922, %v892
  %936 = vst.msk [vmem:[%s3 + $0x34] sm:$0xf] %vm922, %v893
  %937 = vst.msk [vmem:[%s3 + $0x38] sm:$0xf] %vm922, %v894
  %938 = vst.msk [vmem:[%s3 + $0x3c] sm:$0xf] %vm922, %v895
  %939 = vst.msk [vmem:[%s3 + $0x40] sm:$0xf] %vm922, %v896
  %940 = vst.msk [vmem:[%s3 + $0x44] sm:$0xf] %vm922, %v897
  %941 = vst.msk [vmem:[%s3 + $0x48] sm:$0xf] %vm922, %v898
  %942 = vst.msk [vmem:[%s3 + $0x4c] sm:$0xf] %vm922, %v899
  %vm943 = vcmask 516096
  %944 = vst.msk [vmem:[%s3 + $0x50] sm:$0x1] %vm943, %v900
  // Predicated region
  $region14: #{dueling_forward.5} parent=0 // pred_check
    _
  $region15: #{dueling_forward.5} parent=0 // pred_check_branch
    %946 = sbr.rel (0) target = $region17
  $region16: #{dueling_forward.5} parent=0 // pred_region
    _
  $region17: #{dueling_forward.5} parent=0 // pred_fallthru
    _
  // Predicated region
  $region18: #{dueling_forward.5} parent=0 // pred_check
    _
  $region19: #{dueling_forward.5} parent=0 // pred_check_branch
    %948 = sbr.rel (0) target = $region21
  $region20: #{dueling_forward.5} parent=0 // pred_region
    _
  $region21: #{dueling_forward.5} parent=0 // pred_fallthru
    _

// kernel: dueling_forward.6
$region0: #{dueling_forward.6}
  #allocation0 [shape = 'u32[]', space=smem, size = 0x4, offset = 0x4, fixed_abs, tag = 'smem constant byte address 0x4 - core index']
  #allocation1 [shape = 'u32[144,128]{1,0:T(1,128)}', space=vmem, size = 0x12000, scoped, tag = 'internal scratch']
  %s0 = inlined_call_operand.vmem [shape: bf16[98,576], index: 0, kind: input, shape index: {}]
  %s1 = inlined_call_operand.vmem [shape: bf16[576,64], index: 1, kind: input, shape index: {}]
  %s2 = inlined_call_operand.vmem [shape: f32[1,64], index: 2, kind: input, shape index: {}]
  %s3 = inlined_call_operand.vmem [shape: bf16[98,64], index: 3, kind: output, shape index: {}]
  %s4 = sld [smem:[#allocation0]]
  $region22: #{dueling_forward.6} parent=0
    _
  %s6 = ssub.s32 1, %s4
  %s7 = scalar_select 0, %s6, %s4
  // Predicated region
  $region2: #{dueling_forward.6} parent=0 // pred_check
    _
  $region3: #{dueling_forward.6} parent=0 // pred_check_branch
    %9 = sbr.rel (0) target = $region5
  $region4: #{dueling_forward.6} parent=0 // pred_region
    _
  $region5: #{dueling_forward.6} parent=0 // pred_fallthru
    _
  // Predicated region
  $region6: #{dueling_forward.6} parent=0 // pred_check
    _
  $region7: #{dueling_forward.6} parent=0 // pred_check_branch
    %11 = sbr.rel (0) target = $region9
  $region8: #{dueling_forward.6} parent=0 // pred_region
    _
  $region9: #{dueling_forward.6} parent=0 // pred_fallthru
    _
  // Predicated region
  $region10: #{dueling_forward.6} parent=0 // pred_check
    _
  $region11: #{dueling_forward.6} parent=0 // pred_check_branch
    %13 = sbr.rel (0) target = $region13
  $region12: #{dueling_forward.6} parent=0 // pred_region
    _
  $region13: #{dueling_forward.6} parent=0 // pred_fallthru
    _
  %v15 = vld [vmem:[%s0] sm:$0xff]
  %v16 = vld [vmem:[%s0 + $0x8] sm:$0xff]
  %v17 = vld [vmem:[%s0 + $0x10] sm:$0xf]
  %v18 = vld [vmem:[%s0 + $0x14] sm:$0xff]
  %v19 = vld [vmem:[%s0 + $0x1c] sm:$0xff]
  %v20 = vld [vmem:[%s0 + $0x24] sm:$0xf]
  %v21 = vld [vmem:[%s0 + $0x28] sm:$0xff]
  %v22 = vld [vmem:[%s0 + $0x30] sm:$0xff]
  %v23 = vld [vmem:[%s0 + $0x38] sm:$0xf]
  %v24 = vld [vmem:[%s0 + $0x3c] sm:$0xff]
  %v25 = vld [vmem:[%s0 + $0x44] sm:$0xff]
  %v26 = vld [vmem:[%s0 + $0x4c] sm:$0xf]
  %v27 = vld [vmem:[%s0 + $0x50] sm:$0xff]
  %v28 = vld [vmem:[%s0 + $0x58] sm:$0xff]
  %v29 = vld [vmem:[%s0 + $0x60] sm:$0xf]
  %v30 = vld [vmem:[%s0 + $0x64] sm:$0xff]
  %v31 = vld [vmem:[%s0 + $0x6c] sm:$0xff]
  %v32 = vld [vmem:[%s0 + $0x74] sm:$0xf]
  %v33 = vld [vmem:[%s0 + $0x78] sm:$0xff]
  %v34 = vld [vmem:[%s0 + $0x80] sm:$0xff]
  %v35 = vld [vmem:[%s0 + $0x88] sm:$0xf]
  %v36 = vld [vmem:[%s0 + $0x8c] sm:$0xff]
  %v37 = vld [vmem:[%s0 + $0x94] sm:$0xff]
  %v38 = vld [vmem:[%s0 + $0x9c] sm:$0xf]
  %v39 = vld [vmem:[%s0 + $0xa0] sm:$0xff]
  %v40 = vld [vmem:[%s0 + $0xa8] sm:$0xff]
  %v41 = vld [vmem:[%s0 + $0xb0] sm:$0xf]
  %v42 = vld [vmem:[%s0 + $0xb4] sm:$0xff]
  %v43 = vld [vmem:[%s0 + $0xbc] sm:$0xff]
  %v44 = vld [vmem:[%s0 + $0xc4] sm:$0xf]
  %v45 = vld [vmem:[%s0 + $0xc8] sm:$0xff]
  %v46 = vld [vmem:[%s0 + $0xd0] sm:$0xff]
  %v47 = vld [vmem:[%s0 + $0xd8] sm:$0xf]
  %v48 = vld [vmem:[%s0 + $0xdc] sm:$0xff]
  %v49 = vld [vmem:[%s0 + $0xe4] sm:$0xff]
  %v50 = vld [vmem:[%s0 + $0xec] sm:$0xf]
  %v51 = vld [vmem:[%s0 + $0xf0] sm:$0x11]
  %v52 = vld [vmem:[%s0 + $0xf8] sm:$0x11]
  %v53 = vld [vmem:[%s0 + $0x100] sm:$0x1]
  %v54 = vld [vmem:[%s1] sm:$0xf]
  %v55 = vld [vmem:[%s1 + $0x4] sm:$0xf]
  %v56 = vld [vmem:[%s1 + $0x8] sm:$0xf]
  %v57 = vld [vmem:[%s1 + $0xc] sm:$0xf]
  %v58 = vld [vmem:[%s1 + $0x10] sm:$0xf]
  %v59 = vld [vmem:[%s1 + $0x14] sm:$0xf]
  %v60 = vld [vmem:[%s1 + $0x18] sm:$0xf]
  %v61 = vld [vmem:[%s1 + $0x1c] sm:$0xf]
  %v62 = vld [vmem:[%s1 + $0x20] sm:$0xf]
  %v63 = vld [vmem:[%s1 + $0x24] sm:$0xf]
  %v64 = vld [vmem:[%s1 + $0x28] sm:$0xf]
  %v65 = vld [vmem:[%s1 + $0x2c] sm:$0xf]
  %v66 = vld [vmem:[%s1 + $0x30] sm:$0xf]
  %v67 = vld [vmem:[%s1 + $0x34] sm:$0xf]
  %v68 = vld [vmem:[%s1 + $0x38] sm:$0xf]
  %v69 = vld [vmem:[%s1 + $0x3c] sm:$0xf]
  %v70 = vld [vmem:[%s1 + $0x40] sm:$0xf]
  %v71 = vld [vmem:[%s1 + $0x44] sm:$0xf]
  %v72 = vld [vmem:[%s1 + $0x48] sm:$0xf]
  %v73 = vld [vmem:[%s1 + $0x4c] sm:$0xf]
  %v74 = vld [vmem:[%s1 + $0x50] sm:$0xf]
  %v75 = vld [vmem:[%s1 + $0x54] sm:$0xf]
  %v76 = vld [vmem:[%s1 + $0x58] sm:$0xf]
  %v77 = vld [vmem:[%s1 + $0x5c] sm:$0xf]
  %v78 = vld [vmem:[%s1 + $0x60] sm:$0xf]
  %v79 = vld [vmem:[%s1 + $0x64] sm:$0xf]
  %v80 = vld [vmem:[%s1 + $0x68] sm:$0xf]
  %v81 = vld [vmem:[%s1 + $0x6c] sm:$0xf]
  %v82 = vld [vmem:[%s1 + $0x70] sm:$0xf]
  %v83 = vld [vmem:[%s1 + $0x74] sm:$0xf]
  %v84 = vld [vmem:[%s1 + $0x78] sm:$0xf]
  %v85 = vld [vmem:[%s1 + $0x7c] sm:$0xf]
  %v86 = vld [vmem:[%s1 + $0x80] sm:$0xf]
  %v87 = vld [vmem:[%s1 + $0x84] sm:$0xf]
  %v88 = vld [vmem:[%s1 + $0x88] sm:$0xf]
  %v89 = vld [vmem:[%s1 + $0x8c] sm:$0xf]
  %v90 = vld [vmem:[%s1 + $0x90] sm:$0xf]
  %v91 = vld [vmem:[%s1 + $0x94] sm:$0xf]
  %v92 = vld [vmem:[%s1 + $0x98] sm:$0xf]
  %v93 = vld [vmem:[%s1 + $0x9c] sm:$0xf]
  %v94 = vld [vmem:[%s1 + $0xa0] sm:$0xf]
  %v95 = vld [vmem:[%s1 + $0xa4] sm:$0xf]
  %v96 = vld [vmem:[%s1 + $0xa8] sm:$0xf]
  %v97 = vld [vmem:[%s1 + $0xac] sm:$0xf]
  %v98 = vld [vmem:[%s1 + $0xb0] sm:$0xf]
  %v99 = vld [vmem:[%s1 + $0xb4] sm:$0xf]
  %v100 = vld [vmem:[%s1 + $0xb8] sm:$0xf]
  %v101 = vld [vmem:[%s1 + $0xbc] sm:$0xf]
  %v102 = vld [vmem:[%s1 + $0xc0] sm:$0xf]
  %v103 = vld [vmem:[%s1 + $0xc4] sm:$0xf]
  %v104 = vld [vmem:[%s1 + $0xc8] sm:$0xf]
  %v105 = vld [vmem:[%s1 + $0xcc] sm:$0xf]
  %v106 = vld [vmem:[%s1 + $0xd0] sm:$0xf]
  %v107 = vld [vmem:[%s1 + $0xd4] sm:$0xf]
  %v108 = vld [vmem:[%s1 + $0xd8] sm:$0xf]
  %v109 = vld [vmem:[%s1 + $0xdc] sm:$0xf]
  %v110 = vld [vmem:[%s1 + $0xe0] sm:$0xf]
  %v111 = vld [vmem:[%s1 + $0xe4] sm:$0xf]
  %v112 = vld [vmem:[%s1 + $0xe8] sm:$0xf]
  %v113 = vld [vmem:[%s1 + $0xec] sm:$0xf]
  %v114 = vld [vmem:[%s1 + $0xf0] sm:$0xf]
  %v115 = vld [vmem:[%s1 + $0xf4] sm:$0xf]
  %v116 = vld [vmem:[%s1 + $0xf8] sm:$0xf]
  %v117 = vld [vmem:[%s1 + $0xfc] sm:$0xf]
  %v118 = vld [vmem:[%s1 + $0x100] sm:$0xf]
  %v119 = vld [vmem:[%s1 + $0x104] sm:$0xf]
  %v120 = vld [vmem:[%s1 + $0x108] sm:$0xf]
  %v121 = vld [vmem:[%s1 + $0x10c] sm:$0xf]
  %v122 = vld [vmem:[%s1 + $0x110] sm:$0xf]
  %v123 = vld [vmem:[%s1 + $0x114] sm:$0xf]
  %v124 = vld [vmem:[%s1 + $0x118] sm:$0xf]
  %v125 = vld [vmem:[%s1 + $0x11c] sm:$0xf]
  %v126 = vld [vmem:[%s2] sm:$0x1]
  %v128 = vlaneseq
  %v129 = vshrl.u32 %v128, 7
  %v130 = vsub.s32 0, %v129
  %v131 = vrot.slane %v126, %v130
  %v172 = vunpack.c.l.b16 %v15
  %v173 = vunpack.c.h.b16 %v15
  %v174 = vunpack.c.l.b16 %v16
  %v175 = vunpack.c.h.b16 %v16
  %v176 = vunpack.c.l.b16 %v17
  %v177 = vunpack.c.l.b16 %v18
  %v178 = vunpack.c.h.b16 %v18
  %v179 = vunpack.c.l.b16 %v19
  %v180 = vunpack.c.h.b16 %v19
  %v181 = vunpack.c.l.b16 %v20
  %v182 = vunpack.c.l.b16 %v21
  %v183 = vunpack.c.h.b16 %v21
  %v184 = vunpack.c.l.b16 %v22
  %v185 = vunpack.c.h.b16 %v22
  %v186 = vunpack.c.l.b16 %v23
  %v187 = vunpack.c.l.b16 %v24
  %v188 = vunpack.c.h.b16 %v24
  %v189 = vunpack.c.l.b16 %v25
  %v190 = vunpack.c.h.b16 %v25
  %v191 = vunpack.c.l.b16 %v26
  %v192 = vunpack.c.l.b16 %v27
  %v193 = vunpack.c.h.b16 %v27
  %v194 = vunpack.c.l.b16 %v28
  %v195 = vunpack.c.h.b16 %v28
  %v196 = vunpack.c.l.b16 %v29
  %v197 = vunpack.c.l.b16 %v30
  %v198 = vunpack.c.h.b16 %v30
  %v199 = vunpack.c.l.b16 %v31
  %v200 = vunpack.c.h.b16 %v31
  %v201 = vunpack.c.l.b16 %v32
  %v202 = vunpack.c.l.b16 %v33
  %v203 = vunpack.c.h.b16 %v33
  %v204 = vunpack.c.l.b16 %v34
  %v205 = vunpack.c.h.b16 %v34
  %v206 = vunpack.c.l.b16 %v35
  %v207 = vunpack.c.l.b16 %v36
  %v208 = vunpack.c.h.b16 %v36
  %v209 = vunpack.c.l.b16 %v37
  %v210 = vunpack.c.h.b16 %v37
  %v211 = vunpack.c.l.b16 %v38
  %v212 = vunpack.c.l.b16 %v39
  %v213 = vunpack.c.h.b16 %v39
  %v214 = vunpack.c.l.b16 %v40
  %v215 = vunpack.c.h.b16 %v40
  %v216 = vunpack.c.l.b16 %v41
  %v217 = vunpack.c.l.b16 %v42
  %v218 = vunpack.c.h.b16 %v42
  %v219 = vunpack.c.l.b16 %v43
  %v220 = vunpack.c.h.b16 %v43
  %v221 = vunpack.c.l.b16 %v44
  %v222 = vunpack.c.l.b16 %v45
  %v223 = vunpack.c.h.b16 %v45
  %v224 = vunpack.c.l.b16 %v46
  %v225 = vunpack.c.h.b16 %v46
  %v226 = vunpack.c.l.b16 %v47
  %v227 = vunpack.c.l.b16 %v48
  %v228 = vunpack.c.h.b16 %v48
  %v229 = vunpack.c.l.b16 %v49
  %v230 = vunpack.c.h.b16 %v49
  %v231 = vunpack.c.l.b16 %v50
  %v232 = vunpack.c.l.b16 %v51
  %v233 = vunpack.c.h.b16 %v51
  %v234 = vunpack.c.l.b16 %v52
  %v235 = vunpack.c.h.b16 %v52
  %v236 = vunpack.c.l.b16 %v53
  %v237 = vpack.c.b16 %v177, %v172
  %v238 = vpack.c.b16 %v178, %v173
  %v239 = vpack.c.b16 %v179, %v174
  %v240 = vpack.c.b16 %v180, %v175
  %v241 = vpack.c.b16 %v181, %v176
  %v242 = vpack.c.b16 %v187, %v182
  %v243 = vpack.c.b16 %v188, %v183
  %v244 = vpack.c.b16 %v189, %v184
  %v245 = vpack.c.b16 %v190, %v185
  %v246 = vpack.c.b16 %v191, %v186
  %v247 = vpack.c.b16 %v197, %v192
  %v248 = vpack.c.b16 %v198, %v193
  %v249 = vpack.c.b16 %v199, %v194
  %v250 = vpack.c.b16 %v200, %v195
  %v251 = vpack.c.b16 %v201, %v196
  %v252 = vpack.c.b16 %v207, %v202
  %v253 = vpack.c.b16 %v208, %v203
  %v254 = vpack.c.b16 %v209, %v204
  %v255 = vpack.c.b16 %v210, %v205
  %v256 = vpack.c.b16 %v211, %v206
  %v257 = vpack.c.b16 %v217, %v212
  %v258 = vpack.c.b16 %v218, %v213
  %v259 = vpack.c.b16 %v219, %v214
  %v260 = vpack.c.b16 %v220, %v215
  %v261 = vpack.c.b16 %v221, %v216
  %v262 = vpack.c.b16 %v227, %v222
  %v263 = vpack.c.b16 %v228, %v223
  %v264 = vpack.c.b16 %v229, %v224
  %v265 = vpack.c.b16 %v230, %v225
  %v266 = vpack.c.b16 %v231, %v226
  %v267 = vpack.c.b16 %v232, %v232
  %v268 = vpack.c.b16 %v233, %v233
  %v269 = vpack.c.b16 %v234, %v234
  %v270 = vpack.c.b16 %v235, %v235
  %v271 = vpack.c.b16 %v236, %v236
  %v372 = vunpack.c.l.b16 %v54
  %v373 = vunpack.c.l.b16 %v55
  %v374 = vunpack.c.l.b16 %v56
  %v375 = vunpack.c.l.b16 %v57
  %v376 = vunpack.c.l.b16 %v58
  %v377 = vunpack.c.l.b16 %v59
  %v378 = vunpack.c.l.b16 %v60
  %v379 = vunpack.c.l.b16 %v61
  %v380 = vunpack.c.l.b16 %v62
  %v381 = vunpack.c.l.b16 %v63
  %v382 = vunpack.c.l.b16 %v64
  %v383 = vunpack.c.l.b16 %v65
  %v384 = vunpack.c.l.b16 %v66
  %v385 = vunpack.c.l.b16 %v67
  %v386 = vunpack.c.l.b16 %v68
  %v387 = vunpack.c.l.b16 %v69
  %v388 = vunpack.c.l.b16 %v70
  %v389 = vunpack.c.l.b16 %v71
  %v390 = vunpack.c.l.b16 %v72
  %v391 = vunpack.c.l.b16 %v73
  %v392 = vunpack.c.l.b16 %v74
  %v393 = vunpack.c.l.b16 %v75
  %v394 = vunpack.c.l.b16 %v76
  %v395 = vunpack.c.l.b16 %v77
  %v396 = vunpack.c.l.b16 %v78
  %v397 = vunpack.c.l.b16 %v79
  %v398 = vunpack.c.l.b16 %v80
  %v399 = vunpack.c.l.b16 %v81
  %v400 = vunpack.c.l.b16 %v82
  %v401 = vunpack.c.l.b16 %v83
  %v402 = vunpack.c.l.b16 %v84
  %v403 = vunpack.c.l.b16 %v85
  %v404 = vunpack.c.l.b16 %v86
  %v405 = vunpack.c.l.b16 %v87
  %v406 = vunpack.c.l.b16 %v88
  %v407 = vunpack.c.l.b16 %v89
  %v408 = vunpack.c.l.b16 %v90
  %v409 = vunpack.c.l.b16 %v91
  %v410 = vunpack.c.l.b16 %v92
  %v411 = vunpack.c.l.b16 %v93
  %v412 = vunpack.c.l.b16 %v94
  %v413 = vunpack.c.l.b16 %v95
  %v414 = vunpack.c.l.b16 %v96
  %v415 = vunpack.c.l.b16 %v97
  %v416 = vunpack.c.l.b16 %v98
  %v417 = vunpack.c.l.b16 %v99
  %v418 = vunpack.c.l.b16 %v100
  %v419 = vunpack.c.l.b16 %v101
  %v420 = vunpack.c.l.b16 %v102
  %v421 = vunpack.c.l.b16 %v103
  %v422 = vunpack.c.l.b16 %v104
  %v423 = vunpack.c.l.b16 %v105
  %v424 = vunpack.c.l.b16 %v106
  %v425 = vunpack.c.l.b16 %v107
  %v426 = vunpack.c.l.b16 %v108
  %v427 = vunpack.c.l.b16 %v109
  %v428 = vunpack.c.l.b16 %v110
  %v429 = vunpack.c.l.b16 %v111
  %v430 = vunpack.c.l.b16 %v112
  %v431 = vunpack.c.l.b16 %v113
  %v432 = vunpack.c.l.b16 %v114
  %v433 = vunpack.c.l.b16 %v115
  %v434 = vunpack.c.l.b16 %v116
  %v435 = vunpack.c.l.b16 %v117
  %v436 = vunpack.c.l.b16 %v118
  %v437 = vunpack.c.l.b16 %v119
  %v438 = vunpack.c.l.b16 %v120
  %v439 = vunpack.c.l.b16 %v121
  %v440 = vunpack.c.l.b16 %v122
  %v441 = vunpack.c.l.b16 %v123
  %v442 = vunpack.c.l.b16 %v124
  %v443 = vunpack.c.l.b16 %v125
  %v444 = vpack.c.b16 %v373, %v372
  %v445 = vpack.c.b16 %v375, %v374
  %v446 = vpack.c.b16 %v377, %v376
  %v447 = vpack.c.b16 %v379, %v378
  %v448 = vpack.c.b16 %v381, %v380
  %v449 = vpack.c.b16 %v383, %v382
  %v450 = vpack.c.b16 %v385, %v384
  %v451 = vpack.c.b16 %v387, %v386
  %v452 = vpack.c.b16 %v389, %v388
  %v453 = vpack.c.b16 %v391, %v390
  %v454 = vpack.c.b16 %v393, %v392
  %v455 = vpack.c.b16 %v395, %v394
  %v456 = vpack.c.b16 %v397, %v396
  %v457 = vpack.c.b16 %v399, %v398
  %v458 = vpack.c.b16 %v401, %v400
  %v459 = vpack.c.b16 %v403, %v402
  %v460 = vpack.c.b16 %v405, %v404
  %v461 = vpack.c.b16 %v407, %v406
  %v462 = vpack.c.b16 %v409, %v408
  %v463 = vpack.c.b16 %v411, %v410
  %v464 = vpack.c.b16 %v413, %v412
  %v465 = vpack.c.b16 %v415, %v414
  %v466 = vpack.c.b16 %v417, %v416
  %v467 = vpack.c.b16 %v419, %v418
  %v468 = vpack.c.b16 %v421, %v420
  %v469 = vpack.c.b16 %v423, %v422
  %v470 = vpack.c.b16 %v425, %v424
  %v471 = vpack.c.b16 %v427, %v426
  %v472 = vpack.c.b16 %v429, %v428
  %v473 = vpack.c.b16 %v431, %v430
  %v474 = vpack.c.b16 %v433, %v432
  %v475 = vpack.c.b16 %v435, %v434
  %v476 = vpack.c.b16 %v437, %v436
  %v477 = vpack.c.b16 %v439, %v438
  %v478 = vpack.c.b16 %v441, %v440
  %v479 = vpack.c.b16 %v443, %v442
  %vm516 = vcmask 523264
  %v518 = vsel %vm516, %v241, 0
  %v521 = vsel %vm516, %v246, 0
  %v524 = vsel %vm516, %v251, 0
  %v527 = vsel %vm516, %v256, 0
  %v530 = vsel %vm516, %v261, 0
  %v533 = vsel %vm516, %v266, 0
  %v536 = vsel %vm516, %v271, 0
  %538 = vmatprep.subr.bf16.mxu0 0
  %539 = vmatpush1.bf16.msra.mxu0 %v451
  %540 = vmatprep.subr.bf16.mxu0 0
  %541 = vmatpush1.bf16.msra.mxu0 %v450
  %542 = vmatprep.subr.bf16.mxu0 0
  %543 = vmatpush1.bf16.msra.mxu0 %v449
  %544 = vmatprep.subr.bf16.mxu0 0
  %545 = vmatpush1.bf16.msra.mxu0 %v448
  %546 = vmatprep.subr.bf16.mxu0 0
  %547 = vmatpush1.bf16.msra.mxu0 %v447
  %548 = vmatprep.subr.bf16.mxu0 0
  %549 = vmatpush1.bf16.msra.mxu0 %v446
  %550 = vmatprep.subr.bf16.mxu0 0
  %551 = vmatpush1.bf16.msra.mxu0 %v445
  %552 = vmatprep.subr.bf16.mxu0 0
  %553 = vmatpush1.bf16.msra.mxu0 %v444
  %554 = vmatprep.subr.bf16.mxu0 0
  %555 = vmatpush2.bf16.msra.mxu0 %v459
  %556 = vmatprep.subr.bf16.mxu0 0
  %557 = vmatpush2.bf16.msra.mxu0 %v458
  %558 = vmatprep.subr.bf16.mxu0 0
  %559 = vmatpush2.bf16.msra.mxu0 %v457
  %560 = vmatprep.subr.bf16.mxu0 0
  %561 = vmatpush2.bf16.msra.mxu0 %v456
  %562 = vmatprep.subr.bf16.mxu0 0
  %563 = vmatpush2.bf16.msra.mxu0 %v455
  %564 = vmatprep.subr.bf16.mxu0 0
  %565 = vmatpush2.bf16.msra.mxu0 %v454
  %566 = vmatprep.subr.bf16.mxu0 0
  %567 = vmatpush2.bf16.msra.mxu0 %v453
  %568 = vmatprep.subr.bf16.mxu0 0
  %569 = vmatpush2.bf16.msra.mxu0 %v452
  %570 = vmatprep.mubr.bf16.mxu0 %v238
  %571 = vmatmul.mubr.bf16.gmra.mxu0 %v237
  %v572 = vpop.f32.mrf.mxu0
  %v573 = vadd.f32 %v131, %v572
  %v574 = vpop.f32.mrf.mxu0
  %v575 = vpop.f32.mrf.mxu0
  %v576 = vadd.f32 %v131, %v575
  %v577 = vpop.f32.mrf.mxu0
  %578 = vmatprep.mubr.bf16.mxu0 %v243
  %579 = vmatmul.mubr.bf16.gmra.mxu0 %v242
  %v580 = vpop.f32.mrf.mxu0
  %v581 = vadd.f32 %v131, %v580
  %v582 = vpop.f32.mrf.mxu0
  %v583 = vpop.f32.mrf.mxu0
  %v584 = vadd.f32 %v131, %v583
  %v585 = vpop.f32.mrf.mxu0
  %586 = vmatprep.mubr.bf16.mxu0 %v248
  %587 = vmatmul.mubr.bf16.gmra.mxu0 %v247
  %v588 = vpop.f32.mrf.mxu0
  %v589 = vadd.f32 %v131, %v588
  %v590 = vpop.f32.mrf.mxu0
  %v591 = vpop.f32.mrf.mxu0
  %v592 = vadd.f32 %v131, %v591
  %v593 = vpop.f32.mrf.mxu0
  %594 = vmatprep.mubr.bf16.mxu0 %v253
  %595 = vmatmul.mubr.bf16.gmra.mxu0 %v252
  %v596 = vpop.f32.mrf.mxu0
  %v597 = vadd.f32 %v131, %v596
  %v598 = vpop.f32.mrf.mxu0
  %v599 = vpop.f32.mrf.mxu0
  %v600 = vadd.f32 %v131, %v599
  %v601 = vpop.f32.mrf.mxu0
  %602 = vmatprep.mubr.bf16.mxu0 %v258
  %603 = vmatmul.mubr.bf16.gmra.mxu0 %v257
  %v604 = vpop.f32.mrf.mxu0
  %v605 = vadd.f32 %v131, %v604
  %v606 = vpop.f32.mrf.mxu0
  %v607 = vpop.f32.mrf.mxu0
  %v608 = vadd.f32 %v131, %v607
  %v609 = vpop.f32.mrf.mxu0
  %610 = vmatprep.mubr.bf16.mxu0 %v263
  %611 = vmatmul.mubr.bf16.gmra.mxu0 %v262
  %v612 = vpop.f32.mrf.mxu0
  %v613 = vadd.f32 %v131, %v612
  %v614 = vpop.f32.mrf.mxu0
  %v615 = vpop.f32.mrf.mxu0
  %v616 = vadd.f32 %v131, %v615
  %v617 = vpop.f32.mrf.mxu0
  %618 = vmatprep.mubr.bf16.mxu0 %v268
  %619 = vmatmul.mubr.bf16.gmra.mxu0 %v267
  %v620 = vpop.f32.mrf.mxu0
  %v621 = vadd.f32 %v131, %v620
  %v622 = vpop.f32.mrf.mxu0
  %v623 = vpop.f32.mrf.mxu0
  %v624 = vpop.f32.mrf.mxu0
  %625 = vdwg.mxu0
  %626 = vmatprep.subr.bf16.mxu0 0
  %627 = vmatpush1.bf16.msra.mxu0 %v467
  %628 = vmatprep.subr.bf16.mxu0 0
  %629 = vmatpush1.bf16.msra.mxu0 %v466
  %630 = vmatprep.subr.bf16.mxu0 0
  %631 = vmatpush1.bf16.msra.mxu0 %v465
  %632 = vmatprep.subr.bf16.mxu0 0
  %633 = vmatpush1.bf16.msra.mxu0 %v464
  %634 = vmatprep.subr.bf16.mxu0 0
  %635 = vmatpush1.bf16.msra.mxu0 %v463
  %636 = vmatprep.subr.bf16.mxu0 0
  %637 = vmatpush1.bf16.msra.mxu0 %v462
  %638 = vmatprep.subr.bf16.mxu0 0
  %639 = vmatpush1.bf16.msra.mxu0 %v461
  %640 = vmatprep.subr.bf16.mxu0 0
  %641 = vmatpush1.bf16.msra.mxu0 %v460
  %642 = vmatprep.subr.bf16.mxu0 0
  %643 = vmatpush2.bf16.msra.mxu0 %v475
  %644 = vmatprep.subr.bf16.mxu0 0
  %645 = vmatpush2.bf16.msra.mxu0 %v474
  %646 = vmatprep.subr.bf16.mxu0 0
  %647 = vmatpush2.bf16.msra.mxu0 %v473
  %648 = vmatprep.subr.bf16.mxu0 0
  %649 = vmatpush2.bf16.msra.mxu0 %v472
  %650 = vmatprep.subr.bf16.mxu0 0
  %651 = vmatpush2.bf16.msra.mxu0 %v471
  %652 = vmatprep.subr.bf16.mxu0 0
  %653 = vmatpush2.bf16.msra.mxu0 %v470
  %654 = vmatprep.subr.bf16.mxu0 0
  %655 = vmatpush2.bf16.msra.mxu0 %v469
  %656 = vmatprep.subr.bf16.mxu0 0
  %657 = vmatpush2.bf16.msra.mxu0 %v468
  %658 = vmatprep.mubr.bf16.mxu0 %v240
  %659 = vmatmul.mubr.bf16.gmra.mxu0 %v239
  %v660 = vpop.f32.mrf.mxu0
  %v661 = vadd.f32 %v573, %v660
  %v662 = vpop.f32.mrf.mxu0
  %v663 = vpop.f32.mrf.mxu0
  %v664 = vadd.f32 %v576, %v663
  %v665 = vpop.f32.mrf.mxu0
  %666 = vmatprep.mubr.bf16.mxu0 %v245
  %667 = vmatmul.mubr.bf16.gmra.mxu0 %v244
  %v668 = vpop.f32.mrf.mxu0
  %v669 = vadd.f32 %v581, %v668
  %v670 = vpop.f32.mrf.mxu0
  %v671 = vpop.f32.mrf.mxu0
  %v672 = vadd.f32 %v584, %v671
  %v673 = vpop.f32.mrf.mxu0
  %674 = vmatprep.mubr.bf16.mxu0 %v250
  %675 = vmatmul.mubr.bf16.gmra.mxu0 %v249
  %v676 = vpop.f32.mrf.mxu0
  %v677 = vadd.f32 %v589, %v676
  %v678 = vpop.f32.mrf.mxu0
  %v679 = vpop.f32.mrf.mxu0
  %v680 = vadd.f32 %v592, %v679
  %v681 = vpop.f32.mrf.mxu0
  %682 = vmatprep.mubr.bf16.mxu0 %v255
  %683 = vmatmul.mubr.bf16.gmra.mxu0 %v254
  %v684 = vpop.f32.mrf.mxu0
  %v685 = vadd.f32 %v597, %v684
  %v686 = vpop.f32.mrf.mxu0
  %v687 = vpop.f32.mrf.mxu0
  %v688 = vadd.f32 %v600, %v687
  %v689 = vpop.f32.mrf.mxu0
  %690 = vmatprep.mubr.bf16.mxu0 %v260
  %691 = vmatmul.mubr.bf16.gmra.mxu0 %v259
  %v692 = vpop.f32.mrf.mxu0
  %v693 = vadd.f32 %v605, %v692
  %v694 = vpop.f32.mrf.mxu0
  %v695 = vpop.f32.mrf.mxu0
  %v696 = vadd.f32 %v608, %v695
  %v697 = vpop.f32.mrf.mxu0
  %698 = vmatprep.mubr.bf16.mxu0 %v265
  %699 = vmatmul.mubr.bf16.gmra.mxu0 %v264
  %v700 = vpop.f32.mrf.mxu0
  %v701 = vadd.f32 %v613, %v700
  %v702 = vpop.f32.mrf.mxu0
  %v703 = vpop.f32.mrf.mxu0
  %v704 = vadd.f32 %v616, %v703
  %v705 = vpop.f32.mrf.mxu0
  %706 = vmatprep.mubr.bf16.mxu0 %v270
  %707 = vmatmul.mubr.bf16.gmra.mxu0 %v269
  %v708 = vpop.f32.mrf.mxu0
  %v709 = vadd.f32 %v621, %v708
  %v710 = vpop.f32.mrf.mxu0
  %v711 = vpop.f32.mrf.mxu0
  %v712 = vpop.f32.mrf.mxu0
  %713 = vdwg.mxu0
  %714 = vmatprep.subr.bf16.mxu0 0
  %715 = vmatpush1.bf16.msra.mxu0 0
  %716 = vmatprep.subr.bf16.mxu0 0
  %717 = vmatpush1.bf16.msra.mxu0 0
  %718 = vmatprep.subr.bf16.mxu0 0
  %719 = vmatpush1.bf16.msra.mxu0 0
  %720 = vmatprep.subr.bf16.mxu0 0
  %721 = vmatpush1.bf16.msra.mxu0 0
  %722 = vmatprep.subr.bf16.mxu0 0
  %723 = vmatpush1.bf16.msra.mxu0 %v479
  %724 = vmatprep.subr.bf16.mxu0 0
  %725 = vmatpush1.bf16.msra.mxu0 %v478
  %726 = vmatprep.subr.bf16.mxu0 0
  %727 = vmatpush1.bf16.msra.mxu0 %v477
  %728 = vmatprep.subr.bf16.mxu0 0
  %729 = vmatpush1.bf16.msra.mxu0 %v476
  %730 = vmatprep.subr.bf16.mxu0 0
  %731 = vmatpush2.bf16.msra.mxu0 0
  %732 = vmatprep.subr.bf16.mxu0 0
  %733 = vmatpush2.bf16.msra.mxu0 0
  %734 = vmatprep.subr.bf16.mxu0 0
  %735 = vmatpush2.bf16.msra.mxu0 0
  %736 = vmatprep.subr.bf16.mxu0 0
  %737 = vmatpush2.bf16.msra.mxu0 0
  %738 = vmatprep.subr.bf16.mxu0 0
  %739 = vmatpush2.bf16.msra.mxu0 0
  %740 = vmatprep.subr.bf16.mxu0 0
  %741 = vmatpush2.bf16.msra.mxu0 0
  %742 = vmatprep.subr.bf16.mxu0 0
  %743 = vmatpush2.bf16.msra.mxu0 0
  %744 = vmatprep.subr.bf16.mxu0 0
  %745 = vmatpush2.bf16.msra.mxu0 0
  %746 = vmatprep.mubr.bf16.mxu0 0
  %747 = vmatmul.mubr.bf16.gmra.mxu0 %v518
  %v748 = vpop.f32.mrf.mxu0
  %v749 = vadd.f32 %v661, %v748
  %v750 = vpop.f32.mrf.mxu0
  %v751 = vpop.f32.mrf.mxu0
  %v752 = vadd.f32 %v664, %v751
  %v753 = vpop.f32.mrf.mxu0
  %754 = vmatprep.mubr.bf16.mxu0 0
  %755 = vmatmul.mubr.bf16.gmra.mxu0 %v521
  %v756 = vpop.f32.mrf.mxu0
  %v757 = vadd.f32 %v669, %v756
  %v758 = vpop.f32.mrf.mxu0
  %v759 = vpop.f32.mrf.mxu0
  %v760 = vadd.f32 %v672, %v759
  %v761 = vpop.f32.mrf.mxu0
  %762 = vmatprep.mubr.bf16.mxu0 0
  %763 = vmatmul.mubr.bf16.gmra.mxu0 %v524
  %v764 = vpop.f32.mrf.mxu0
  %v765 = vadd.f32 %v677, %v764
  %v766 = vpop.f32.mrf.mxu0
  %v767 = vpop.f32.mrf.mxu0
  %v768 = vadd.f32 %v680, %v767
  %v769 = vpop.f32.mrf.mxu0
  %770 = vmatprep.mubr.bf16.mxu0 0
  %771 = vmatmul.mubr.bf16.gmra.mxu0 %v527
  %v772 = vpop.f32.mrf.mxu0
  %v773 = vadd.f32 %v685, %v772
  %v774 = vpop.f32.mrf.mxu0
  %v775 = vpop.f32.mrf.mxu0
  %v776 = vadd.f32 %v688, %v775
  %v777 = vpop.f32.mrf.mxu0
  %778 = vmatprep.mubr.bf16.mxu0 0
  %779 = vmatmul.mubr.bf16.gmra.mxu0 %v530
  %v780 = vpop.f32.mrf.mxu0
  %v781 = vadd.f32 %v693, %v780
  %v782 = vpop.f32.mrf.mxu0
  %v783 = vpop.f32.mrf.mxu0
  %v784 = vadd.f32 %v696, %v783
  %v785 = vpop.f32.mrf.mxu0
  %786 = vmatprep.mubr.bf16.mxu0 0
  %787 = vmatmul.mubr.bf16.gmra.mxu0 %v533
  %v788 = vpop.f32.mrf.mxu0
  %v789 = vadd.f32 %v701, %v788
  %v790 = vpop.f32.mrf.mxu0
  %v791 = vpop.f32.mrf.mxu0
  %v792 = vadd.f32 %v704, %v791
  %v793 = vpop.f32.mrf.mxu0
  %794 = vmatprep.mubr.bf16.mxu0 0
  %795 = vmatmul.mubr.bf16.gmra.mxu0 %v536
  %v796 = vpop.f32.mrf.mxu0
  %v797 = vadd.f32 %v709, %v796
  %v798 = vpop.f32.mrf.mxu0
  %v799 = vpop.f32.mrf.mxu0
  %v800 = vpop.f32.mrf.mxu0
  %801 = vdwg.mxu0
  %vm802 = vcmp.gt.f32.partialorder %v749, 0.0
  %vm803 = vcmp.gt.f32.partialorder %v752, 0.0
  %vm804 = vcmp.gt.f32.partialorder %v757, 0.0
  %vm805 = vcmp.gt.f32.partialorder %v760, 0.0
  %vm806 = vcmp.gt.f32.partialorder %v765, 0.0
  %vm807 = vcmp.gt.f32.partialorder %v768, 0.0
  %vm808 = vcmp.gt.f32.partialorder %v773, 0.0
  %vm809 = vcmp.gt.f32.partialorder %v776, 0.0
  %vm810 = vcmp.gt.f32.partialorder %v781, 0.0
  %vm811 = vcmp.gt.f32.partialorder %v784, 0.0
  %vm812 = vcmp.gt.f32.partialorder %v789, 0.0
  %vm813 = vcmp.gt.f32.partialorder %v792, 0.0
  %vm814 = vcmp.gt.f32.partialorder %v797, 0.0
  %v815 = vmul.f32 %v749, 0.01
  %v816 = vmul.f32 %v752, 0.01
  %v817 = vmul.f32 %v757, 0.01
  %v818 = vmul.f32 %v760, 0.01
  %v819 = vmul.f32 %v765, 0.01
  %v820 = vmul.f32 %v768, 0.01
  %v821 = vmul.f32 %v773, 0.01
  %v822 = vmul.f32 %v776, 0.01
  %v823 = vmul.f32 %v781, 0.01
  %v824 = vmul.f32 %v784, 0.01
  %v825 = vmul.f32 %v789, 0.01
  %v826 = vmul.f32 %v792, 0.01
  %v827 = vmul.f32 %v797, 0.01
  %v828 = vsel %vm802, %v749, %v815
  %v829 = vsel %vm803, %v752, %v816
  %v830 = vsel %vm804, %v757, %v817
  %v831 = vsel %vm805, %v760, %v818
  %v832 = vsel %vm806, %v765, %v819
  %v833 = vsel %vm807, %v768, %v820
  %v834 = vsel %vm808, %v773, %v821
  %v835 = vsel %vm809, %v776, %v822
  %v836 = vsel %vm810, %v781, %v823
  %v837 = vsel %vm811, %v784, %v824
  %v838 = vsel %vm812, %v789, %v825
  %v839 = vsel %vm813, %v792, %v826
  %v840 = vsel %vm814, %v797, %v827
  %v841 = vpack.c.bf16 %v829, %v828
  %v842 = vpack.c.bf16 %v831, %v830
  %v843 = vpack.c.bf16 %v833, %v832
  %v844 = vpack.c.bf16 %v835, %v834
  %v845 = vpack.c.bf16 %v837, %v836
  %v846 = vpack.c.bf16 %v839, %v838
  %v847 = vpack.c.bf16 %v840, %v840
  %v855 = vunpack.c.l.b16 %v841
  %v856 = vunpack.c.h.b16 %v841
  %v857 = vunpack.c.l.b16 %v842
  %v858 = vunpack.c.h.b16 %v842
  %v859 = vunpack.c.l.b16 %v843
  %v860 = vunpack.c.h.b16 %v843
  %v861 = vunpack.c.l.b16 %v844
  %v862 = vunpack.c.h.b16 %v844
  %v863 = vunpack.c.l.b16 %v845
  %v864 = vunpack.c.h.b16 %v845
  %v865 = vunpack.c.l.b16 %v846
  %v866 = vunpack.c.h.b16 %v846
  %v867 = vunpack.c.l.b16 %v847
  %v868 = vpack.c.b16 %v855, %v855
  %v869 = vpack.c.b16 %v856, %v856
  %v870 = vpack.c.b16 %v857, %v857
  %v871 = vpack.c.b16 %v858, %v858
  %v872 = vpack.c.b16 %v859, %v859
  %v873 = vpack.c.b16 %v860, %v860
  %v874 = vpack.c.b16 %v861, %v861
  %v875 = vpack.c.b16 %v862, %v862
  %v876 = vpack.c.b16 %v863, %v863
  %v877 = vpack.c.b16 %v864, %v864
  %v878 = vpack.c.b16 %v865, %v865
  %v879 = vpack.c.b16 %v866, %v866
  %v880 = vpack.c.b16 %v867, %v867
  %vm894 = vcmask 519168
  %895 = vst.msk [vmem:[%s3] sm:$0xf] %vm894, %v868
  %896 = vst.msk [vmem:[%s3 + $0x4] sm:$0xf] %vm894, %v869
  %897 = vst.msk [vmem:[%s3 + $0x8] sm:$0xf] %vm894, %v870
  %898 = vst.msk [vmem:[%s3 + $0xc] sm:$0xf] %vm894, %v871
  %899 = vst.msk [vmem:[%s3 + $0x10] sm:$0xf] %vm894, %v872
  %900 = vst.msk [vmem:[%s3 + $0x14] sm:$0xf] %vm894, %v873
  %901 = vst.msk [vmem:[%s3 + $0x18] sm:$0xf] %vm894, %v874
  %902 = vst.msk [vmem:[%s3 + $0x1c] sm:$0xf] %vm894, %v875
  %903 = vst.msk [vmem:[%s3 + $0x20] sm:$0xf] %vm894, %v876
  %904 = vst.msk [vmem:[%s3 + $0x24] sm:$0xf] %vm894, %v877
  %905 = vst.msk [vmem:[%s3 + $0x28] sm:$0xf] %vm894, %v878
  %906 = vst.msk [vmem:[%s3 + $0x2c] sm:$0xf] %vm894, %v879
  %vm907 = vcmask 516096
  %908 = vst.msk [vmem:[%s3 + $0x30] sm:$0x1] %vm907, %v880
  // Predicated region
  $region14: #{dueling_forward.6} parent=0 // pred_check
    _
  $region15: #{dueling_forward.6} parent=0 // pred_check_branch
    %910 = sbr.rel (0) target = $region17
  $region16: #{dueling_forward.6} parent=0 // pred_region
    _
  $region17: #{dueling_forward.6} parent=0 // pred_fallthru
    _
  // Predicated region
  $region18: #{dueling_forward.6} parent=0 // pred_check
    _
  $region19: #{dueling_forward.6} parent=0 // pred_check_branch
    %912 = sbr.rel (0) target = $region21
  $region20: #{dueling_forward.6} parent=0 // pred_region
    _
  $region21: #{dueling_forward.6} parent=0 // pred_fallthru
    _

// kernel: dueling_forward.7
$region0: #{dueling_forward.7}
  #allocation0 [shape = 'u32[]', space=smem, size = 0x4, offset = 0x4, fixed_abs, tag = 'smem constant byte address 0x4 - core index']
  #allocation1 [shape = 'u32[144,128]{1,0:T(1,128)}', space=vmem, size = 0x12000, scoped, tag = 'internal scratch']
  #allocation2 [shape = 'f32[2,1024]{1,0:T(2,128)}', space=vmem, size = 0x2000, scoped, tag = 'scratch operand']
  %s0 = inlined_call_operand.vmem [shape: bf16[2,3200], index: 0, kind: input, shape index: {}]
  %s1 = inlined_call_operand.vmem [shape: bf16[3200,1024], index: 1, kind: input, shape index: {}]
  %s2 = inlined_call_operand.vmem [shape: f32[1,1024], index: 2, kind: input, shape index: {}]
  %s3 = inlined_call_operand.vmem [shape: f32[1024,128], index: 3, kind: input, shape index: {}]
  %s4 = inlined_call_operand.vmem [shape: f32[1,128], index: 4, kind: input, shape index: {}]
  %s5 = inlined_call_operand.vmem [shape: f32[2,128], index: 5, kind: output, shape index: {}]
  %s6 = sld [smem:[#allocation0]]
  $region61: #{dueling_forward.7} parent=0
    _
  %s8 = ssub.s32 1, %s6
  %s9 = scalar_select 0, %s8, %s6
  loop: start=0, step=1, limit=7
  $region2: #{dueling_forward.7} parent=0 // loop_pre_header
    _
  $region3: #{dueling_forward.7} parent=0 // loop_header
    %s11 = sphi 0, %s15
    %p12 = scmp.ge.s32.totalorder %s11, 7
    %s21 = sphi 0, %s23
    %s24 = sphi 0, %s21
    %s25 = sphi 0, %s24
    %s41 = sphi 0, %s25
    %s47 = sphi 0, %s49
    %s50 = sphi 0, %s47
    %s51 = sphi 0, %s50
    %s67 = sphi 0, %s51
    %s71 = sphi 0, %s71
    %s73 = sphi 0, %s71
    %s74 = sphi 0, %s73
    %s88 = sphi 0, %s74
    %s92 = sphi 0, %s92
    %s94 = sphi 0, %s92
    %s95 = sphi 0, %s94
    %s109 = sphi 0, %s95
    %s113 = sphi 0, %s113
    %s115 = sphi 0, %s113
    %s116 = sphi 0, %s115
    %s130 = sphi 0, %s116
    %s134 = sphi 0, %s134
    %s136 = sphi 0, %s134
    %s137 = sphi 0, %s136
    %s151 = sphi 0, %s137
  $region4: #{dueling_forward.7} parent=0 // loop_header_branch
    %14 = sbr.rel (%p12) target = $region8
  $region5: #{dueling_forward.7} parent=0 // loop_body
    %s16 = ssub.s32 %s11, 1
    %s17 = ssub.s32 %s11, 2
    %s18 = sadd.s32 %s11, 1
    %s19 = ssub.s32 %s11, %s18
    %p20 = scmp.eq.s32.totalorder %s19, 0
    %s22 = sadd.s32 %s21, 1
    %s23 = scalar_select %p20, %s21, %s22
    %p26 = pneg %p20
    %p27 = scmp.eq.s32.totalorder %s11, 4
    %p28 = por %p26, %p27
    %p29 = scmp.ne.s32.totalorder %s21, %s24
    %p30 = scmp.eq.s32.totalorder %s11, 0
    %p31 = por %p29, %p30
    %p32 = scmp.ne.s32.totalorder %s21, %s24
    %p33 = scmp.eq.s32.totalorder %s16, 4
    %p34 = por %p32, %p33
    %p35 = scmp.ne.s32.totalorder %s24, %s25
    %p36 = scmp.eq.s32.totalorder %s16, 0
    %p37 = por %p35, %p36
    %p38 = scmp.ne.s32.totalorder %s24, %s25
    %p39 = scmp.eq.s32.totalorder %s17, 4
    %p40 = por %p38, %p39
    %p42 = scmp.ne.s32.totalorder %s25, %s41
    %p43 = scmp.eq.s32.totalorder %s17, 0
    %p44 = por %p42, %p43
    %s45 = ssub.s32 %s11, %s18
    %p46 = scmp.eq.s32.totalorder %s45, 0
    %s48 = sadd.s32 %s47, 1
    %s49 = scalar_select %p46, %s47, %s48
    %p52 = pneg %p46
    %p53 = scmp.eq.s32.totalorder %s11, 4
    %p54 = por %p52, %p53
    %p55 = scmp.ne.s32.totalorder %s47, %s50
    %p56 = scmp.eq.s32.totalorder %s11, 0
    %p57 = por %p55, %p56
    %p58 = scmp.ne.s32.totalorder %s47, %s50
    %p59 = scmp.eq.s32.totalorder %s16, 4
    %p60 = por %p58, %p59
    %p61 = scmp.ne.s32.totalorder %s50, %s51
    %p62 = scmp.eq.s32.totalorder %s16, 0
    %p63 = por %p61, %p62
    %p64 = scmp.ne.s32.totalorder %s50, %s51
    %p65 = scmp.eq.s32.totalorder %s17, 4
    %p66 = por %p64, %p65
    %p68 = scmp.ne.s32.totalorder %s51, %s67
    %p69 = scmp.eq.s32.totalorder %s17, 0
    %p70 = por %p68, %p69
    %s72 = sadd.s32 %s71, 1
    %p75 = scmp.eq.s32.totalorder %s11, 4
    %p76 = scmp.ne.s32.totalorder %s71, %s73
    %p77 = scmp.eq.s32.totalorder %s11, 0
    %p78 = por %p76, %p77
    %p79 = scmp.ne.s32.totalorder %s71, %s73
    %p80 = scmp.eq.s32.totalorder %s16, 4
    %p81 = por %p79, %p80
    %p82 = scmp.ne.s32.totalorder %s73, %s74
    %p83 = scmp.eq.s32.totalorder %s16, 0
    %p84 = por %p82, %p83
    %p85 = scmp.ne.s32.totalorder %s73, %s74
    %p86 = scmp.eq.s32.totalorder %s17, 4
    %p87 = por %p85, %p86
    %p89 = scmp.ne.s32.totalorder %s74, %s88
    %p90 = scmp.eq.s32.totalorder %s17, 0
    %p91 = por %p89, %p90
    %s93 = sadd.s32 %s92, 1
    %p96 = scmp.eq.s32.totalorder %s11, 4
    %p97 = scmp.ne.s32.totalorder %s92, %s94
    %p98 = scmp.eq.s32.totalorder %s11, 0
    %p99 = por %p97, %p98
    %p100 = scmp.ne.s32.totalorder %s92, %s94
    %p101 = scmp.eq.s32.totalorder %s16, 4
    %p102 = por %p100, %p101
    %p103 = scmp.ne.s32.totalorder %s94, %s95
    %p104 = scmp.eq.s32.totalorder %s16, 0
    %p105 = por %p103, %p104
    %p106 = scmp.ne.s32.totalorder %s94, %s95
    %p107 = scmp.eq.s32.totalorder %s17, 4
    %p108 = por %p106, %p107
    %p110 = scmp.ne.s32.totalorder %s95, %s109
    %p111 = scmp.eq.s32.totalorder %s17, 0
    %p112 = por %p110, %p111
    %s114 = sadd.s32 %s113, 1
    %p117 = scmp.eq.s32.totalorder %s11, 4
    %p118 = scmp.ne.s32.totalorder %s113, %s115
    %p119 = scmp.eq.s32.totalorder %s11, 0
    %p120 = por %p118, %p119
    %p121 = scmp.ne.s32.totalorder %s113, %s115
    %p122 = scmp.eq.s32.totalorder %s16, 4
    %p123 = por %p121, %p122
    %p124 = scmp.ne.s32.totalorder %s115, %s116
    %p125 = scmp.eq.s32.totalorder %s16, 0
    %p126 = por %p124, %p125
    %p127 = scmp.ne.s32.totalorder %s115, %s116
    %p128 = scmp.eq.s32.totalorder %s17, 4
    %p129 = por %p127, %p128
    %p131 = scmp.ne.s32.totalorder %s116, %s130
    %p132 = scmp.eq.s32.totalorder %s17, 0
    %p133 = por %p131, %p132
    %s135 = sadd.s32 %s134, 1
    %p138 = scmp.eq.s32.totalorder %s11, 4
    %p139 = scmp.ne.s32.totalorder %s134, %s136
    %p140 = scmp.eq.s32.totalorder %s11, 0
    %p141 = por %p139, %p140
    %p142 = scmp.ne.s32.totalorder %s134, %s136
    %p143 = scmp.eq.s32.totalorder %s16, 4
    %p144 = por %p142, %p143
    %p145 = scmp.ne.s32.totalorder %s136, %s137
    %p146 = scmp.eq.s32.totalorder %s16, 0
    %p147 = por %p145, %p146
    %p148 = scmp.ne.s32.totalorder %s136, %s137
    %p149 = scmp.eq.s32.totalorder %s17, 4
    %p150 = por %p148, %p149
    %p152 = scmp.ne.s32.totalorder %s137, %s151
    %p153 = scmp.eq.s32.totalorder %s17, 0
    %p154 = por %p152, %p153
    %p155 = scmp.le.s32.totalorder 1, %s11
    %p156 = scmp.lt.s32.totalorder %s11, 6
    %p157 = pnand %p155, %p156
    %p158 = pneg %p157
    // Predicated region
    $region9: #{dueling_forward.7} parent=5 // pred_check
      _
    $region10: #{dueling_forward.7} parent=5 // pred_check_branch
      %160 = sbr.rel (%p157) target = $region12
    $region11: #{dueling_forward.7} parent=5 // pred_region
      %s161 = ssub.s32 %s11, 1
      // Predicated region
      $region13: #{dueling_forward.7} parent=11 // pred_check
        %p162 = pneg %p84
      $region14: #{dueling_forward.7} parent=11 // pred_check_branch
        %164 = sbr.rel (%p162) target = $region16
      $region15: #{dueling_forward.7} parent=11 // pred_region
        _
      $region16: #{dueling_forward.7} parent=11 // pred_fallthru
        _
      // Predicated region
      $region17: #{dueling_forward.7} parent=11 // pred_check
        %p165 = pneg %p105
      $region18: #{dueling_forward.7} parent=11 // pred_check_branch
        %167 = sbr.rel (%p165) target = $region20
      $region19: #{dueling_forward.7} parent=11 // pred_region
        _
      $region20: #{dueling_forward.7} parent=11 // pred_fallthru
        _
      // Predicated region
      $region21: #{dueling_forward.7} parent=11 // pred_check
        %p168 = pneg %p126
      $region22: #{dueling_forward.7} parent=11 // pred_check_branch
        %170 = sbr.rel (%p168) target = $region24
      $region23: #{dueling_forward.7} parent=11 // pred_region
        _
      $region24: #{dueling_forward.7} parent=11 // pred_fallthru
        _
    $region12: #{dueling_forward.7} parent=5 // pred_fallthru
      _
    %p171 = scmp.lt.s32.totalorder %s11, 5
    // Predicated region
    $region25: #{dueling_forward.7} parent=5 // pred_check
      %p172 = pneg %p171
    $region26: #{dueling_forward.7} parent=5 // pred_check_branch
      %174 = sbr.rel (%p172) target = $region28
    $region27: #{dueling_forward.7} parent=5 // pred_region
      // Predicated region
      $region29: #{dueling_forward.7} parent=27 // pred_check
        %p175 = pneg %p31
      $region30: #{dueling_forward.7} parent=27 // pred_check_branch
        %177 = sbr.rel (%p175) target = $region32
      $region31: #{dueling_forward.7} parent=27 // pred_region
        %s178 = smul.u32 5, %s11
        %p179 = scmp.lt.s32.totalorder %s178, 24
        %s180 = scalar_select %p179, %s178, 24
        %s181 = scalar_lea.vmem %s0, %s180
        %s182 = smul.u32 5, %s11
      $region32: #{dueling_forward.7} parent=27 // pred_fallthru
        _
      // Predicated region
      $region33: #{dueling_forward.7} parent=27 // pred_check
        %p183 = pneg %p57
      $region34: #{dueling_forward.7} parent=27 // pred_check_branch
        %185 = sbr.rel (%p183) target = $region36
      $region35: #{dueling_forward.7} parent=27 // pred_region
        %s186 = smul.u32 80, %s11
        %p187 = scmp.lt.s32.totalorder %s186, 399
        %s188 = scalar_select %p187, %s186, 399
        %s189 = smul.addr %s188, 8
        %s190 = smul.addr %s189, 4
        %s191 = scalar_lea.vmem %s1, %s190
        %s192 = smul.u32 80, %s11
      $region36: #{dueling_forward.7} parent=27 // pred_fallthru
        _
    $region28: #{dueling_forward.7} parent=5 // pred_fallthru
      _
    %p193 = scmp.le.s32.totalorder 1, %s11
    %p194 = scmp.lt.s32.totalorder %s11, 6
    %p195 = pnand %p193, %p194
    %p196 = pneg %p195
    // Predicated region
    $region37: #{dueling_forward.7} parent=5 // pred_check
      _
    $region38: #{dueling_forward.7} parent=5 // pred_check_branch
      %198 = sbr.rel (%p195) target = $region40
    $region39: #{dueling_forward.7} parent=5 // pred_region
      %s199 = ssub.s32 %s11, 1
      %s200 = smul.u32 5, %s16
      %p201 = scmp.lt.s32.totalorder %s200, 24
      %s202 = scalar_select %p201, %s200, 24
      %s203 = scalar_lea.vmem %s0, %s202
      %p204 = pneg %p37
      %p205 = pneg %p34
      %s206 = smul.u32 80, %s16
      %p207 = scmp.lt.s32.totalorder %s206, 399
      %s208 = scalar_select %p207, %s206, 399
      %s209 = smul.addr %s208, 8
      %s210 = smul.addr %s209, 4
      %s211 = scalar_lea.vmem %s1, %s210
      %p212 = pneg %p63
      %p213 = pneg %p60
      %p214 = pneg %p84
      %p215 = pneg %p81
      %p216 = pneg %p105
      %p217 = pneg %p102
      %p218 = pneg %p126
      %p219 = pneg %p123
      %p220 = pneg %p147
      %p221 = pneg %p144
      %s222 = smul.u32 5, %s16
      %p223 = scmp.lt.s32.totalorder %s222, 24
      %s224 = scalar_select %p223, %s222, 24
      %s225 = scalar_lea.vmem %s0, %s224
      %s226 = smul.u32 5, %s16
      %s227 = smul.u32 80, %s16
      %p228 = scmp.lt.s32.totalorder %s227, 399
      %s229 = scalar_select %p228, %s227, 399
      %s230 = smul.addr %s229, 8
      %s231 = smul.addr %s230, 4
      %s232 = scalar_lea.vmem %s1, %s231
      %s233 = smul.u32 80, %s16
      %p235 = scmp.eq.s32.totalorder %s16, 0
      // Predicated region
      $region41: #{dueling_forward.7} parent=39 // pred_check
        %p236 = pneg %p235
      $region42: #{dueling_forward.7} parent=39 // pred_check_branch
        %238 = sbr.rel (%p236) target = $region44
      $region43: #{dueling_forward.7} parent=39 // pred_region
        %239 = vst [vmem:[#allocation2] sm:$0xff] 0.0
        %240 = vst [vmem:[#allocation2 + $0x8] sm:$0xff] 0.0
      $region44: #{dueling_forward.7} parent=39 // pred_fallthru
        _
      %v241 = vld [vmem:[#allocation2] sm:$0xff]
      %v242 = vld [vmem:[#allocation2 + $0x8] sm:$0xff]
      %v243 = vld [vmem:[%s225] sm:$0x1f]
      %v244 = vld [vmem:[%s232] sm:$0xff]
      %v245 = vld [vmem:[%s232 + $0x8] sm:$0xff]
      %v246 = vld [vmem:[%s232 + $0x10] sm:$0xff]
      %v247 = vld [vmem:[%s232 + $0x18] sm:$0xff]
      %v248 = vld [vmem:[%s232 + $0x20] sm:$0xff]
      %v249 = vld [vmem:[%s232 + $0x28] sm:$0xff]
      %v250 = vld [vmem:[%s232 + $0x30] sm:$0xff]
      %v251 = vld [vmem:[%s232 + $0x38] sm:$0xff]
      %v252 = vld [vmem:[%s232 + $0x40] sm:$0xff]
      %v253 = vld [vmem:[%s232 + $0x48] sm:$0xff]
      %v254 = vld [vmem:[%s232 + $0x50] sm:$0xff]
      %v255 = vld [vmem:[%s232 + $0x58] sm:$0xff]
      %v256 = vld [vmem:[%s232 + $0x60] sm:$0xff]
      %v257 = vld [vmem:[%s232 + $0x68] sm:$0xff]
      %v258 = vld [vmem:[%s232 + $0x70] sm:$0xff]
      %v259 = vld [vmem:[%s232 + $0x78] sm:$0xff]
      %v260 = vld [vmem:[%s232 + $0x80] sm:$0xff]
      %v261 = vld [vmem:[%s232 + $0x88] sm:$0xff]
      %v262 = vld [vmem:[%s232 + $0x90] sm:$0xff]
      %v263 = vld [vmem:[%s232 + $0x98] sm:$0xff]
      %v264 = vld [vmem:[%s232 + $0xa0] sm:$0xff]
      %v265 = vld [vmem:[%s232 + $0xa8] sm:$0xff]
      %v266 = vld [vmem:[%s232 + $0xb0] sm:$0xff]
      %v267 = vld [vmem:[%s232 + $0xb8] sm:$0xff]
      %v268 = vld [vmem:[%s232 + $0xc0] sm:$0xff]
      %v269 = vld [vmem:[%s232 + $0xc8] sm:$0xff]
      %v270 = vld [vmem:[%s232 + $0xd0] sm:$0xff]
      %v271 = vld [vmem:[%s232 + $0xd8] sm:$0xff]
      %v272 = vld [vmem:[%s232 + $0xe0] sm:$0xff]
      %v273 = vld [vmem:[%s232 + $0xe8] sm:$0xff]
      %v274 = vld [vmem:[%s232 + $0xf0] sm:$0xff]
      %v275 = vld [vmem:[%s232 + $0xf8] sm:$0xff]
      %v276 = vld [vmem:[%s232 + $0x100] sm:$0xff]
      %v277 = vld [vmem:[%s232 + $0x108] sm:$0xff]
      %v278 = vld [vmem:[%s232 + $0x110] sm:$0xff]
      %v279 = vld [vmem:[%s232 + $0x118] sm:$0xff]
      %v280 = vld [vmem:[%s232 + $0x120] sm:$0xff]
      %v281 = vld [vmem:[%s232 + $0x128] sm:$0xff]
      %v282 = vld [vmem:[%s232 + $0x130] sm:$0xff]
      %v283 = vld [vmem:[%s232 + $0x138] sm:$0xff]
      %v284 = vld [vmem:[%s232 + $0x140] sm:$0xff]
      %v285 = vld [vmem:[%s232 + $0x148] sm:$0xff]
      %v286 = vld [vmem:[%s232 + $0x150] sm:$0xff]
      %v287 = vld [vmem:[%s232 + $0x158] sm:$0xff]
      %v288 = vld [vmem:[%s232 + $0x160] sm:$0xff]
      %v289 = vld [vmem:[%s232 + $0x168] sm:$0xff]
      %v290 = vld [vmem:[%s232 + $0x170] sm:$0xff]
      %v291 = vld [vmem:[%s232 + $0x178] sm:$0xff]
      %v292 = vld [vmem:[%s232 + $0x180] sm:$0xff]
      %v293 = vld [vmem:[%s232 + $0x188] sm:$0xff]
      %v294 = vld [vmem:[%s232 + $0x190] sm:$0xff]
      %v295 = vld [vmem:[%s232 + $0x198] sm:$0xff]
      %v296 = vld [vmem:[%s232 + $0x1a0] sm:$0xff]
      %v297 = vld [vmem:[%s232 + $0x1a8] sm:$0xff]
      %v298 = vld [vmem:[%s232 + $0x1b0] sm:$0xff]
      %v299 = vld [vmem:[%s232 + $0x1b8] sm:$0xff]
      %v300 = vld [vmem:[%s232 + $0x1c0] sm:$0xff]
      %v301 = vld [vmem:[%s232 + $0x1c8] sm:$0xff]
      %v302 = vld [vmem:[%s232 + $0x1d0] sm:$0xff]
      %v303 = vld [vmem:[%s232 + $0x1d8] sm:$0xff]
      %v304 = vld [vmem:[%s232 + $0x1e0] sm:$0xff]
      %v305 = vld [vmem:[%s232 + $0x1e8] sm:$0xff]
      %v306 = vld [vmem:[%s232 + $0x1f0] sm:$0xff]
      %v307 = vld [vmem:[%s232 + $0x1f8] sm:$0xff]
      %v308 = vld [vmem:[%s232 + $0x200] sm:$0xff]
      %v309 = vld [vmem:[%s232 + $0x208] sm:$0xff]
      %v310 = vld [vmem:[%s232 + $0x210] sm:$0xff]
      %v311 = vld [vmem:[%s232 + $0x218] sm:$0xff]
      %v312 = vld [vmem:[%s232 + $0x220] sm:$0xff]
      %v313 = vld [vmem:[%s232 + $0x228] sm:$0xff]
      %v314 = vld [vmem:[%s232 + $0x230] sm:$0xff]
      %v315 = vld [vmem:[%s232 + $0x238] sm:$0xff]
      %v316 = vld [vmem:[%s232 + $0x240] sm:$0xff]
      %v317 = vld [vmem:[%s232 + $0x248] sm:$0xff]
      %v318 = vld [vmem:[%s232 + $0x250] sm:$0xff]
      %v319 = vld [vmem:[%s232 + $0x258] sm:$0xff]
      %v320 = vld [vmem:[%s232 + $0x260] sm:$0xff]
      %v321 = vld [vmem:[%s232 + $0x268] sm:$0xff]
      %v322 = vld [vmem:[%s232 + $0x270] sm:$0xff]
      %v323 = vld [vmem:[%s232 + $0x278] sm:$0xff]
      %v324 = vld [vmem:[%s232 + $0x280] sm:$0xff]
      %v325 = vld [vmem:[%s232 + $0x288] sm:$0xff]
      %v326 = vld [vmem:[%s232 + $0x290] sm:$0xff]
      %v327 = vld [vmem:[%s232 + $0x298] sm:$0xff]
      %v328 = vld [vmem:[%s232 + $0x2a0] sm:$0xff]
      %v329 = vld [vmem:[%s232 + $0x2a8] sm:$0xff]
      %v330 = vld [vmem:[%s232 + $0x2b0] sm:$0xff]
      %v331 = vld [vmem:[%s232 + $0x2b8] sm:$0xff]
      %v332 = vld [vmem:[%s232 + $0x2c0] sm:$0xff]
      %v333 = vld [vmem:[%s232 + $0x2c8] sm:$0xff]
      %v334 = vld [vmem:[%s232 + $0x2d0] sm:$0xff]
      %v335 = vld [vmem:[%s232 + $0x2d8] sm:$0xff]
      %v336 = vld [vmem:[%s232 + $0x2e0] sm:$0xff]
      %v337 = vld [vmem:[%s232 + $0x2e8] sm:$0xff]
      %v338 = vld [vmem:[%s232 + $0x2f0] sm:$0xff]
      %v339 = vld [vmem:[%s232 + $0x2f8] sm:$0xff]
      %v340 = vld [vmem:[%s232 + $0x300] sm:$0xff]
      %v341 = vld [vmem:[%s232 + $0x308] sm:$0xff]
      %v342 = vld [vmem:[%s232 + $0x310] sm:$0xff]
      %v343 = vld [vmem:[%s232 + $0x318] sm:$0xff]
      %v344 = vld [vmem:[%s232 + $0x320] sm:$0xff]
      %v345 = vld [vmem:[%s232 + $0x328] sm:$0xff]
      %v346 = vld [vmem:[%s232 + $0x330] sm:$0xff]
      %v347 = vld [vmem:[%s232 + $0x338] sm:$0xff]
      %v348 = vld [vmem:[%s232 + $0x340] sm:$0xff]
      %v349 = vld [vmem:[%s232 + $0x348] sm:$0xff]
      %v350 = vld [vmem:[%s232 + $0x350] sm:$0xff]
      %v351 = vld [vmem:[%s232 + $0x358] sm:$0xff]
      %v352 = vld [vmem:[%s232 + $0x360] sm:$0xff]
      %v353 = vld [vmem:[%s232 + $0x368] sm:$0xff]
      %v354 = vld [vmem:[%s232 + $0x370] sm:$0xff]
      %v355 = vld [vmem:[%s232 + $0x378] sm:$0xff]
      %v356 = vld [vmem:[%s232 + $0x380] sm:$0xff]
      %v357 = vld [vmem:[%s232 + $0x388] sm:$0xff]
      %v358 = vld [vmem:[%s232 + $0x390] sm:$0xff]
      %v359 = vld [vmem:[%s232 + $0x398] sm:$0xff]
      %v360 = vld [vmem:[%s232 + $0x3a0] sm:$0xff]
      %v361 = vld [vmem:[%s232 + $0x3a8] sm:$0xff]
      %v362 = vld [vmem:[%s232 + $0x3b0] sm:$0xff]
      %v363 = vld [vmem:[%s232 + $0x3b8] sm:$0xff]
      %v364 = vld [vmem:[%s232 + $0x3c0] sm:$0xff]
      %v365 = vld [vmem:[%s232 + $0x3c8] sm:$0xff]
      %v366 = vld [vmem:[%s232 + $0x3d0] sm:$0xff]
      %v367 = vld [vmem:[%s232 + $0x3d8] sm:$0xff]
      %v368 = vld [vmem:[%s232 + $0x3e0] sm:$0xff]
      %v369 = vld [vmem:[%s232 + $0x3e8] sm:$0xff]
      %v370 = vld [vmem:[%s232 + $0x3f0] sm:$0xff]
      %v371 = vld [vmem:[%s232 + $0x3f8] sm:$0xff]
      %v372 = vld [vmem:[%s232 + $0x400] sm:$0xff]
      %v373 = vld [vmem:[%s232 + $0x408] sm:$0xff]
      %v374 = vld [vmem:[%s232 + $0x410] sm:$0xff]
      %v375 = vld [vmem:[%s232 + $0x418] sm:$0xff]
      %v376 = vld [vmem:[%s232 + $0x420] sm:$0xff]
      %v377 = vld [vmem:[%s232 + $0x428] sm:$0xff]
      %v378 = vld [vmem:[%s232 + $0x430] sm:$0xff]
      %v379 = vld [vmem:[%s232 + $0x438] sm:$0xff]
      %v380 = vld [vmem:[%s232 + $0x440] sm:$0xff]
      %v381 = vld [vmem:[%s232 + $0x448] sm:$0xff]
      %v382 = vld [vmem:[%s232 + $0x450] sm:$0xff]
      %v383 = vld [vmem:[%s232 + $0x458] sm:$0xff]
      %v384 = vld [vmem:[%s232 + $0x460] sm:$0xff]
      %v385 = vld [vmem:[%s232 + $0x468] sm:$0xff]
      %v386 = vld [vmem:[%s232 + $0x470] sm:$0xff]
      %v387 = vld [vmem:[%s232 + $0x478] sm:$0xff]
      %v388 = vld [vmem:[%s232 + $0x480] sm:$0xff]
      %v389 = vld [vmem:[%s232 + $0x488] sm:$0xff]
      %v390 = vld [vmem:[%s232 + $0x490] sm:$0xff]
      %v391 = vld [vmem:[%s232 + $0x498] sm:$0xff]
      %v392 = vld [vmem:[%s232 + $0x4a0] sm:$0xff]
      %v393 = vld [vmem:[%s232 + $0x4a8] sm:$0xff]
      %v394 = vld [vmem:[%s232 + $0x4b0] sm:$0xff]
      %v395 = vld [vmem:[%s232 + $0x4b8] sm:$0xff]
      %v396 = vld [vmem:[%s232 + $0x4c0] sm:$0xff]
      %v397 = vld [vmem:[%s232 + $0x4c8] sm:$0xff]
      %v398 = vld [vmem:[%s232 + $0x4d0] sm:$0xff]
      %v399 = vld [vmem:[%s232 + $0x4d8] sm:$0xff]
      %v400 = vld [vmem:[%s232 + $0x4e0] sm:$0xff]
      %v401 = vld [vmem:[%s232 + $0x4e8] sm:$0xff]
      %v402 = vld [vmem:[%s232 + $0x4f0] sm:$0xff]
      %v403 = vld [vmem:[%s232 + $0x4f8] sm:$0xff]
      %v404 = vld [vmem:[%s232 + $0x500] sm:$0xff]
      %v405 = vld [vmem:[%s232 + $0x508] sm:$0xff]
      %v406 = vld [vmem:[%s232 + $0x510] sm:$0xff]
      %v407 = vld [vmem:[%s232 + $0x518] sm:$0xff]
      %v408 = vld [vmem:[%s232 + $0x520] sm:$0xff]
      %v409 = vld [vmem:[%s232 + $0x528] sm:$0xff]
      %v410 = vld [vmem:[%s232 + $0x530] sm:$0xff]
      %v411 = vld [vmem:[%s232 + $0x538] sm:$0xff]
      %v412 = vld [vmem:[%s232 + $0x540] sm:$0xff]
      %v413 = vld [vmem:[%s232 + $0x548] sm:$0xff]
      %v414 = vld [vmem:[%s232 + $0x550] sm:$0xff]
      %v415 = vld [vmem:[%s232 + $0x558] sm:$0xff]
      %v416 = vld [vmem:[%s232 + $0x560] sm:$0xff]
      %v417 = vld [vmem:[%s232 + $0x568] sm:$0xff]
      %v418 = vld [vmem:[%s232 + $0x570] sm:$0xff]
      %v419 = vld [vmem:[%s232 + $0x578] sm:$0xff]
      %v420 = vld [vmem:[%s232 + $0x580] sm:$0xff]
      %v421 = vld [vmem:[%s232 + $0x588] sm:$0xff]
      %v422 = vld [vmem:[%s232 + $0x590] sm:$0xff]
      %v423 = vld [vmem:[%s232 + $0x598] sm:$0xff]
      %v424 = vld [vmem:[%s232 + $0x5a0] sm:$0xff]
      %v425 = vld [vmem:[%s232 + $0x5a8] sm:$0xff]
      %v426 = vld [vmem:[%s232 + $0x5b0] sm:$0xff]
      %v427 = vld [vmem:[%s232 + $0x5b8] sm:$0xff]
      %v428 = vld [vmem:[%s232 + $0x5c0] sm:$0xff]
      %v429 = vld [vmem:[%s232 + $0x5c8] sm:$0xff]
      %v430 = vld [vmem:[%s232 + $0x5d0] sm:$0xff]
      %v431 = vld [vmem:[%s232 + $0x5d8] sm:$0xff]
      %v432 = vld [vmem:[%s232 + $0x5e0] sm:$0xff]
      %v433 = vld [vmem:[%s232 + $0x5e8] sm:$0xff]
      %v434 = vld [vmem:[%s232 + $0x5f0] sm:$0xff]
      %v435 = vld [vmem:[%s232 + $0x5f8] sm:$0xff]
      %v436 = vld [vmem:[%s232 + $0x600] sm:$0xff]
      %v437 = vld [vmem:[%s232 + $0x608] sm:$0xff]
      %v438 = vld [vmem:[%s232 + $0x610] sm:$0xff]
      %v439 = vld [vmem:[%s232 + $0x618] sm:$0xff]
      %v440 = vld [vmem:[%s232 + $0x620] sm:$0xff]
      %v441 = vld [vmem:[%s232 + $0x628] sm:$0xff]
      %v442 = vld [vmem:[%s232 + $0x630] sm:$0xff]
      %v443 = vld [vmem:[%s232 + $0x638] sm:$0xff]
      %v444 = vld [vmem:[%s232 + $0x640] sm:$0xff]
      %v445 = vld [vmem:[%s232 + $0x648] sm:$0xff]
      %v446 = vld [vmem:[%s232 + $0x650] sm:$0xff]
      %v447 = vld [vmem:[%s232 + $0x658] sm:$0xff]
      %v448 = vld [vmem:[%s232 + $0x660] sm:$0xff]
      %v449 = vld [vmem:[%s232 + $0x668] sm:$0xff]
      %v450 = vld [vmem:[%s232 + $0x670] sm:$0xff]
      %v451 = vld [vmem:[%s232 + $0x678] sm:$0xff]
      %v452 = vld [vmem:[%s232 + $0x680] sm:$0xff]
      %v453 = vld [vmem:[%s232 + $0x688] sm:$0xff]
      %v454 = vld [vmem:[%s232 + $0x690] sm:$0xff]
      %v455 = vld [vmem:[%s232 + $0x698] sm:$0xff]
      %v456 = vld [vmem:[%s232 + $0x6a0] sm:$0xff]
      %v457 = vld [vmem:[%s232 + $0x6a8] sm:$0xff]
      %v458 = vld [vmem:[%s232 + $0x6b0] sm:$0xff]
      %v459 = vld [vmem:[%s232 + $0x6b8] sm:$0xff]
      %v460 = vld [vmem:[%s232 + $0x6c0] sm:$0xff]
      %v461 = vld [vmem:[%s232 + $0x6c8] sm:$0xff]
      %v462 = vld [vmem:[%s232 + $0x6d0] sm:$0xff]
      %v463 = vld [vmem:[%s232 + $0x6d8] sm:$0xff]
      %v464 = vld [vmem:[%s232 + $0x6e0] sm:$0xff]
      %v465 = vld [vmem:[%s232 + $0x6e8] sm:$0xff]
      %v466 = vld [vmem:[%s232 + $0x6f0] sm:$0xff]
      %v467 = vld [vmem:[%s232 + $0x6f8] sm:$0xff]
      %v468 = vld [vmem:[%s232 + $0x700] sm:$0xff]
      %v469 = vld [vmem:[%s232 + $0x708] sm:$0xff]
      %v470 = vld [vmem:[%s232 + $0x710] sm:$0xff]
      %v471 = vld [vmem:[%s232 + $0x718] sm:$0xff]
      %v472 = vld [vmem:[%s232 + $0x720] sm:$0xff]
      %v473 = vld [vmem:[%s232 + $0x728] sm:$0xff]
      %v474 = vld [vmem:[%s232 + $0x730] sm:$0xff]
      %v475 = vld [vmem:[%s232 + $0x738] sm:$0xff]
      %v476 = vld [vmem:[%s232 + $0x740] sm:$0xff]
      %v477 = vld [vmem:[%s232 + $0x748] sm:$0xff]
      %v478 = vld [vmem:[%s232 + $0x750] sm:$0xff]
      %v479 = vld [vmem:[%s232 + $0x758] sm:$0xff]
      %v480 = vld [vmem:[%s232 + $0x760] sm:$0xff]
      %v481 = vld [vmem:[%s232 + $0x768] sm:$0xff]
      %v482 = vld [vmem:[%s232 + $0x770] sm:$0xff]
      %v483 = vld [vmem:[%s232 + $0x778] sm:$0xff]
      %v484 = vld [vmem:[%s232 + $0x780] sm:$0xff]
      %v485 = vld [vmem:[%s232 + $0x788] sm:$0xff]
      %v486 = vld [vmem:[%s232 + $0x790] sm:$0xff]
      %v487 = vld [vmem:[%s232 + $0x798] sm:$0xff]
      %v488 = vld [vmem:[%s232 + $0x7a0] sm:$0xff]
      %v489 = vld [vmem:[%s232 + $0x7a8] sm:$0xff]
      %v490 = vld [vmem:[%s232 + $0x7b0] sm:$0xff]
      %v491 = vld [vmem:[%s232 + $0x7b8] sm:$0xff]
      %v492 = vld [vmem:[%s232 + $0x7c0] sm:$0xff]
      %v493 = vld [vmem:[%s232 + $0x7c8] sm:$0xff]
      %v494 = vld [vmem:[%s232 + $0x7d0] sm:$0xff]
      %v495 = vld [vmem:[%s232 + $0x7d8] sm:$0xff]
      %v496 = vld [vmem:[%s232 + $0x7e0] sm:$0xff]
      %v497 = vld [vmem:[%s232 + $0x7e8] sm:$0xff]
      %v498 = vld [vmem:[%s232 + $0x7f0] sm:$0xff]
      %v499 = vld [vmem:[%s232 + $0x7f8] sm:$0xff]
      %v500 = vld [vmem:[%s232 + $0x800] sm:$0xff]
      %v501 = vld [vmem:[%s232 + $0x808] sm:$0xff]
      %v502 = vld [vmem:[%s232 + $0x810] sm:$0xff]
      %v503 = vld [vmem:[%s232 + $0x818] sm:$0xff]
      %v504 = vld [vmem:[%s232 + $0x820] sm:$0xff]
      %v505 = vld [vmem:[%s232 + $0x828] sm:$0xff]
      %v506 = vld [vmem:[%s232 + $0x830] sm:$0xff]
      %v507 = vld [vmem:[%s232 + $0x838] sm:$0xff]
      %v508 = vld [vmem:[%s232 + $0x840] sm:$0xff]
      %v509 = vld [vmem:[%s232 + $0x848] sm:$0xff]
      %v510 = vld [vmem:[%s232 + $0x850] sm:$0xff]
      %v511 = vld [vmem:[%s232 + $0x858] sm:$0xff]
      %v512 = vld [vmem:[%s232 + $0x860] sm:$0xff]
      %v513 = vld [vmem:[%s232 + $0x868] sm:$0xff]
      %v514 = vld [vmem:[%s232 + $0x870] sm:$0xff]
      %v515 = vld [vmem:[%s232 + $0x878] sm:$0xff]
      %v516 = vld [vmem:[%s232 + $0x880] sm:$0xff]
      %v517 = vld [vmem:[%s232 + $0x888] sm:$0xff]
      %v518 = vld [vmem:[%s232 + $0x890] sm:$0xff]
      %v519 = vld [vmem:[%s232 + $0x898] sm:$0xff]
      %v520 = vld [vmem:[%s232 + $0x8a0] sm:$0xff]
      %v521 = vld [vmem:[%s232 + $0x8a8] sm:$0xff]
      %v522 = vld [vmem:[%s232 + $0x8b0] sm:$0xff]
      %v523 = vld [vmem:[%s232 + $0x8b8] sm:$0xff]
      %v524 = vld [vmem:[%s232 + $0x8c0] sm:$0xff]
      %v525 = vld [vmem:[%s232 + $0x8c8] sm:$0xff]
      %v526 = vld [vmem:[%s232 + $0x8d0] sm:$0xff]
      %v527 = vld [vmem:[%s232 + $0x8d8] sm:$0xff]
      %v528 = vld [vmem:[%s232 + $0x8e0] sm:$0xff]
      %v529 = vld [vmem:[%s232 + $0x8e8] sm:$0xff]
      %v530 = vld [vmem:[%s232 + $0x8f0] sm:$0xff]
      %v531 = vld [vmem:[%s232 + $0x8f8] sm:$0xff]
      %v532 = vld [vmem:[%s232 + $0x900] sm:$0xff]
      %v533 = vld [vmem:[%s232 + $0x908] sm:$0xff]
      %v534 = vld [vmem:[%s232 + $0x910] sm:$0xff]
      %v535 = vld [vmem:[%s232 + $0x918] sm:$0xff]
      %v536 = vld [vmem:[%s232 + $0x920] sm:$0xff]
      %v537 = vld [vmem:[%s232 + $0x928] sm:$0xff]
      %v538 = vld [vmem:[%s232 + $0x930] sm:$0xff]
      %v539 = vld [vmem:[%s232 + $0x938] sm:$0xff]
      %v540 = vld [vmem:[%s232 + $0x940] sm:$0xff]
      %v541 = vld [vmem:[%s232 + $0x948] sm:$0xff]
      %v542 = vld [vmem:[%s232 + $0x950] sm:$0xff]
      %v543 = vld [vmem:[%s232 + $0x958] sm:$0xff]
      %v544 = vld [vmem:[%s232 + $0x960] sm:$0xff]
      %v545 = vld [vmem:[%s232 + $0x968] sm:$0xff]
      %v546 = vld [vmem:[%s232 + $0x970] sm:$0xff]
      %v547 = vld [vmem:[%s232 + $0x978] sm:$0xff]
      %v548 = vld [vmem:[%s232 + $0x980] sm:$0xff]
      %v549 = vld [vmem:[%s232 + $0x988] sm:$0xff]
      %v550 = vld [vmem:[%s232 + $0x990] sm:$0xff]
      %v551 = vld [vmem:[%s232 + $0x998] sm:$0xff]
      %v552 = vld [vmem:[%s232 + $0x9a0] sm:$0xff]
      %v553 = vld [vmem:[%s232 + $0x9a8] sm:$0xff]
      %v554 = vld [vmem:[%s232 + $0x9b0] sm:$0xff]
      %v555 = vld [vmem:[%s232 + $0x9b8] sm:$0xff]
      %v556 = vld [vmem:[%s232 + $0x9c0] sm:$0xff]
      %v557 = vld [vmem:[%s232 + $0x9c8] sm:$0xff]
      %v558 = vld [vmem:[%s232 + $0x9d0] sm:$0xff]
      %v559 = vld [vmem:[%s232 + $0x9d8] sm:$0xff]
      %v560 = vld [vmem:[%s232 + $0x9e0] sm:$0xff]
      %v561 = vld [vmem:[%s232 + $0x9e8] sm:$0xff]
      %v562 = vld [vmem:[%s232 + $0x9f0] sm:$0xff]
      %v563 = vld [vmem:[%s232 + $0x9f8] sm:$0xff]
      %v565 = vcombine.high %v243, %v243
      %v567 = vunpack.c.l.s4 1966171168
      %v568 = vunpack.c.0.s8 %v567
      %v569 = vlaneseq
      %v570 = vshrl.u32 %v569, 7
      %v571 = vsub.s32 %v568, %v570
      %v572 = vrot.slane %v243, %v571
      %v574 = vunpack.c.l.s4 1966171168
      %v575 = vunpack.c.0.s8 %v574
      %v576 = vlaneseq
      %v577 = vshrl.u32 %v576, 7
      %v578 = vsub.s32 %v575, %v577
      %v579 = vrot.slane %v565, %v578
      %v580 = vcombine.high %v572, %v572
      %v582 = vunpack.c.l.s4 1966171168
      %v583 = vunpack.c.0.s8 %v582
      %v584 = vlaneseq
      %v585 = vshrl.u32 %v584, 7
      %v586 = vsub.s32 %v583, %v585
      %v587 = vrot.slane %v572, %v586
      %v589 = vunpack.c.l.s4 1966171168
      %v590 = vunpack.c.0.s8 %v589
      %v591 = vlaneseq
      %v592 = vshrl.u32 %v591, 7
      %v593 = vsub.s32 %v590, %v592
      %v594 = vrot.slane %v579, %v593
      %v596 = vunpack.c.l.s4 1966171168
      %v597 = vunpack.c.0.s8 %v596
      %v598 = vlaneseq
      %v599 = vshrl.u32 %v598, 7
      %v600 = vsub.s32 %v597, %v599
      %v601 = vrot.slane %v580, %v600
      %v602 = vcombine.high %v587, %v587
      %v603 = vcombine.high %v601, %v601
      %v929 = vunpack.c.l.b16 %v244
      %v930 = vunpack.c.h.b16 %v244
      %v931 = vunpack.c.l.b16 %v245
      %v932 = vunpack.c.h.b16 %v245
      %v933 = vunpack.c.l.b16 %v246
      %v934 = vunpack.c.h.b16 %v246
      %v935 = vunpack.c.l.b16 %v247
      %v936 = vunpack.c.h.b16 %v247
      %v937 = vunpack.c.l.b16 %v248
      %v938 = vunpack.c.h.b16 %v248
      %v939 = vunpack.c.l.b16 %v249
      %v940 = vunpack.c.h.b16 %v249
      %v941 = vunpack.c.l.b16 %v250
      %v942 = vunpack.c.h.b16 %v250
      %v943 = vunpack.c.l.b16 %v251
      %v944 = vunpack.c.h.b16 %v251
      %v945 = vunpack.c.l.b16 %v252
      %v946 = vunpack.c.h.b16 %v252
      %v947 = vunpack.c.l.b16 %v253
      %v948 = vunpack.c.h.b16 %v253
      %v949 = vunpack.c.l.b16 %v254
      %v950 = vunpack.c.h.b16 %v254
      %v951 = vunpack.c.l.b16 %v255
      %v952 = vunpack.c.h.b16 %v255
      %v953 = vunpack.c.l.b16 %v256
      %v954 = vunpack.c.h.b16 %v256
      %v955 = vunpack.c.l.b16 %v257
      %v956 = vunpack.c.h.b16 %v257
      %v957 = vunpack.c.l.b16 %v258
      %v958 = vunpack.c.h.b16 %v258
      %v959 = vunpack.c.l.b16 %v259
      %v960 = vunpack.c.h.b16 %v259
      %v961 = vunpack.c.l.b16 %v260
      %v962 = vunpack.c.h.b16 %v260
      %v963 = vunpack.c.l.b16 %v261
      %v964 = vunpack.c.h.b16 %v261
      %v965 = vunpack.c.l.b16 %v262
      %v966 = vunpack.c.h.b16 %v262
      %v967 = vunpack.c.l.b16 %v263
      %v968 = vunpack.c.h.b16 %v263
      %v969 = vunpack.c.l.b16 %v264
      %v970 = vunpack.c.h.b16 %v264
      %v971 = vunpack.c.l.b16 %v265
      %v972 = vunpack.c.h.b16 %v265
      %v973 = vunpack.c.l.b16 %v266
      %v974 = vunpack.c.h.b16 %v266
      %v975 = vunpack.c.l.b16 %v267
      %v976 = vunpack.c.h.b16 %v267
      %v977 = vunpack.c.l.b16 %v268
      %v978 = vunpack.c.h.b16 %v268
      %v979 = vunpack.c.l.b16 %v269
      %v980 = vunpack.c.h.b16 %v269
      %v981 = vunpack.c.l.b16 %v270
      %v982 = vunpack.c.h.b16 %v270
      %v983 = vunpack.c.l.b16 %v271
      %v984 = vunpack.c.h.b16 %v271
      %v985 = vunpack.c.l.b16 %v272
      %v986 = vunpack.c.h.b16 %v272
      %v987 = vunpack.c.l.b16 %v273
      %v988 = vunpack.c.h.b16 %v273
      %v989 = vunpack.c.l.b16 %v274
      %v990 = vunpack.c.h.b16 %v274
      %v991 = vunpack.c.l.b16 %v275
      %v992 = vunpack.c.h.b16 %v275
      %v993 = vunpack.c.l.b16 %v276
      %v994 = vunpack.c.h.b16 %v276
      %v995 = vunpack.c.l.b16 %v277
      %v996 = vunpack.c.h.b16 %v277
      %v997 = vunpack.c.l.b16 %v278
      %v998 = vunpack.c.h.b16 %v278
      %v999 = vunpack.c.l.b16 %v279
      %v1000 = vunpack.c.h.b16 %v279
      %v1001 = vunpack.c.l.b16 %v280
      %v1002 = vunpack.c.h.b16 %v280
      %v1003 = vunpack.c.l.b16 %v281
      %v1004 = vunpack.c.h.b16 %v281
      %v1005 = vunpack.c.l.b16 %v282
      %v1006 = vunpack.c.h.b16 %v282
      %v1007 = vunpack.c.l.b16 %v283
      %v1008 = vunpack.c.h.b16 %v283
      %v1009 = vunpack.c.l.b16 %v284
      %v1010 = vunpack.c.h.b16 %v284
      %v1011 = vunpack.c.l.b16 %v285
      %v1012 = vunpack.c.h.b16 %v285
      %v1013 = vunpack.c.l.b16 %v286
      %v1014 = vunpack.c.h.b16 %v286
      %v1015 = vunpack.c.l.b16 %v287
      %v1016 = vunpack.c.h.b16 %v287
      %v1017 = vunpack.c.l.b16 %v288
      %v1018 = vunpack.c.h.b16 %v288
      %v1019 = vunpack.c.l.b16 %v289
      %v1020 = vunpack.c.h.b16 %v289
      %v1021 = vunpack.c.l.b16 %v290
      %v1022 = vunpack.c.h.b16 %v290
      %v1023 = vunpack.c.l.b16 %v291
      %v1024 = vunpack.c.h.b16 %v291
      %v1025 = vunpack.c.l.b16 %v292
      %v1026 = vunpack.c.h.b16 %v292
      %v1027 = vunpack.c.l.b16 %v293
      %v1028 = vunpack.c.h.b16 %v293
      %v1029 = vunpack.c.l.b16 %v294
      %v1030 = vunpack.c.h.b16 %v294
      %v1031 = vunpack.c.l.b16 %v295
      %v1032 = vunpack.c.h.b16 %v295
      %v1033 = vunpack.c.l.b16 %v296
      %v1034 = vunpack.c.h.b16 %v296
      %v1035 = vunpack.c.l.b16 %v297
      %v1036 = vunpack.c.h.b16 %v297
      %v1037 = vunpack.c.l.b16 %v298
      %v1038 = vunpack.c.h.b16 %v298
      %v1039 = vunpack.c.l.b16 %v299
      %v1040 = vunpack.c.h.b16 %v299
      %v1041 = vunpack.c.l.b16 %v300
      %v1042 = vunpack.c.h.b16 %v300
      %v1043 = vunpack.c.l.b16 %v301
      %v1044 = vunpack.c.h.b16 %v301
      %v1045 = vunpack.c.l.b16 %v302
      %v1046 = vunpack.c.h.b16 %v302
      %v1047 = vunpack.c.l.b16 %v303
      %v1048 = vunpack.c.h.b16 %v303
      %v1049 = vunpack.c.l.b16 %v304
      %v1050 = vunpack.c.h.b16 %v304
      %v1051 = vunpack.c.l.b16 %v305
      %v1052 = vunpack.c.h.b16 %v305
      %v1053 = vunpack.c.l.b16 %v306
      %v1054 = vunpack.c.h.b16 %v306
      %v1055 = vunpack.c.l.b16 %v307
      %v1056 = vunpack.c.h.b16 %v307
      %v1057 = vunpack.c.l.b16 %v308
      %v1058 = vunpack.c.h.b16 %v308
      %v1059 = vunpack.c.l.b16 %v309
      %v1060 = vunpack.c.h.b16 %v309
      %v1061 = vunpack.c.l.b16 %v310
      %v1062 = vunpack.c.h.b16 %v310
      %v1063 = vunpack.c.l.b16 %v311
      %v1064 = vunpack.c.h.b16 %v311
      %v1065 = vunpack.c.l.b16 %v312
      %v1066 = vunpack.c.h.b16 %v312
      %v1067 = vunpack.c.l.b16 %v313
      %v1068 = vunpack.c.h.b16 %v313
      %v1069 = vunpack.c.l.b16 %v314
      %v1070 = vunpack.c.h.b16 %v314
      %v1071 = vunpack.c.l.b16 %v315
      %v1072 = vunpack.c.h.b16 %v315
      %v1073 = vunpack.c.l.b16 %v316
      %v1074 = vunpack.c.h.b16 %v316
      %v1075 = vunpack.c.l.b16 %v317
      %v1076 = vunpack.c.h.b16 %v317
      %v1077 = vunpack.c.l.b16 %v318
      %v1078 = vunpack.c.h.b16 %v318
      %v1079 = vunpack.c.l.b16 %v319
      %v1080 = vunpack.c.h.b16 %v319
      %v1081 = vunpack.c.l.b16 %v320
      %v1082 = vunpack.c.h.b16 %v320
      %v1083 = vunpack.c.l.b16 %v321
      %v1084 = vunpack.c.h.b16 %v321
      %v1085 = vunpack.c.l.b16 %v322
      %v1086 = vunpack.c.h.b16 %v322
      %v1087 = vunpack.c.l.b16 %v323
      %v1088 = vunpack.c.h.b16 %v323
      %v1089 = vunpack.c.l.b16 %v324
      %v1090 = vunpack.c.h.b16 %v324
      %v1091 = vunpack.c.l.b16 %v325
      %v1092 = vunpack.c.h.b16 %v325
      %v1093 = vunpack.c.l.b16 %v326
      %v1094 = vunpack.c.h.b16 %v326
      %v1095 = vunpack.c.l.b16 %v327
      %v1096 = vunpack.c.h.b16 %v327
      %v1097 = vunpack.c.l.b16 %v328
      %v1098 = vunpack.c.h.b16 %v328
      %v1099 = vunpack.c.l.b16 %v329
      %v1100 = vunpack.c.h.b16 %v329
      %v1101 = vunpack.c.l.b16 %v330
      %v1102 = vunpack.c.h.b16 %v330
      %v1103 = vunpack.c.l.b16 %v331
      %v1104 = vunpack.c.h.b16 %v331
      %v1105 = vunpack.c.l.b16 %v332
      %v1106 = vunpack.c.h.b16 %v332
      %v1107 = vunpack.c.l.b16 %v333
      %v1108 = vunpack.c.h.b16 %v333
      %v1109 = vunpack.c.l.b16 %v334
      %v1110 = vunpack.c.h.b16 %v334
      %v1111 = vunpack.c.l.b16 %v335
      %v1112 = vunpack.c.h.b16 %v335
      %v1113 = vunpack.c.l.b16 %v336
      %v1114 = vunpack.c.h.b16 %v336
      %v1115 = vunpack.c.l.b16 %v337
      %v1116 = vunpack.c.h.b16 %v337
      %v1117 = vunpack.c.l.b16 %v338
      %v1118 = vunpack.c.h.b16 %v338
      %v1119 = vunpack.c.l.b16 %v339
      %v1120 = vunpack.c.h.b16 %v339
      %v1121 = vunpack.c.l.b16 %v340
      %v1122 = vunpack.c.h.b16 %v340
      %v1123 = vunpack.c.l.b16 %v341
      %v1124 = vunpack.c.h.b16 %v341
      %v1125 = vunpack.c.l.b16 %v342
      %v1126 = vunpack.c.h.b16 %v342
      %v1127 = vunpack.c.l.b16 %v343
      %v1128 = vunpack.c.h.b16 %v343
      %v1129 = vunpack.c.l.b16 %v344
      %v1130 = vunpack.c.h.b16 %v344
      %v1131 = vunpack.c.l.b16 %v345
      %v1132 = vunpack.c.h.b16 %v345
      %v1133 = vunpack.c.l.b16 %v346
      %v1134 = vunpack.c.h.b16 %v346
      %v1135 = vunpack.c.l.b16 %v347
      %v1136 = vunpack.c.h.b16 %v347
      %v1137 = vunpack.c.l.b16 %v348
      %v1138 = vunpack.c.h.b16 %v348
      %v1139 = vunpack.c.l.b16 %v349
      %v1140 = vunpack.c.h.b16 %v349
      %v1141 = vunpack.c.l.b16 %v350
      %v1142 = vunpack.c.h.b16 %v350
      %v1143 = vunpack.c.l.b16 %v351
      %v1144 = vunpack.c.h.b16 %v351
      %v1145 = vunpack.c.l.b16 %v352
      %v1146 = vunpack.c.h.b16 %v352
      %v1147 = vunpack.c.l.b16 %v353
      %v1148 = vunpack.c.h.b16 %v353
      %v1149 = vunpack.c.l.b16 %v354
      %v1150 = vunpack.c.h.b16 %v354
      %v1151 = vunpack.c.l.b16 %v355
      %v1152 = vunpack.c.h.b16 %v355
      %v1153 = vunpack.c.l.b16 %v356
      %v1154 = vunpack.c.h.b16 %v356
      %v1155 = vunpack.c.l.b16 %v357
      %v1156 = vunpack.c.h.b16 %v357
      %v1157 = vunpack.c.l.b16 %v358
      %v1158 = vunpack.c.h.b16 %v358
      %v1159 = vunpack.c.l.b16 %v359
      %v1160 = vunpack.c.h.b16 %v359
      %v1161 = vunpack.c.l.b16 %v360
      %v1162 = vunpack.c.h.b16 %v360
      %v1163 = vunpack.c.l.b16 %v361
      %v1164 = vunpack.c.h.b16 %v361
      %v1165 = vunpack.c.l.b16 %v362
      %v1166 = vunpack.c.h.b16 %v362
      %v1167 = vunpack.c.l.b16 %v363
      %v1168 = vunpack.c.h.b16 %v363
      %v1169 = vunpack.c.l.b16 %v364
      %v1170 = vunpack.c.h.b16 %v364
      %v1171 = vunpack.c.l.b16 %v365
      %v1172 = vunpack.c.h.b16 %v365
      %v1173 = vunpack.c.l.b16 %v366
      %v1174 = vunpack.c.h.b16 %v366
      %v1175 = vunpack.c.l.b16 %v367
      %v1176 = vunpack.c.h.b16 %v367
      %v1177 = vunpack.c.l.b16 %v368
      %v1178 = vunpack.c.h.b16 %v368
      %v1179 = vunpack.c.l.b16 %v369
      %v1180 = vunpack.c.h.b16 %v369
      %v1181 = vunpack.c.l.b16 %v370
      %v1182 = vunpack.c.h.b16 %v370
      %v1183 = vunpack.c.l.b16 %v371
      %v1184 = vunpack.c.h.b16 %v371
      %v1185 = vunpack.c.l.b16 %v372
      %v1186 = vunpack.c.h.b16 %v372
      %v1187 = vunpack.c.l.b16 %v373
      %v1188 = vunpack.c.h.b16 %v373
      %v1189 = vunpack.c.l.b16 %v374
      %v1190 = vunpack.c.h.b16 %v374
      %v1191 = vunpack.c.l.b16 %v375
      %v1192 = vunpack.c.h.b16 %v375
      %v1193 = vunpack.c.l.b16 %v376
      %v1194 = vunpack.c.h.b16 %v376
      %v1195 = vunpack.c.l.b16 %v377
      %v1196 = vunpack.c.h.b16 %v377
      %v1197 = vunpack.c.l.b16 %v378
      %v1198 = vunpack.c.h.b16 %v378
      %v1199 = vunpack.c.l.b16 %v379
      %v1200 = vunpack.c.h.b16 %v379
      %v1201 = vunpack.c.l.b16 %v380
      %v1202 = vunpack.c.h.b16 %v380
      %v1203 = vunpack.c.l.b16 %v381
      %v1204 = vunpack.c.h.b16 %v381
      %v1205 = vunpack.c.l.b16 %v382
      %v1206 = vunpack.c.h.b16 %v382
      %v1207 = vunpack.c.l.b16 %v383
      %v1208 = vunpack.c.h.b16 %v383
      %v1209 = vunpack.c.l.b16 %v384
      %v1210 = vunpack.c.h.b16 %v384
      %v1211 = vunpack.c.l.b16 %v385
      %v1212 = vunpack.c.h.b16 %v385
      %v1213 = vunpack.c.l.b16 %v386
      %v1214 = vunpack.c.h.b16 %v386
      %v1215 = vunpack.c.l.b16 %v387
      %v1216 = vunpack.c.h.b16 %v387
      %v1217 = vunpack.c.l.b16 %v388
      %v1218 = vunpack.c.h.b16 %v388
      %v1219 = vunpack.c.l.b16 %v389
      %v1220 = vunpack.c.h.b16 %v389
      %v1221 = vunpack.c.l.b16 %v390
      %v1222 = vunpack.c.h.b16 %v390
      %v1223 = vunpack.c.l.b16 %v391
      %v1224 = vunpack.c.h.b16 %v391
      %v1225 = vunpack.c.l.b16 %v392
      %v1226 = vunpack.c.h.b16 %v392
      %v1227 = vunpack.c.l.b16 %v393
      %v1228 = vunpack.c.h.b16 %v393
      %v1229 = vunpack.c.l.b16 %v394
      %v1230 = vunpack.c.h.b16 %v394
      %v1231 = vunpack.c.l.b16 %v395
      %v1232 = vunpack.c.h.b16 %v395
      %v1233 = vunpack.c.l.b16 %v396
      %v1234 = vunpack.c.h.b16 %v396
      %v1235 = vunpack.c.l.b16 %v397
      %v1236 = vunpack.c.h.b16 %v397
      %v1237 = vunpack.c.l.b16 %v398
      %v1238 = vunpack.c.h.b16 %v398
      %v1239 = vunpack.c.l.b16 %v399
      %v1240 = vunpack.c.h.b16 %v399
      %v1241 = vunpack.c.l.b16 %v400
      %v1242 = vunpack.c.h.b16 %v400
      %v1243 = vunpack.c.l.b16 %v401
      %v1244 = vunpack.c.h.b16 %v401
      %v1245 = vunpack.c.l.b16 %v402
      %v1246 = vunpack.c.h.b16 %v402
      %v1247 = vunpack.c.l.b16 %v403
      %v1248 = vunpack.c.h.b16 %v403
      %v1249 = vunpack.c.l.b16 %v404
      %v1250 = vunpack.c.h.b16 %v404
      %v1251 = vunpack.c.l.b16 %v405
      %v1252 = vunpack.c.h.b16 %v405
      %v1253 = vunpack.c.l.b16 %v406
      %v1254 = vunpack.c.h.b16 %v406
      %v1255 = vunpack.c.l.b16 %v407
      %v1256 = vunpack.c.h.b16 %v407
      %v1257 = vunpack.c.l.b16 %v408
      %v1258 = vunpack.c.h.b16 %v408
      %v1259 = vunpack.c.l.b16 %v409
      %v1260 = vunpack.c.h.b16 %v409
      %v1261 = vunpack.c.l.b16 %v410
      %v1262 = vunpack.c.h.b16 %v410
      %v1263 = vunpack.c.l.b16 %v411
      %v1264 = vunpack.c.h.b16 %v411
      %v1265 = vunpack.c.l.b16 %v412
      %v1266 = vunpack.c.h.b16 %v412
      %v1267 = vunpack.c.l.b16 %v413
      %v1268 = vunpack.c.h.b16 %v413
      %v1269 = vunpack.c.l.b16 %v414
      %v1270 = vunpack.c.h.b16 %v414
      %v1271 = vunpack.c.l.b16 %v415
      %v1272 = vunpack.c.h.b16 %v415
      %v1273 = vunpack.c.l.b16 %v416
      %v1274 = vunpack.c.h.b16 %v416
      %v1275 = vunpack.c.l.b16 %v417
      %v1276 = vunpack.c.h.b16 %v417
      %v1277 = vunpack.c.l.b16 %v418
      %v1278 = vunpack.c.h.b16 %v418
      %v1279 = vunpack.c.l.b16 %v419
      %v1280 = vunpack.c.h.b16 %v419
      %v1281 = vunpack.c.l.b16 %v420
      %v1282 = vunpack.c.h.b16 %v420
      %v1283 = vunpack.c.l.b16 %v421
      %v1284 = vunpack.c.h.b16 %v421
      %v1285 = vunpack.c.l.b16 %v422
      %v1286 = vunpack.c.h.b16 %v422
      %v1287 = vunpack.c.l.b16 %v423
      %v1288 = vunpack.c.h.b16 %v423
      %v1289 = vunpack.c.l.b16 %v424
      %v1290 = vunpack.c.h.b16 %v424
      %v1291 = vunpack.c.l.b16 %v425
      %v1292 = vunpack.c.h.b16 %v425
      %v1293 = vunpack.c.l.b16 %v426
      %v1294 = vunpack.c.h.b16 %v426
      %v1295 = vunpack.c.l.b16 %v427
      %v1296 = vunpack.c.h.b16 %v427
      %v1297 = vunpack.c.l.b16 %v428
      %v1298 = vunpack.c.h.b16 %v428
      %v1299 = vunpack.c.l.b16 %v429
      %v1300 = vunpack.c.h.b16 %v429
      %v1301 = vunpack.c.l.b16 %v430
      %v1302 = vunpack.c.h.b16 %v430
      %v1303 = vunpack.c.l.b16 %v431
      %v1304 = vunpack.c.h.b16 %v431
      %v1305 = vunpack.c.l.b16 %v432
      %v1306 = vunpack.c.h.b16 %v432
      %v1307 = vunpack.c.l.b16 %v433
      %v1308 = vunpack.c.h.b16 %v433
      %v1309 = vunpack.c.l.b16 %v434
      %v1310 = vunpack.c.h.b16 %v434
      %v1311 = vunpack.c.l.b16 %v435
      %v1312 = vunpack.c.h.b16 %v435
      %v1313 = vunpack.c.l.b16 %v436
      %v1314 = vunpack.c.h.b16 %v436
      %v1315 = vunpack.c.l.b16 %v437
      %v1316 = vunpack.c.h.b16 %v437
      %v1317 = vunpack.c.l.b16 %v438
      %v1318 = vunpack.c.h.b16 %v438
      %v1319 = vunpack.c.l.b16 %v439
      %v1320 = vunpack.c.h.b16 %v439
      %v1321 = vunpack.c.l.b16 %v440
      %v1322 = vunpack.c.h.b16 %v440
      %v1323 = vunpack.c.l.b16 %v441
      %v1324 = vunpack.c.h.b16 %v441
      %v1325 = vunpack.c.l.b16 %v442
      %v1326 = vunpack.c.h.b16 %v442
      %v1327 = vunpack.c.l.b16 %v443
      %v1328 = vunpack.c.h.b16 %v443
      %v1329 = vunpack.c.l.b16 %v444
      %v1330 = vunpack.c.h.b16 %v444
      %v1331 = vunpack.c.l.b16 %v445
      %v1332 = vunpack.c.h.b16 %v445
      %v1333 = vunpack.c.l.b16 %v446
      %v1334 = vunpack.c.h.b16 %v446
      %v1335 = vunpack.c.l.b16 %v447
      %v1336 = vunpack.c.h.b16 %v447
      %v1337 = vunpack.c.l.b16 %v448
      %v1338 = vunpack.c.h.b16 %v448
      %v1339 = vunpack.c.l.b16 %v449
      %v1340 = vunpack.c.h.b16 %v449
      %v1341 = vunpack.c.l.b16 %v450
      %v1342 = vunpack.c.h.b16 %v450
      %v1343 = vunpack.c.l.b16 %v451
      %v1344 = vunpack.c.h.b16 %v451
      %v1345 = vunpack.c.l.b16 %v452
      %v1346 = vunpack.c.h.b16 %v452
      %v1347 = vunpack.c.l.b16 %v453
      %v1348 = vunpack.c.h.b16 %v453
      %v1349 = vunpack.c.l.b16 %v454
      %v1350 = vunpack.c.h.b16 %v454
      %v1351 = vunpack.c.l.b16 %v455
      %v1352 = vunpack.c.h.b16 %v455
      %v1353 = vunpack.c.l.b16 %v456
      %v1354 = vunpack.c.h.b16 %v456
      %v1355 = vunpack.c.l.b16 %v457
      %v1356 = vunpack.c.h.b16 %v457
      %v1357 = vunpack.c.l.b16 %v458
      %v1358 = vunpack.c.h.b16 %v458
      %v1359 = vunpack.c.l.b16 %v459
      %v1360 = vunpack.c.h.b16 %v459
      %v1361 = vunpack.c.l.b16 %v460
      %v1362 = vunpack.c.h.b16 %v460
      %v1363 = vunpack.c.l.b16 %v461
      %v1364 = vunpack.c.h.b16 %v461
      %v1365 = vunpack.c.l.b16 %v462
      %v1366 = vunpack.c.h.b16 %v462
      %v1367 = vunpack.c.l.b16 %v463
      %v1368 = vunpack.c.h.b16 %v463
      %v1369 = vunpack.c.l.b16 %v464
      %v1370 = vunpack.c.h.b16 %v464
      %v1371 = vunpack.c.l.b16 %v465
      %v1372 = vunpack.c.h.b16 %v465
      %v1373 = vunpack.c.l.b16 %v466
      %v1374 = vunpack.c.h.b16 %v466
      %v1375 = vunpack.c.l.b16 %v467
      %v1376 = vunpack.c.h.b16 %v467
      %v1377 = vunpack.c.l.b16 %v468
      %v1378 = vunpack.c.h.b16 %v468
      %v1379 = vunpack.c.l.b16 %v469
      %v1380 = vunpack.c.h.b16 %v469
      %v1381 = vunpack.c.l.b16 %v470
      %v1382 = vunpack.c.h.b16 %v470
      %v1383 = vunpack.c.l.b16 %v471
      %v1384 = vunpack.c.h.b16 %v471
      %v1385 = vunpack.c.l.b16 %v472
      %v1386 = vunpack.c.h.b16 %v472
      %v1387 = vunpack.c.l.b16 %v473
      %v1388 = vunpack.c.h.b16 %v473
      %v1389 = vunpack.c.l.b16 %v474
      %v1390 = vunpack.c.h.b16 %v474
      %v1391 = vunpack.c.l.b16 %v475
      %v1392 = vunpack.c.h.b16 %v475
      %v1393 = vunpack.c.l.b16 %v476
      %v1394 = vunpack.c.h.b16 %v476
      %v1395 = vunpack.c.l.b16 %v477
      %v1396 = vunpack.c.h.b16 %v477
      %v1397 = vunpack.c.l.b16 %v478
      %v1398 = vunpack.c.h.b16 %v478
      %v1399 = vunpack.c.l.b16 %v479
      %v1400 = vunpack.c.h.b16 %v479
      %v1401 = vunpack.c.l.b16 %v480
      %v1402 = vunpack.c.h.b16 %v480
      %v1403 = vunpack.c.l.b16 %v481
      %v1404 = vunpack.c.h.b16 %v481
      %v1405 = vunpack.c.l.b16 %v482
      %v1406 = vunpack.c.h.b16 %v482
      %v1407 = vunpack.c.l.b16 %v483
      %v1408 = vunpack.c.h.b16 %v483
      %v1409 = vunpack.c.l.b16 %v484
      %v1410 = vunpack.c.h.b16 %v484
      %v1411 = vunpack.c.l.b16 %v485
      %v1412 = vunpack.c.h.b16 %v485
      %v1413 = vunpack.c.l.b16 %v486
      %v1414 = vunpack.c.h.b16 %v486
      %v1415 = vunpack.c.l.b16 %v487
      %v1416 = vunpack.c.h.b16 %v487
      %v1417 = vunpack.c.l.b16 %v488
      %v1418 = vunpack.c.h.b16 %v488
      %v1419 = vunpack.c.l.b16 %v489
      %v1420 = vunpack.c.h.b16 %v489
      %v1421 = vunpack.c.l.b16 %v490
      %v1422 = vunpack.c.h.b16 %v490
      %v1423 = vunpack.c.l.b16 %v491
      %v1424 = vunpack.c.h.b16 %v491
      %v1425 = vunpack.c.l.b16 %v492
      %v1426 = vunpack.c.h.b16 %v492
      %v1427 = vunpack.c.l.b16 %v493
      %v1428 = vunpack.c.h.b16 %v493
      %v1429 = vunpack.c.l.b16 %v494
      %v1430 = vunpack.c.h.b16 %v494
      %v1431 = vunpack.c.l.b16 %v495
      %v1432 = vunpack.c.h.b16 %v495
      %v1433 = vunpack.c.l.b16 %v496
      %v1434 = vunpack.c.h.b16 %v496
      %v1435 = vunpack.c.l.b16 %v497
      %v1436 = vunpack.c.h.b16 %v497
      %v1437 = vunpack.c.l.b16 %v498
      %v1438 = vunpack.c.h.b16 %v498
      %v1439 = vunpack.c.l.b16 %v499
      %v1440 = vunpack.c.h.b16 %v499
      %v1441 = vunpack.c.l.b16 %v500
      %v1442 = vunpack.c.h.b16 %v500
      %v1443 = vunpack.c.l.b16 %v501
      %v1444 = vunpack.c.h.b16 %v501
      %v1445 = vunpack.c.l.b16 %v502
      %v1446 = vunpack.c.h.b16 %v502
      %v1447 = vunpack.c.l.b16 %v503
      %v1448 = vunpack.c.h.b16 %v503
      %v1449 = vunpack.c.l.b16 %v504
      %v1450 = vunpack.c.h.b16 %v504
      %v1451 = vunpack.c.l.b16 %v505
      %v1452 = vunpack.c.h.b16 %v505
      %v1453 = vunpack.c.l.b16 %v506
      %v1454 = vunpack.c.h.b16 %v506
      %v1455 = vunpack.c.l.b16 %v507
      %v1456 = vunpack.c.h.b16 %v507
      %v1457 = vunpack.c.l.b16 %v508
      %v1458 = vunpack.c.h.b16 %v508
      %v1459 = vunpack.c.l.b16 %v509
      %v1460 = vunpack.c.h.b16 %v509
      %v1461 = vunpack.c.l.b16 %v510
      %v1462 = vunpack.c.h.b16 %v510
      %v1463 = vunpack.c.l.b16 %v511
      %v1464 = vunpack.c.h.b16 %v511
      %v1465 = vunpack.c.l.b16 %v512
      %v1466 = vunpack.c.h.b16 %v512
      %v1467 = vunpack.c.l.b16 %v513
      %v1468 = vunpack.c.h.b16 %v513
      %v1469 = vunpack.c.l.b16 %v514
      %v1470 = vunpack.c.h.b16 %v514
      %v1471 = vunpack.c.l.b16 %v515
      %v1472 = vunpack.c.h.b16 %v515
      %v1473 = vunpack.c.l.b16 %v516
      %v1474 = vunpack.c.h.b16 %v516
      %v1475 = vunpack.c.l.b16 %v517
      %v1476 = vunpack.c.h.b16 %v517
      %v1477 = vunpack.c.l.b16 %v518
      %v1478 = vunpack.c.h.b16 %v518
      %v1479 = vunpack.c.l.b16 %v519
      %v1480 = vunpack.c.h.b16 %v519
      %v1481 = vunpack.c.l.b16 %v520
      %v1482 = vunpack.c.h.b16 %v520
      %v1483 = vunpack.c.l.b16 %v521
      %v1484 = vunpack.c.h.b16 %v521
      %v1485 = vunpack.c.l.b16 %v522
      %v1486 = vunpack.c.h.b16 %v522
      %v1487 = vunpack.c.l.b16 %v523
      %v1488 = vunpack.c.h.b16 %v523
      %v1489 = vunpack.c.l.b16 %v524
      %v1490 = vunpack.c.h.b16 %v524
      %v1491 = vunpack.c.l.b16 %v525
      %v1492 = vunpack.c.h.b16 %v525
      %v1493 = vunpack.c.l.b16 %v526
      %v1494 = vunpack.c.h.b16 %v526
      %v1495 = vunpack.c.l.b16 %v527
      %v1496 = vunpack.c.h.b16 %v527
      %v1497 = vunpack.c.l.b16 %v528
      %v1498 = vunpack.c.h.b16 %v528
      %v1499 = vunpack.c.l.b16 %v529
      %v1500 = vunpack.c.h.b16 %v529
      %v1501 = vunpack.c.l.b16 %v530
      %v1502 = vunpack.c.h.b16 %v530
      %v1503 = vunpack.c.l.b16 %v531
      %v1504 = vunpack.c.h.b16 %v531
      %v1505 = vunpack.c.l.b16 %v532
      %v1506 = vunpack.c.h.b16 %v532
      %v1507 = vunpack.c.l.b16 %v533
      %v1508 = vunpack.c.h.b16 %v533
      %v1509 = vunpack.c.l.b16 %v534
      %v1510 = vunpack.c.h.b16 %v534
      %v1511 = vunpack.c.l.b16 %v535
      %v1512 = vunpack.c.h.b16 %v535
      %v1513 = vunpack.c.l.b16 %v536
      %v1514 = vunpack.c.h.b16 %v536
      %v1515 = vunpack.c.l.b16 %v537
      %v1516 = vunpack.c.h.b16 %v537
      %v1517 = vunpack.c.l.b16 %v538
      %v1518 = vunpack.c.h.b16 %v538
      %v1519 = vunpack.c.l.b16 %v539
      %v1520 = vunpack.c.h.b16 %v539
      %v1521 = vunpack.c.l.b16 %v540
      %v1522 = vunpack.c.h.b16 %v540
      %v1523 = vunpack.c.l.b16 %v541
      %v1524 = vunpack.c.h.b16 %v541
      %v1525 = vunpack.c.l.b16 %v542
      %v1526 = vunpack.c.h.b16 %v542
      %v1527 = vunpack.c.l.b16 %v543
      %v1528 = vunpack.c.h.b16 %v543
      %v1529 = vunpack.c.l.b16 %v544
      %v1530 = vunpack.c.h.b16 %v544
      %v1531 = vunpack.c.l.b16 %v545
      %v1532 = vunpack.c.h.b16 %v545
      %v1533 = vunpack.c.l.b16 %v546
      %v1534 = vunpack.c.h.b16 %v546
      %v1535 = vunpack.c.l.b16 %v547
      %v1536 = vunpack.c.h.b16 %v547
      %v1537 = vunpack.c.l.b16 %v548
      %v1538 = vunpack.c.h.b16 %v548
      %v1539 = vunpack.c.l.b16 %v549
      %v1540 = vunpack.c.h.b16 %v549
      %v1541 = vunpack.c.l.b16 %v550
      %v1542 = vunpack.c.h.b16 %v550
      %v1543 = vunpack.c.l.b16 %v551
      %v1544 = vunpack.c.h.b16 %v551
      %v1545 = vunpack.c.l.b16 %v552
      %v1546 = vunpack.c.h.b16 %v552
      %v1547 = vunpack.c.l.b16 %v553
      %v1548 = vunpack.c.h.b16 %v553
      %v1549 = vunpack.c.l.b16 %v554
      %v1550 = vunpack.c.h.b16 %v554
      %v1551 = vunpack.c.l.b16 %v555
      %v1552 = vunpack.c.h.b16 %v555
      %v1553 = vunpack.c.l.b16 %v556
      %v1554 = vunpack.c.h.b16 %v556
      %v1555 = vunpack.c.l.b16 %v557
      %v1556 = vunpack.c.h.b16 %v557
      %v1557 = vunpack.c.l.b16 %v558
      %v1558 = vunpack.c.h.b16 %v558
      %v1559 = vunpack.c.l.b16 %v559
      %v1560 = vunpack.c.h.b16 %v559
      %v1561 = vunpack.c.l.b16 %v560
      %v1562 = vunpack.c.h.b16 %v560
      %v1563 = vunpack.c.l.b16 %v561
      %v1564 = vunpack.c.h.b16 %v561
      %v1565 = vunpack.c.l.b16 %v562
      %v1566 = vunpack.c.h.b16 %v562
      %v1567 = vunpack.c.l.b16 %v563
      %v1568 = vunpack.c.h.b16 %v563
      %v1569 = vpack.c.b16 %v937, %v929
      %v1570 = vpack.c.b16 %v938, %v930
      %v1571 = vpack.c.b16 %v939, %v931
      %v1572 = vpack.c.b16 %v940, %v932
      %v1573 = vpack.c.b16 %v941, %v933
      %v1574 = vpack.c.b16 %v942, %v934
      %v1575 = vpack.c.b16 %v943, %v935
      %v1576 = vpack.c.b16 %v944, %v936
      %v1577 = vpack.c.b16 %v953, %v945
      %v1578 = vpack.c.b16 %v954, %v946
      %v1579 = vpack.c.b16 %v955, %v947
      %v1580 = vpack.c.b16 %v956, %v948
      %v1581 = vpack.c.b16 %v957, %v949
      %v1582 = vpack.c.b16 %v958, %v950
      %v1583 = vpack.c.b16 %v959, %v951
      %v1584 = vpack.c.b16 %v960, %v952
      %v1585 = vpack.c.b16 %v969, %v961
      %v1586 = vpack.c.b16 %v970, %v962
      %v1587 = vpack.c.b16 %v971, %v963
      %v1588 = vpack.c.b16 %v972, %v964
      %v1589 = vpack.c.b16 %v973, %v965
      %v1590 = vpack.c.b16 %v974, %v966
      %v1591 = vpack.c.b16 %v975, %v967
      %v1592 = vpack.c.b16 %v976, %v968
      %v1593 = vpack.c.b16 %v985, %v977
      %v1594 = vpack.c.b16 %v986, %v978
      %v1595 = vpack.c.b16 %v987, %v979
      %v1596 = vpack.c.b16 %v988, %v980
      %v1597 = vpack.c.b16 %v989, %v981
      %v1598 = vpack.c.b16 %v990, %v982
      %v1599 = vpack.c.b16 %v991, %v983
      %v1600 = vpack.c.b16 %v992, %v984
      %v1601 = vpack.c.b16 %v1001, %v993
      %v1602 = vpack.c.b16 %v1002, %v994
      %v1603 = vpack.c.b16 %v1003, %v995
      %v1604 = vpack.c.b16 %v1004, %v996
      %v1605 = vpack.c.b16 %v1005, %v997
      %v1606 = vpack.c.b16 %v1006, %v998
      %v1607 = vpack.c.b16 %v1007, %v999
      %v1608 = vpack.c.b16 %v1008, %v1000
      %v1609 = vpack.c.b16 %v1017, %v1009
      %v1610 = vpack.c.b16 %v1018, %v1010
      %v1611 = vpack.c.b16 %v1019, %v1011
      %v1612 = vpack.c.b16 %v1020, %v1012
      %v1613 = vpack.c.b16 %v1021, %v1013
      %v1614 = vpack.c.b16 %v1022, %v1014
      %v1615 = vpack.c.b16 %v1023, %v1015
      %v1616 = vpack.c.b16 %v1024, %v1016
      %v1617 = vpack.c.b16 %v1033, %v1025
      %v1618 = vpack.c.b16 %v1034, %v1026
      %v1619 = vpack.c.b16 %v1035, %v1027
      %v1620 = vpack.c.b16 %v1036, %v1028
      %v1621 = vpack.c.b16 %v1037, %v1029
      %v1622 = vpack.c.b16 %v1038, %v1030
      %v1623 = vpack.c.b16 %v1039, %v1031
      %v1624 = vpack.c.b16 %v1040, %v1032
      %v1625 = vpack.c.b16 %v1049, %v1041
      %v1626 = vpack.c.b16 %v1050, %v1042
      %v1627 = vpack.c.b16 %v1051, %v1043
      %v1628 = vpack.c.b16 %v1052, %v1044
      %v1629 = vpack.c.b16 %v1053, %v1045
      %v1630 = vpack.c.b16 %v1054, %v1046
      %v1631 = vpack.c.b16 %v1055, %v1047
      %v1632 = vpack.c.b16 %v1056, %v1048
      %v1633 = vpack.c.b16 %v1065, %v1057
      %v1634 = vpack.c.b16 %v1066, %v1058
      %v1635 = vpack.c.b16 %v1067, %v1059
      %v1636 = vpack.c.b16 %v1068, %v1060
      %v1637 = vpack.c.b16 %v1069, %v1061
      %v1638 = vpack.c.b16 %v1070, %v1062
      %v1639 = vpack.c.b16 %v1071, %v1063
      %v1640 = vpack.c.b16 %v1072, %v1064
      %v1641 = vpack.c.b16 %v1081, %v1073
      %v1642 = vpack.c.b16 %v1082, %v1074
      %v1643 = vpack.c.b16 %v1083, %v1075
      %v1644 = vpack.c.b16 %v1084, %v1076
      %v1645 = vpack.c.b16 %v1085, %v1077
      %v1646 = vpack.c.b16 %v1086, %v1078
      %v1647 = vpack.c.b16 %v1087, %v1079
      %v1648 = vpack.c.b16 %v1088, %v1080
      %v1649 = vpack.c.b16 %v1097, %v1089
      %v1650 = vpack.c.b16 %v1098, %v1090
      %v1651 = vpack.c.b16 %v1099, %v1091
      %v1652 = vpack.c.b16 %v1100, %v1092
      %v1653 = vpack.c.b16 %v1101, %v1093
      %v1654 = vpack.c.b16 %v1102, %v1094
      %v1655 = vpack.c.b16 %v1103, %v1095
      %v1656 = vpack.c.b16 %v1104, %v1096
      %v1657 = vpack.c.b16 %v1113, %v1105
      %v1658 = vpack.c.b16 %v1114, %v1106
      %v1659 = vpack.c.b16 %v1115, %v1107
      %v1660 = vpack.c.b16 %v1116, %v1108
      %v1661 = vpack.c.b16 %v1117, %v1109
      %v1662 = vpack.c.b16 %v1118, %v1110
      %v1663 = vpack.c.b16 %v1119, %v1111
      %v1664 = vpack.c.b16 %v1120, %v1112
      %v1665 = vpack.c.b16 %v1129, %v1121
      %v1666 = vpack.c.b16 %v1130, %v1122
      %v1667 = vpack.c.b16 %v1131, %v1123
      %v1668 = vpack.c.b16 %v1132, %v1124
      %v1669 = vpack.c.b16 %v1133, %v1125
      %v1670 = vpack.c.b16 %v1134, %v1126
      %v1671 = vpack.c.b16 %v1135, %v1127
      %v1672 = vpack.c.b16 %v1136, %v1128
      %v1673 = vpack.c.b16 %v1145, %v1137
      %v1674 = vpack.c.b16 %v1146, %v1138
      %v1675 = vpack.c.b16 %v1147, %v1139
      %v1676 = vpack.c.b16 %v1148, %v1140
      %v1677 = vpack.c.b16 %v1149, %v1141
      %v1678 = vpack.c.b16 %v1150, %v1142
      %v1679 = vpack.c.b16 %v1151, %v1143
      %v1680 = vpack.c.b16 %v1152, %v1144
      %v1681 = vpack.c.b16 %v1161, %v1153
      %v1682 = vpack.c.b16 %v1162, %v1154
      %v1683 = vpack.c.b16 %v1163, %v1155
      %v1684 = vpack.c.b16 %v1164, %v1156
      %v1685 = vpack.c.b16 %v1165, %v1157
      %v1686 = vpack.c.b16 %v1166, %v1158
      %v1687 = vpack.c.b16 %v1167, %v1159
      %v1688 = vpack.c.b16 %v1168, %v1160
      %v1689 = vpack.c.b16 %v1177, %v1169
      %v1690 = vpack.c.b16 %v1178, %v1170
      %v1691 = vpack.c.b16 %v1179, %v1171
      %v1692 = vpack.c.b16 %v1180, %v1172
      %v1693 = vpack.c.b16 %v1181, %v1173
      %v1694 = vpack.c.b16 %v1182, %v1174
      %v1695 = vpack.c.b16 %v1183, %v1175
      %v1696 = vpack.c.b16 %v1184, %v1176
      %v1697 = vpack.c.b16 %v1193, %v1185
      %v1698 = vpack.c.b16 %v1194, %v1186
      %v1699 = vpack.c.b16 %v1195, %v1187
      %v1700 = vpack.c.b16 %v1196, %v1188
      %v1701 = vpack.c.b16 %v1197, %v1189
      %v1702 = vpack.c.b16 %v1198, %v1190
      %v1703 = vpack.c.b16 %v1199, %v1191
      %v1704 = vpack.c.b16 %v1200, %v1192
      %v1705 = vpack.c.b16 %v1209, %v1201
      %v1706 = vpack.c.b16 %v1210, %v1202
      %v1707 = vpack.c.b16 %v1211, %v1203
      %v1708 = vpack.c.b16 %v1212, %v1204
      %v1709 = vpack.c.b16 %v1213, %v1205
      %v1710 = vpack.c.b16 %v1214, %v1206
      %v1711 = vpack.c.b16 %v1215, %v1207
      %v1712 = vpack.c.b16 %v1216, %v1208
      %v1713 = vpack.c.b16 %v1225, %v1217
      %v1714 = vpack.c.b16 %v1226, %v1218
      %v1715 = vpack.c.b16 %v1227, %v1219
      %v1716 = vpack.c.b16 %v1228, %v1220
      %v1717 = vpack.c.b16 %v1229, %v1221
      %v1718 = vpack.c.b16 %v1230, %v1222
      %v1719 = vpack.c.b16 %v1231, %v1223
      %v1720 = vpack.c.b16 %v1232, %v1224
      %v1721 = vpack.c.b16 %v1241, %v1233
      %v1722 = vpack.c.b16 %v1242, %v1234
      %v1723 = vpack.c.b16 %v1243, %v1235
      %v1724 = vpack.c.b16 %v1244, %v1236
      %v1725 = vpack.c.b16 %v1245, %v1237
      %v1726 = vpack.c.b16 %v1246, %v1238
      %v1727 = vpack.c.b16 %v1247, %v1239
      %v1728 = vpack.c.b16 %v1248, %v1240
      %v1729 = vpack.c.b16 %v1257, %v1249
      %v1730 = vpack.c.b16 %v1258, %v1250
      %v1731 = vpack.c.b16 %v1259, %v1251
      %v1732 = vpack.c.b16 %v1260, %v1252
      %v1733 = vpack.c.b16 %v1261, %v1253
      %v1734 = vpack.c.b16 %v1262, %v1254
      %v1735 = vpack.c.b16 %v1263, %v1255
      %v1736 = vpack.c.b16 %v1264, %v1256
      %v1737 = vpack.c.b16 %v1273, %v1265
      %v1738 = vpack.c.b16 %v1274, %v1266
      %v1739 = vpack.c.b16 %v1275, %v1267
      %v1740 = vpack.c.b16 %v1276, %v1268
      %v1741 = vpack.c.b16 %v1277, %v1269
      %v1742 = vpack.c.b16 %v1278, %v1270
      %v1743 = vpack.c.b16 %v1279, %v1271
      %v1744 = vpack.c.b16 %v1280, %v1272
      %v1745 = vpack.c.b16 %v1289, %v1281
      %v1746 = vpack.c.b16 %v1290, %v1282
      %v1747 = vpack.c.b16 %v1291, %v1283
      %v1748 = vpack.c.b16 %v1292, %v1284
      %v1749 = vpack.c.b16 %v1293, %v1285
      %v1750 = vpack.c.b16 %v1294, %v1286
      %v1751 = vpack.c.b16 %v1295, %v1287
      %v1752 = vpack.c.b16 %v1296, %v1288
      %v1753 = vpack.c.b16 %v1305, %v1297
      %v1754 = vpack.c.b16 %v1306, %v1298
      %v1755 = vpack.c.b16 %v1307, %v1299
      %v1756 = vpack.c.b16 %v1308, %v1300
      %v1757 = vpack.c.b16 %v1309, %v1301
      %v1758 = vpack.c.b16 %v1310, %v1302
      %v1759 = vpack.c.b16 %v1311, %v1303
      %v1760 = vpack.c.b16 %v1312, %v1304
      %v1761 = vpack.c.b16 %v1321, %v1313
      %v1762 = vpack.c.b16 %v1322, %v1314
      %v1763 = vpack.c.b16 %v1323, %v1315
      %v1764 = vpack.c.b16 %v1324, %v1316
      %v1765 = vpack.c.b16 %v1325, %v1317
      %v1766 = vpack.c.b16 %v1326, %v1318
      %v1767 = vpack.c.b16 %v1327, %v1319
      %v1768 = vpack.c.b16 %v1328, %v1320
      %v1769 = vpack.c.b16 %v1337, %v1329
      %v1770 = vpack.c.b16 %v1338, %v1330
      %v1771 = vpack.c.b16 %v1339, %v1331
      %v1772 = vpack.c.b16 %v1340, %v1332
      %v1773 = vpack.c.b16 %v1341, %v1333
      %v1774 = vpack.c.b16 %v1342, %v1334
      %v1775 = vpack.c.b16 %v1343, %v1335
      %v1776 = vpack.c.b16 %v1344, %v1336
      %v1777 = vpack.c.b16 %v1353, %v1345
      %v1778 = vpack.c.b16 %v1354, %v1346
      %v1779 = vpack.c.b16 %v1355, %v1347
      %v1780 = vpack.c.b16 %v1356, %v1348
      %v1781 = vpack.c.b16 %v1357, %v1349
      %v1782 = vpack.c.b16 %v1358, %v1350
      %v1783 = vpack.c.b16 %v1359, %v1351
      %v1784 = vpack.c.b16 %v1360, %v1352
      %v1785 = vpack.c.b16 %v1369, %v1361
      %v1786 = vpack.c.b16 %v1370, %v1362
      %v1787 = vpack.c.b16 %v1371, %v1363
      %v1788 = vpack.c.b16 %v1372, %v1364
      %v1789 = vpack.c.b16 %v1373, %v1365
      %v1790 = vpack.c.b16 %v1374, %v1366
      %v1791 = vpack.c.b16 %v1375, %v1367
      %v1792 = vpack.c.b16 %v1376, %v1368
      %v1793 = vpack.c.b16 %v1385, %v1377
      %v1794 = vpack.c.b16 %v1386, %v1378
      %v1795 = vpack.c.b16 %v1387, %v1379
      %v1796 = vpack.c.b16 %v1388, %v1380
      %v1797 = vpack.c.b16 %v1389, %v1381
      %v1798 = vpack.c.b16 %v1390, %v1382
      %v1799 = vpack.c.b16 %v1391, %v1383
      %v1800 = vpack.c.b16 %v1392, %v1384
      %v1801 = vpack.c.b16 %v1401, %v1393
      %v1802 = vpack.c.b16 %v1402, %v1394
      %v1803 = vpack.c.b16 %v1403, %v1395
      %v1804 = vpack.c.b16 %v1404, %v1396
      %v1805 = vpack.c.b16 %v1405, %v1397
      %v1806 = vpack.c.b16 %v1406, %v1398
      %v1807 = vpack.c.b16 %v1407, %v1399
      %v1808 = vpack.c.b16 %v1408, %v1400
      %v1809 = vpack.c.b16 %v1417, %v1409
      %v1810 = vpack.c.b16 %v1418, %v1410
      %v1811 = vpack.c.b16 %v1419, %v1411
      %v1812 = vpack.c.b16 %v1420, %v1412
      %v1813 = vpack.c.b16 %v1421, %v1413
      %v1814 = vpack.c.b16 %v1422, %v1414
      %v1815 = vpack.c.b16 %v1423, %v1415
      %v1816 = vpack.c.b16 %v1424, %v1416
      %v1817 = vpack.c.b16 %v1433, %v1425
      %v1818 = vpack.c.b16 %v1434, %v1426
      %v1819 = vpack.c.b16 %v1435, %v1427
      %v1820 = vpack.c.b16 %v1436, %v1428
      %v1821 = vpack.c.b16 %v1437, %v1429
      %v1822 = vpack.c.b16 %v1438, %v1430
      %v1823 = vpack.c.b16 %v1439, %v1431
      %v1824 = vpack.c.b16 %v1440, %v1432
      %v1825 = vpack.c.b16 %v1449, %v1441
      %v1826 = vpack.c.b16 %v1450, %v1442
      %v1827 = vpack.c.b16 %v1451, %v1443
      %v1828 = vpack.c.b16 %v1452, %v1444
      %v1829 = vpack.c.b16 %v1453, %v1445
      %v1830 = vpack.c.b16 %v1454, %v1446
      %v1831 = vpack.c.b16 %v1455, %v1447
      %v1832 = vpack.c.b16 %v1456, %v1448
      %v1833 = vpack.c.b16 %v1465, %v1457
      %v1834 = vpack.c.b16 %v1466, %v1458
      %v1835 = vpack.c.b16 %v1467, %v1459
      %v1836 = vpack.c.b16 %v1468, %v1460
      %v1837 = vpack.c.b16 %v1469, %v1461
      %v1838 = vpack.c.b16 %v1470, %v1462
      %v1839 = vpack.c.b16 %v1471, %v1463
      %v1840 = vpack.c.b16 %v1472, %v1464
      %v1841 = vpack.c.b16 %v1481, %v1473
      %v1842 = vpack.c.b16 %v1482, %v1474
      %v1843 = vpack.c.b16 %v1483, %v1475
      %v1844 = vpack.c.b16 %v1484, %v1476
      %v1845 = vpack.c.b16 %v1485, %v1477
      %v1846 = vpack.c.b16 %v1486, %v1478
      %v1847 = vpack.c.b16 %v1487, %v1479
      %v1848 = vpack.c.b16 %v1488, %v1480
      %v1849 = vpack.c.b16 %v1497, %v1489
      %v1850 = vpack.c.b16 %v1498, %v1490
      %v1851 = vpack.c.b16 %v1499, %v1491
      %v1852 = vpack.c.b16 %v1500, %v1492
      %v1853 = vpack.c.b16 %v1501, %v1493
      %v1854 = vpack.c.b16 %v1502, %v1494
      %v1855 = vpack.c.b16 %v1503, %v1495
      %v1856 = vpack.c.b16 %v1504, %v1496
      %v1857 = vpack.c.b16 %v1513, %v1505
      %v1858 = vpack.c.b16 %v1514, %v1506
      %v1859 = vpack.c.b16 %v1515, %v1507
      %v1860 = vpack.c.b16 %v1516, %v1508
      %v1861 = vpack.c.b16 %v1517, %v1509
      %v1862 = vpack.c.b16 %v1518, %v1510
      %v1863 = vpack.c.b16 %v1519, %v1511
      %v1864 = vpack.c.b16 %v1520, %v1512
      %v1865 = vpack.c.b16 %v1529, %v1521
      %v1866 = vpack.c.b16 %v1530, %v1522
      %v1867 = vpack.c.b16 %v1531, %v1523
      %v1868 = vpack.c.b16 %v1532, %v1524
      %v1869 = vpack.c.b16 %v1533, %v1525
      %v1870 = vpack.c.b16 %v1534, %v1526
      %v1871 = vpack.c.b16 %v1535, %v1527
      %v1872 = vpack.c.b16 %v1536, %v1528
      %v1873 = vpack.c.b16 %v1545, %v1537
      %v1874 = vpack.c.b16 %v1546, %v1538
      %v1875 = vpack.c.b16 %v1547, %v1539
      %v1876 = vpack.c.b16 %v1548, %v1540
      %v1877 = vpack.c.b16 %v1549, %v1541
      %v1878 = vpack.c.b16 %v1550, %v1542
      %v1879 = vpack.c.b16 %v1551, %v1543
      %v1880 = vpack.c.b16 %v1552, %v1544
      %v1881 = vpack.c.b16 %v1561, %v1553
      %v1882 = vpack.c.b16 %v1562, %v1554
      %v1883 = vpack.c.b16 %v1563, %v1555
      %v1884 = vpack.c.b16 %v1564, %v1556
      %v1885 = vpack.c.b16 %v1565, %v1557
      %v1886 = vpack.c.b16 %v1566, %v1558
      %v1887 = vpack.c.b16 %v1567, %v1559
      %v1888 = vpack.c.b16 %v1568, %v1560
      %2209 = vmatprep.subr.bf16.mxu0 %v1626
      %2210 = vmatpush1.bf16.msra.mxu0 %v1625
      %2211 = vmatprep.subr.bf16.mxu0 %v1618
      %2212 = vmatpush1.bf16.msra.mxu0 %v1617
      %2213 = vmatprep.subr.bf16.mxu0 %v1610
      %2214 = vmatpush1.bf16.msra.mxu0 %v1609
      %2215 = vmatprep.subr.bf16.mxu0 %v1602
      %2216 = vmatpush1.bf16.msra.mxu0 %v1601
      %2217 = vmatprep.subr.bf16.mxu0 %v1594
      %2218 = vmatpush1.bf16.msra.mxu0 %v1593
      %2219 = vmatprep.subr.bf16.mxu0 %v1586
      %2220 = vmatpush1.bf16.msra.mxu0 %v1585
      %2221 = vmatprep.subr.bf16.mxu0 %v1578
      %2222 = vmatpush1.bf16.msra.mxu0 %v1577
      %2223 = vmatprep.subr.bf16.mxu0 %v1570
      %2224 = vmatpush1.bf16.msra.mxu0 %v1569
      %2225 = vmatprep.subr.bf16.mxu0 %v1690
      %2226 = vmatpush2.bf16.msra.mxu0 %v1689
      %2227 = vmatprep.subr.bf16.mxu0 %v1682
      %2228 = vmatpush2.bf16.msra.mxu0 %v1681
      %2229 = vmatprep.subr.bf16.mxu0 %v1674
      %2230 = vmatpush2.bf16.msra.mxu0 %v1673
      %2231 = vmatprep.subr.bf16.mxu0 %v1666
      %2232 = vmatpush2.bf16.msra.mxu0 %v1665
      %2233 = vmatprep.subr.bf16.mxu0 %v1658
      %2234 = vmatpush2.bf16.msra.mxu0 %v1657
      %2235 = vmatprep.subr.bf16.mxu0 %v1650
      %2236 = vmatpush2.bf16.msra.mxu0 %v1649
      %2237 = vmatprep.subr.bf16.mxu0 %v1642
      %2238 = vmatpush2.bf16.msra.mxu0 %v1641
      %2239 = vmatprep.subr.bf16.mxu0 %v1634
      %2240 = vmatpush2.bf16.msra.mxu0 %v1633
      %2241 = vmatprep.mubr.bf16.mxu0 %v601
      %2242 = vmatmul.mubr.bf16.gmra.mxu0 %v587
      %v2243 = vpop.f32.mrf.mxu0
      %v2244 = vadd.f32 0.0, %v2243
      %v2245 = vpop.f32.mrf.mxu0
      %v2246 = vadd.f32 0.0, %v2245
      %v2247 = vpop.f32.mrf.mxu0
      %v2248 = vpop.f32.mrf.mxu0
      %2249 = vdwg.mxu0
      %2250 = vmatprep.subr.bf16.mxu0 %v1754
      %2251 = vmatpush1.bf16.msra.mxu0 %v1753
      %2252 = vmatprep.subr.bf16.mxu0 %v1746
      %2253 = vmatpush1.bf16.msra.mxu0 %v1745
      %2254 = vmatprep.subr.bf16.mxu0 %v1738
      %2255 = vmatpush1.bf16.msra.mxu0 %v1737
      %2256 = vmatprep.subr.bf16.mxu0 %v1730
      %2257 = vmatpush1.bf16.msra.mxu0 %v1729
      %2258 = vmatprep.subr.bf16.mxu0 %v1722
      %2259 = vmatpush1.bf16.msra.mxu0 %v1721
      %2260 = vmatprep.subr.bf16.mxu0 %v1714
      %2261 = vmatpush1.bf16.msra.mxu0 %v1713
      %2262 = vmatprep.subr.bf16.mxu0 %v1706
      %2263 = vmatpush1.bf16.msra.mxu0 %v1705
      %2264 = vmatprep.subr.bf16.mxu0 %v1698
      %2265 = vmatpush1.bf16.msra.mxu0 %v1697
      %2266 = vmatprep.subr.bf16.mxu0 %v1818
      %2267 = vmatpush2.bf16.msra.mxu0 %v1817
      %2268 = vmatprep.subr.bf16.mxu0 %v1810
      %2269 = vmatpush2.bf16.msra.mxu0 %v1809
      %2270 = vmatprep.subr.bf16.mxu0 %v1802
      %2271 = vmatpush2.bf16.msra.mxu0 %v1801
      %2272 = vmatprep.subr.bf16.mxu0 %v1794
      %2273 = vmatpush2.bf16.msra.mxu0 %v1793
      %2274 = vmatprep.subr.bf16.mxu0 %v1786
      %2275 = vmatpush2.bf16.msra.mxu0 %v1785
      %2276 = vmatprep.subr.bf16.mxu0 %v1778
      %2277 = vmatpush2.bf16.msra.mxu0 %v1777
      %2278 = vmatprep.subr.bf16.mxu0 %v1770
      %2279 = vmatpush2.bf16.msra.mxu0 %v1769
      %2280 = vmatprep.subr.bf16.mxu0 %v1762
      %2281 = vmatpush2.bf16.msra.mxu0 %v1761
      %2282 = vmatprep.mubr.bf16.mxu0 %v603
      %2283 = vmatmul.mubr.bf16.gmra.mxu0 %v602
      %v2284 = vpop.f32.mrf.mxu0
      %v2285 = vadd.f32 %v2244, %v2284
      %v2286 = vpop.f32.mrf.mxu0
      %v2287 = vadd.f32 %v2246, %v2286
      %v2288 = vpop.f32.mrf.mxu0
      %v2289 = vpop.f32.mrf.mxu0
      %2290 = vdwg.mxu0
      %2291 = vmatprep.subr.bf16.mxu0 %v1882
      %2292 = vmatpush1.bf16.msra.mxu0 %v1881
      %2293 = vmatprep.subr.bf16.mxu0 %v1874
      %2294 = vmatpush1.bf16.msra.mxu0 %v1873
      %2295 = vmatprep.subr.bf16.mxu0 %v1866
      %2296 = vmatpush1.bf16.msra.mxu0 %v1865
      %2297 = vmatprep.subr.bf16.mxu0 %v1858
      %2298 = vmatpush1.bf16.msra.mxu0 %v1857
      %2299 = vmatprep.subr.bf16.mxu0 %v1850
      %2300 = vmatpush1.bf16.msra.mxu0 %v1849
      %2301 = vmatprep.subr.bf16.mxu0 %v1842
      %2302 = vmatpush1.bf16.msra.mxu0 %v1841
      %2303 = vmatprep.subr.bf16.mxu0 %v1834
      %2304 = vmatpush1.bf16.msra.mxu0 %v1833
      %2305 = vmatprep.subr.bf16.mxu0 %v1826
      %2306 = vmatpush1.bf16.msra.mxu0 %v1825
      %2307 = vmatprep.subr.bf16.mxu0 0
      %2308 = vmatpush2.bf16.msra.mxu0 0
      %2309 = vmatprep.subr.bf16.mxu0 0
      %2310 = vmatpush2.bf16.msra.mxu0 0
      %2311 = vmatprep.subr.bf16.mxu0 0
      %2312 = vmatpush2.bf16.msra.mxu0 0
      %2313 = vmatprep.subr.bf16.mxu0 0
      %2314 = vmatpush2.bf16.msra.mxu0 0
      %2315 = vmatprep.subr.bf16.mxu0 0
      %2316 = vmatpush2.bf16.msra.mxu0 0
      %2317 = vmatprep.subr.bf16.mxu0 0
      %2318 = vmatpush2.bf16.msra.mxu0 0
      %2319 = vmatprep.subr.bf16.mxu0 0
      %2320 = vmatpush2.bf16.msra.mxu0 0
      %2321 = vmatprep.subr.bf16.mxu0 0
      %2322 = vmatpush2.bf16.msra.mxu0 0
      %2323 = vmatprep.mubr.bf16.mxu0 0
      %2324 = vmatmul.mubr.bf16.gmra.mxu0 %v594
      %v2325 = vpop.f32.mrf.mxu0
      %v2326 = vadd.f32 %v2285, %v2325
      %v2327 = vpop.f32.mrf.mxu0
      %v2328 = vadd.f32 %v2287, %v2327
      %v2329 = vpop.f32.mrf.mxu0
      %v2330 = vpop.f32.mrf.mxu0
      %2331 = vdwg.mxu0
      %2332 = vmatprep.subr.bf16.mxu0 %v1628
      %2333 = vmatpush1.bf16.msra.mxu0 %v1627
      %2334 = vmatprep.subr.bf16.mxu0 %v1620
      %2335 = vmatpush1.bf16.msra.mxu0 %v1619
      %2336 = vmatprep.subr.bf16.mxu0 %v1612
      %2337 = vmatpush1.bf16.msra.mxu0 %v1611
      %2338 = vmatprep.subr.bf16.mxu0 %v1604
      %2339 = vmatpush1.bf16.msra.mxu0 %v1603
      %2340 = vmatprep.subr.bf16.mxu0 %v1596
      %2341 = vmatpush1.bf16.msra.mxu0 %v1595
      %2342 = vmatprep.subr.bf16.mxu0 %v1588
      %2343 = vmatpush1.bf16.msra.mxu0 %v1587
      %2344 = vmatprep.subr.bf16.mxu0 %v1580
      %2345 = vmatpush1.bf16.msra.mxu0 %v1579
      %2346 = vmatprep.subr.bf16.mxu0 %v1572
      %2347 = vmatpush1.bf16.msra.mxu0 %v1571
      %2348 = vmatprep.subr.bf16.mxu0 %v1692
      %2349 = vmatpush2.bf16.msra.mxu0 %v1691
      %2350 = vmatprep.subr.bf16.mxu0 %v1684
      %2351 = vmatpush2.bf16.msra.mxu0 %v1683
      %2352 = vmatprep.subr.bf16.mxu0 %v1676
      %2353 = vmatpush2.bf16.msra.mxu0 %v1675
      %2354 = vmatprep.subr.bf16.mxu0 %v1668
      %2355 = vmatpush2.bf16.msra.mxu0 %v1667
      %2356 = vmatprep.subr.bf16.mxu0 %v1660
      %2357 = vmatpush2.bf16.msra.mxu0 %v1659
      %2358 = vmatprep.subr.bf16.mxu0 %v1652
      %2359 = vmatpush2.bf16.msra.mxu0 %v1651
      %2360 = vmatprep.subr.bf16.mxu0 %v1644
      %2361 = vmatpush2.bf16.msra.mxu0 %v1643
      %2362 = vmatprep.subr.bf16.mxu0 %v1636
      %2363 = vmatpush2.bf16.msra.mxu0 %v1635
      %2364 = vmatprep.mubr.bf16.mxu0 %v601
      %2365 = vmatmul.mubr.bf16.gmra.mxu0 %v587
      %v2366 = vpop.f32.mrf.mxu0
      %v2367 = vadd.f32 0.0, %v2366
      %v2368 = vpop.f32.mrf.mxu0
      %v2369 = vadd.f32 0.0, %v2368
      %v2370 = vpop.f32.mrf.mxu0
      %v2371 = vpop.f32.mrf.mxu0
      %2372 = vdwg.mxu0
      %2373 = vmatprep.subr.bf16.mxu0 %v1756
      %2374 = vmatpush1.bf16.msra.mxu0 %v1755
      %2375 = vmatprep.subr.bf16.mxu0 %v1748
      %2376 = vmatpush1.bf16.msra.mxu0 %v1747
      %2377 = vmatprep.subr.bf16.mxu0 %v1740
      %2378 = vmatpush1.bf16.msra.mxu0 %v1739
      %2379 = vmatprep.subr.bf16.mxu0 %v1732
      %2380 = vmatpush1.bf16.msra.mxu0 %v1731
      %2381 = vmatprep.subr.bf16.mxu0 %v1724
      %2382 = vmatpush1.bf16.msra.mxu0 %v1723
      %2383 = vmatprep.subr.bf16.mxu0 %v1716
      %2384 = vmatpush1.bf16.msra.mxu0 %v1715
      %2385 = vmatprep.subr.bf16.mxu0 %v1708
      %2386 = vmatpush1.bf16.msra.mxu0 %v1707
      %2387 = vmatprep.subr.bf16.mxu0 %v1700
      %2388 = vmatpush1.bf16.msra.mxu0 %v1699
      %2389 = vmatprep.subr.bf16.mxu0 %v1820
      %2390 = vmatpush2.bf16.msra.mxu0 %v1819
      %2391 = vmatprep.subr.bf16.mxu0 %v1812
      %2392 = vmatpush2.bf16.msra.mxu0 %v1811
      %2393 = vmatprep.subr.bf16.mxu0 %v1804
      %2394 = vmatpush2.bf16.msra.mxu0 %v1803
      %2395 = vmatprep.subr.bf16.mxu0 %v1796
      %2396 = vmatpush2.bf16.msra.mxu0 %v1795
      %2397 = vmatprep.subr.bf16.mxu0 %v1788
      %2398 = vmatpush2.bf16.msra.mxu0 %v1787
      %2399 = vmatprep.subr.bf16.mxu0 %v1780
      %2400 = vmatpush2.bf16.msra.mxu0 %v1779
      %2401 = vmatprep.subr.bf16.mxu0 %v1772
      %2402 = vmatpush2.bf16.msra.mxu0 %v1771
      %2403 = vmatprep.subr.bf16.mxu0 %v1764
      %2404 = vmatpush2.bf16.msra.mxu0 %v1763
      %2405 = vmatprep.mubr.bf16.mxu0 %v603
      %2406 = vmatmul.mubr.bf16.gmra.mxu0 %v602
      %v2407 = vpop.f32.mrf.mxu0
      %v2408 = vadd.f32 %v2367, %v2407
      %v2409 = vpop.f32.mrf.mxu0
      %v2410 = vadd.f32 %v2369, %v2409
      %v2411 = vpop.f32.mrf.mxu0
      %v2412 = vpop.f32.mrf.mxu0
      %2413 = vdwg.mxu0
      %2414 = vmatprep.subr.bf16.mxu0 %v1884
      %2415 = vmatpush1.bf16.msra.mxu0 %v1883
      %2416 = vmatprep.subr.bf16.mxu0 %v1876
      %2417 = vmatpush1.bf16.msra.mxu0 %v1875
      %2418 = vmatprep.subr.bf16.mxu0 %v1868
      %2419 = vmatpush1.bf16.msra.mxu0 %v1867
      %2420 = vmatprep.subr.bf16.mxu0 %v1860
      %2421 = vmatpush1.bf16.msra.mxu0 %v1859
      %2422 = vmatprep.subr.bf16.mxu0 %v1852
      %2423 = vmatpush1.bf16.msra.mxu0 %v1851
      %2424 = vmatprep.subr.bf16.mxu0 %v1844
      %2425 = vmatpush1.bf16.msra.mxu0 %v1843
      %2426 = vmatprep.subr.bf16.mxu0 %v1836
      %2427 = vmatpush1.bf16.msra.mxu0 %v1835
      %2428 = vmatprep.subr.bf16.mxu0 %v1828
      %2429 = vmatpush1.bf16.msra.mxu0 %v1827
      %2430 = vmatprep.subr.bf16.mxu0 0
      %2431 = vmatpush2.bf16.msra.mxu0 0
      %2432 = vmatprep.subr.bf16.mxu0 0
      %2433 = vmatpush2.bf16.msra.mxu0 0
      %2434 = vmatprep.subr.bf16.mxu0 0
      %2435 = vmatpush2.bf16.msra.mxu0 0
      %2436 = vmatprep.subr.bf16.mxu0 0
      %2437 = vmatpush2.bf16.msra.mxu0 0
      %2438 = vmatprep.subr.bf16.mxu0 0
      %2439 = vmatpush2.bf16.msra.mxu0 0
      %2440 = vmatprep.subr.bf16.mxu0 0
      %2441 = vmatpush2.bf16.msra.mxu0 0
      %2442 = vmatprep.subr.bf16.mxu0 0
      %2443 = vmatpush2.bf16.msra.mxu0 0
      %2444 = vmatprep.subr.bf16.mxu0 0
      %2445 = vmatpush2.bf16.msra.mxu0 0
      %2446 = vmatprep.mubr.bf16.mxu0 0
      %2447 = vmatmul.mubr.bf16.gmra.mxu0 %v594
      %v2448 = vpop.f32.mrf.mxu0
      %v2449 = vadd.f32 %v2408, %v2448
      %v2450 = vpop.f32.mrf.mxu0
      %v2451 = vadd.f32 %v2410, %v2450
      %v2452 = vpop.f32.mrf.mxu0
      %v2453 = vpop.f32.mrf.mxu0
      %2454 = vdwg.mxu0
      %2455 = vmatprep.subr.bf16.mxu0 %v1630
      %2456 = vmatpush1.bf16.msra.mxu0 %v1629
      %2457 = vmatprep.subr.bf16.mxu0 %v1622
      %2458 = vmatpush1.bf16.msra.mxu0 %v1621
      %2459 = vmatprep.subr.bf16.mxu0 %v1614
      %2460 = vmatpush1.bf16.msra.mxu0 %v1613
      %2461 = vmatprep.subr.bf16.mxu0 %v1606
      %2462 = vmatpush1.bf16.msra.mxu0 %v1605
      %2463 = vmatprep.subr.bf16.mxu0 %v1598
      %2464 = vmatpush1.bf16.msra.mxu0 %v1597
      %2465 = vmatprep.subr.bf16.mxu0 %v1590
      %2466 = vmatpush1.bf16.msra.mxu0 %v1589
      %2467 = vmatprep.subr.bf16.mxu0 %v1582
      %2468 = vmatpush1.bf16.msra.mxu0 %v1581
      %2469 = vmatprep.subr.bf16.mxu0 %v1574
      %2470 = vmatpush1.bf16.msra.mxu0 %v1573
      %2471 = vmatprep.subr.bf16.mxu0 %v1694
      %2472 = vmatpush2.bf16.msra.mxu0 %v1693
      %2473 = vmatprep.subr.bf16.mxu0 %v1686
      %2474 = vmatpush2.bf16.msra.mxu0 %v1685
      %2475 = vmatprep.subr.bf16.mxu0 %v1678
      %2476 = vmatpush2.bf16.msra.mxu0 %v1677
      %2477 = vmatprep.subr.bf16.mxu0 %v1670
      %2478 = vmatpush2.bf16.msra.mxu0 %v1669
      %2479 = vmatprep.subr.bf16.mxu0 %v1662
      %2480 = vmatpush2.bf16.msra.mxu0 %v1661
      %2481 = vmatprep.subr.bf16.mxu0 %v1654
      %2482 = vmatpush2.bf16.msra.mxu0 %v1653
      %2483 = vmatprep.subr.bf16.mxu0 %v1646
      %2484 = vmatpush2.bf16.msra.mxu0 %v1645
      %2485 = vmatprep.subr.bf16.mxu0 %v1638
      %2486 = vmatpush2.bf16.msra.mxu0 %v1637
      %2487 = vmatprep.mubr.bf16.mxu0 %v601
      %2488 = vmatmul.mubr.bf16.gmra.mxu0 %v587
      %v2489 = vpop.f32.mrf.mxu0
      %v2490 = vadd.f32 0.0, %v2489
      %v2491 = vpop.f32.mrf.mxu0
      %v2492 = vadd.f32 0.0, %v2491
      %v2493 = vpop.f32.mrf.mxu0
      %v2494 = vpop.f32.mrf.mxu0
      %2495 = vdwg.mxu0
      %2496 = vmatprep.subr.bf16.mxu0 %v1758
      %2497 = vmatpush1.bf16.msra.mxu0 %v1757
      %2498 = vmatprep.subr.bf16.mxu0 %v1750
      %2499 = vmatpush1.bf16.msra.mxu0 %v1749
      %2500 = vmatprep.subr.bf16.mxu0 %v1742
      %2501 = vmatpush1.bf16.msra.mxu0 %v1741
      %2502 = vmatprep.subr.bf16.mxu0 %v1734
      %2503 = vmatpush1.bf16.msra.mxu0 %v1733
      %2504 = vmatprep.subr.bf16.mxu0 %v1726
      %2505 = vmatpush1.bf16.msra.mxu0 %v1725
      %2506 = vmatprep.subr.bf16.mxu0 %v1718
      %2507 = vmatpush1.bf16.msra.mxu0 %v1717
      %2508 = vmatprep.subr.bf16.mxu0 %v1710
      %2509 = vmatpush1.bf16.msra.mxu0 %v1709
      %2510 = vmatprep.subr.bf16.mxu0 %v1702
      %2511 = vmatpush1.bf16.msra.mxu0 %v1701
      %2512 = vmatprep.subr.bf16.mxu0 %v1822
      %2513 = vmatpush2.bf16.msra.mxu0 %v1821
      %2514 = vmatprep.subr.bf16.mxu0 %v1814
      %2515 = vmatpush2.bf16.msra.mxu0 %v1813
      %2516 = vmatprep.subr.bf16.mxu0 %v1806
      %2517 = vmatpush2.bf16.msra.mxu0 %v1805
      %2518 = vmatprep.subr.bf16.mxu0 %v1798
      %2519 = vmatpush2.bf16.msra.mxu0 %v1797
      %2520 = vmatprep.subr.bf16.mxu0 %v1790
      %2521 = vmatpush2.bf16.msra.mxu0 %v1789
      %2522 = vmatprep.subr.bf16.mxu0 %v1782
      %2523 = vmatpush2.bf16.msra.mxu0 %v1781
      %2524 = vmatprep.subr.bf16.mxu0 %v1774
      %2525 = vmatpush2.bf16.msra.mxu0 %v1773
      %2526 = vmatprep.subr.bf16.mxu0 %v1766
      %2527 = vmatpush2.bf16.msra.mxu0 %v1765
      %2528 = vmatprep.mubr.bf16.mxu0 %v603
      %2529 = vmatmul.mubr.bf16.gmra.mxu0 %v602
      %v2530 = vpop.f32.mrf.mxu0
      %v2531 = vadd.f32 %v2490, %v2530
      %v2532 = vpop.f32.mrf.mxu0
      %v2533 = vadd.f32 %v2492, %v2532
      %v2534 = vpop.f32.mrf.mxu0
      %v2535 = vpop.f32.mrf.mxu0
      %2536 = vdwg.mxu0
      %2537 = vmatprep.subr.bf16.mxu0 %v1886
      %2538 = vmatpush1.bf16.msra.mxu0 %v1885
      %2539 = vmatprep.subr.bf16.mxu0 %v1878
      %2540 = vmatpush1.bf16.msra.mxu0 %v1877
      %2541 = vmatprep.subr.bf16.mxu0 %v1870
      %2542 = vmatpush1.bf16.msra.mxu0 %v1869
      %2543 = vmatprep.subr.bf16.mxu0 %v1862
      %2544 = vmatpush1.bf16.msra.mxu0 %v1861
      %2545 = vmatprep.subr.bf16.mxu0 %v1854
      %2546 = vmatpush1.bf16.msra.mxu0 %v1853
      %2547 = vmatprep.subr.bf16.mxu0 %v1846
      %2548 = vmatpush1.bf16.msra.mxu0 %v1845
      %2549 = vmatprep.subr.bf16.mxu0 %v1838
      %2550 = vmatpush1.bf16.msra.mxu0 %v1837
      %2551 = vmatprep.subr.bf16.mxu0 %v1830
      %2552 = vmatpush1.bf16.msra.mxu0 %v1829
      %2553 = vmatprep.subr.bf16.mxu0 0
      %2554 = vmatpush2.bf16.msra.mxu0 0
      %2555 = vmatprep.subr.bf16.mxu0 0
      %2556 = vmatpush2.bf16.msra.mxu0 0
      %2557 = vmatprep.subr.bf16.mxu0 0
      %2558 = vmatpush2.bf16.msra.mxu0 0
      %2559 = vmatprep.subr.bf16.mxu0 0
      %2560 = vmatpush2.bf16.msra.mxu0 0
      %2561 = vmatprep.subr.bf16.mxu0 0
      %2562 = vmatpush2.bf16.msra.mxu0 0
      %2563 = vmatprep.subr.bf16.mxu0 0
      %2564 = vmatpush2.bf16.msra.mxu0 0
      %2565 = vmatprep.subr.bf16.mxu0 0
      %2566 = vmatpush2.bf16.msra.mxu0 0
      %2567 = vmatprep.subr.bf16.mxu0 0
      %2568 = vmatpush2.bf16.msra.mxu0 0
      %2569 = vmatprep.mubr.bf16.mxu0 0
      %2570 = vmatmul.mubr.bf16.gmra.mxu0 %v594
      %v2571 = vpop.f32.mrf.mxu0
      %v2572 = vadd.f32 %v2531, %v2571
      %v2573 = vpop.f32.mrf.mxu0
      %v2574 = vadd.f32 %v2533, %v2573
      %v2575 = vpop.f32.mrf.mxu0
      %v2576 = vpop.f32.mrf.mxu0
      %2577 = vdwg.mxu0
      %2578 = vmatprep.subr.bf16.mxu0 %v1632
      %2579 = vmatpush1.bf16.msra.mxu0 %v1631
      %2580 = vmatprep.subr.bf16.mxu0 %v1624
      %2581 = vmatpush1.bf16.msra.mxu0 %v1623
      %2582 = vmatprep.subr.bf16.mxu0 %v1616
      %2583 = vmatpush1.bf16.msra.mxu0 %v1615
      %2584 = vmatprep.subr.bf16.mxu0 %v1608
      %2585 = vmatpush1.bf16.msra.mxu0 %v1607
      %2586 = vmatprep.subr.bf16.mxu0 %v1600
      %2587 = vmatpush1.bf16.msra.mxu0 %v1599
      %2588 = vmatprep.subr.bf16.mxu0 %v1592
      %2589 = vmatpush1.bf16.msra.mxu0 %v1591
      %2590 = vmatprep.subr.bf16.mxu0 %v1584
      %2591 = vmatpush1.bf16.msra.mxu0 %v1583
      %2592 = vmatprep.subr.bf16.mxu0 %v1576
      %2593 = vmatpush1.bf16.msra.mxu0 %v1575
      %2594 = vmatprep.subr.bf16.mxu0 %v1696
      %2595 = vmatpush2.bf16.msra.mxu0 %v1695
      %2596 = vmatprep.subr.bf16.mxu0 %v1688
      %2597 = vmatpush2.bf16.msra.mxu0 %v1687
      %2598 = vmatprep.subr.bf16.mxu0 %v1680
      %2599 = vmatpush2.bf16.msra.mxu0 %v1679
      %2600 = vmatprep.subr.bf16.mxu0 %v1672
      %2601 = vmatpush2.bf16.msra.mxu0 %v1671
      %2602 = vmatprep.subr.bf16.mxu0 %v1664
      %2603 = vmatpush2.bf16.msra.mxu0 %v1663
      %2604 = vmatprep.subr.bf16.mxu0 %v1656
      %2605 = vmatpush2.bf16.msra.mxu0 %v1655
      %2606 = vmatprep.subr.bf16.mxu0 %v1648
      %2607 = vmatpush2.bf16.msra.mxu0 %v1647
      %2608 = vmatprep.subr.bf16.mxu0 %v1640
      %2609 = vmatpush2.bf16.msra.mxu0 %v1639
      %2610 = vmatprep.mubr.bf16.mxu0 %v601
      %2611 = vmatmul.mubr.bf16.gmra.mxu0 %v587
      %v2612 = vpop.f32.mrf.mxu0
      %v2613 = vadd.f32 0.0, %v2612
      %v2614 = vpop.f32.mrf.mxu0
      %v2615 = vadd.f32 0.0, %v2614
      %v2616 = vpop.f32.mrf.mxu0
      %v2617 = vpop.f32.mrf.mxu0
      %2618 = vdwg.mxu0
      %2619 = vmatprep.subr.bf16.mxu0 %v1760
      %2620 = vmatpush1.bf16.msra.mxu0 %v1759
      %2621 = vmatprep.subr.bf16.mxu0 %v1752
      %2622 = vmatpush1.bf16.msra.mxu0 %v1751
      %2623 = vmatprep.subr.bf16.mxu0 %v1744
      %2624 = vmatpush1.bf16.msra.mxu0 %v1743
      %2625 = vmatprep.subr.bf16.mxu0 %v1736
      %2626 = vmatpush1.bf16.msra.mxu0 %v1735
      %2627 = vmatprep.subr.bf16.mxu0 %v1728
      %2628 = vmatpush1.bf16.msra.mxu0 %v1727
      %2629 = vmatprep.subr.bf16.mxu0 %v1720
      %2630 = vmatpush1.bf16.msra.mxu0 %v1719
      %2631 = vmatprep.subr.bf16.mxu0 %v1712
      %2632 = vmatpush1.bf16.msra.mxu0 %v1711
      %2633 = vmatprep.subr.bf16.mxu0 %v1704
      %2634 = vmatpush1.bf16.msra.mxu0 %v1703
      %2635 = vmatprep.subr.bf16.mxu0 %v1824
      %2636 = vmatpush2.bf16.msra.mxu0 %v1823
      %2637 = vmatprep.subr.bf16.mxu0 %v1816
      %2638 = vmatpush2.bf16.msra.mxu0 %v1815
      %2639 = vmatprep.subr.bf16.mxu0 %v1808
      %2640 = vmatpush2.bf16.msra.mxu0 %v1807
      %2641 = vmatprep.subr.bf16.mxu0 %v1800
      %2642 = vmatpush2.bf16.msra.mxu0 %v1799
      %2643 = vmatprep.subr.bf16.mxu0 %v1792
      %2644 = vmatpush2.bf16.msra.mxu0 %v1791
      %2645 = vmatprep.subr.bf16.mxu0 %v1784
      %2646 = vmatpush2.bf16.msra.mxu0 %v1783
      %2647 = vmatprep.subr.bf16.mxu0 %v1776
      %2648 = vmatpush2.bf16.msra.mxu0 %v1775
      %2649 = vmatprep.subr.bf16.mxu0 %v1768
      %2650 = vmatpush2.bf16.msra.mxu0 %v1767
      %2651 = vmatprep.mubr.bf16.mxu0 %v603
      %2652 = vmatmul.mubr.bf16.gmra.mxu0 %v602
      %v2653 = vpop.f32.mrf.mxu0
      %v2654 = vadd.f32 %v2613, %v2653
      %v2655 = vpop.f32.mrf.mxu0
      %v2656 = vadd.f32 %v2615, %v2655
      %v2657 = vpop.f32.mrf.mxu0
      %v2658 = vpop.f32.mrf.mxu0
      %2659 = vdwg.mxu0
      %2660 = vmatprep.subr.bf16.mxu0 %v1888
      %2661 = vmatpush1.bf16.msra.mxu0 %v1887
      %2662 = vmatprep.subr.bf16.mxu0 %v1880
      %2663 = vmatpush1.bf16.msra.mxu0 %v1879
      %2664 = vmatprep.subr.bf16.mxu0 %v1872
      %2665 = vmatpush1.bf16.msra.mxu0 %v1871
      %2666 = vmatprep.subr.bf16.mxu0 %v1864
      %2667 = vmatpush1.bf16.msra.mxu0 %v1863
      %2668 = vmatprep.subr.bf16.mxu0 %v1856
      %2669 = vmatpush1.bf16.msra.mxu0 %v1855
      %2670 = vmatprep.subr.bf16.mxu0 %v1848
      %2671 = vmatpush1.bf16.msra.mxu0 %v1847
      %2672 = vmatprep.subr.bf16.mxu0 %v1840
      %2673 = vmatpush1.bf16.msra.mxu0 %v1839
      %2674 = vmatprep.subr.bf16.mxu0 %v1832
      %2675 = vmatpush1.bf16.msra.mxu0 %v1831
      %2676 = vmatprep.subr.bf16.mxu0 0
      %2677 = vmatpush2.bf16.msra.mxu0 0
      %2678 = vmatprep.subr.bf16.mxu0 0
      %2679 = vmatpush2.bf16.msra.mxu0 0
      %2680 = vmatprep.subr.bf16.mxu0 0
      %2681 = vmatpush2.bf16.msra.mxu0 0
      %2682 = vmatprep.subr.bf16.mxu0 0
      %2683 = vmatpush2.bf16.msra.mxu0 0
      %2684 = vmatprep.subr.bf16.mxu0 0
      %2685 = vmatpush2.bf16.msra.mxu0 0
      %2686 = vmatprep.subr.bf16.mxu0 0
      %2687 = vmatpush2.bf16.msra.mxu0 0
      %2688 = vmatprep.subr.bf16.mxu0 0
      %2689 = vmatpush2.bf16.msra.mxu0 0
      %2690 = vmatprep.subr.bf16.mxu0 0
      %2691 = vmatpush2.bf16.msra.mxu0 0
      %2692 = vmatprep.mubr.bf16.mxu0 0
      %2693 = vmatmul.mubr.bf16.gmra.mxu0 %v594
      %v2694 = vpop.f32.mrf.mxu0
      %v2695 = vadd.f32 %v2654, %v2694
      %v2696 = vpop.f32.mrf.mxu0
      %v2697 = vadd.f32 %v2656, %v2696
      %v2698 = vpop.f32.mrf.mxu0
      %v2699 = vpop.f32.mrf.mxu0
      %2700 = vdwg.mxu0
      %v2709 = vcombine.low %v2326, %v2328
      %v2710 = vcombine.low %v2449, %v2451
      %v2712 = vunpack.c.l.s4 1983009808
      %v2713 = vunpack.c.0.s8 %v2712
      %v2714 = vlaneseq
      %v2715 = vshrl.u32 %v2714, 7
      %v2716 = vsub.s32 %v2713, %v2715
      %v2717 = vrot.slane %v2709, %v2716
      %v2719 = vunpack.c.l.s4 1983009808
      %v2720 = vunpack.c.0.s8 %v2719
      %v2721 = vlaneseq
      %v2722 = vshrl.u32 %v2721, 7
      %v2723 = vsub.s32 %v2720, %v2722
      %v2724 = vrot.slane %v2710, %v2723
      %v2725 = vcombine.low %v2717, %v2724
      %v2726 = vcombine.low %v2572, %v2574
      %v2727 = vcombine.low %v2695, %v2697
      %v2729 = vunpack.c.l.s4 1983009808
      %v2730 = vunpack.c.0.s8 %v2729
      %v2731 = vlaneseq
      %v2732 = vshrl.u32 %v2731, 7
      %v2733 = vsub.s32 %v2730, %v2732
      %v2734 = vrot.slane %v2726, %v2733
      %v2736 = vunpack.c.l.s4 1983009808
      %v2737 = vunpack.c.0.s8 %v2736
      %v2738 = vlaneseq
      %v2739 = vshrl.u32 %v2738, 7
      %v2740 = vsub.s32 %v2737, %v2739
      %v2741 = vrot.slane %v2727, %v2740
      %v2742 = vcombine.low %v2734, %v2741
      %v2745 = vadd.f32 %v241, %v2725
      %v2746 = vadd.f32 %v242, %v2742
      %2747 = vst [vmem:[#allocation2] sm:$0xff] %v2745
      %2748 = vst [vmem:[#allocation2 + $0x8] sm:$0xff] %v2746
      %p2749 = scmp.eq.s32.totalorder %s16, 4
      // Predicated region
      $region45: #{dueling_forward.7} parent=39 // pred_check
        %p2750 = pneg %p2749
      $region46: #{dueling_forward.7} parent=39 // pred_check_branch
        %2752 = sbr.rel (%p2750) target = $region48
      $region47: #{dueling_forward.7} parent=39 // pred_region
        %v2753 = vld [vmem:[#allocation2] sm:$0xff]
        %v2754 = vld [vmem:[#allocation2 + $0x8] sm:$0xff]
        %v2755 = vld [vmem:[%s2] sm:$0xff]
        %v2757 = vlaneseq
        %v2758 = vshrl.u32 %v2757, 7
        %v2759 = vsub.s32 0, %v2758
        %v2760 = vrot.slane %v2755, %v2759
        %v2761 = vlaneseq
        %v2762 = vshrl.u32 %v2761, 7
        %v2763 = vsub.s32 1, %v2762
        %v2764 = vrot.slane %v2755, %v2763
        %v2765 = vlaneseq
        %v2766 = vshrl.u32 %v2765, 7
        %v2767 = vsub.s32 2, %v2766
        %v2768 = vrot.slane %v2755, %v2767
        %v2769 = vlaneseq
        %v2770 = vshrl.u32 %v2769, 7
        %v2771 = vsub.s32 3, %v2770
        %v2772 = vrot.slane %v2755, %v2771
        %v2773 = vlaneseq
        %v2774 = vshrl.u32 %v2773, 7
        %v2775 = vsub.s32 4, %v2774
        %v2776 = vrot.slane %v2755, %v2775
        %v2777 = vlaneseq
        %v2778 = vshrl.u32 %v2777, 7
        %v2779 = vsub.s32 5, %v2778
        %v2780 = vrot.slane %v2755, %v2779
        %v2781 = vlaneseq
        %v2782 = vshrl.u32 %v2781, 7
        %v2783 = vsub.s32 6, %v2782
        %v2784 = vrot.slane %v2755, %v2783
        %v2785 = vlaneseq
        %v2786 = vshrl.u32 %v2785, 7
        %v2787 = vsub.s32 7, %v2786
        %v2788 = vrot.slane %v2755, %v2787
        %v2789 = vcombine.low %v2760, %v2764
        %v2790 = vcombine.low %v2768, %v2772
        %v2792 = vunpack.c.l.s4 1983009808
        %v2793 = vunpack.c.0.s8 %v2792
        %v2794 = vlaneseq
        %v2795 = vshrl.u32 %v2794, 7
        %v2796 = vsub.s32 %v2793, %v2795
        %v2797 = vrot.slane %v2789, %v2796
        %v2799 = vunpack.c.l.s4 1983009808
        %v2800 = vunpack.c.0.s8 %v2799
        %v2801 = vlaneseq
        %v2802 = vshrl.u32 %v2801, 7
        %v2803 = vsub.s32 %v2800, %v2802
        %v2804 = vrot.slane %v2790, %v2803
        %v2805 = vcombine.low %v2797, %v2804
        %v2806 = vcombine.low %v2776, %v2780
        %v2807 = vcombine.low %v2784, %v2788
        %v2809 = vunpack.c.l.s4 1983009808
        %v2810 = vunpack.c.0.s8 %v2809
        %v2811 = vlaneseq
        %v2812 = vshrl.u32 %v2811, 7
        %v2813 = vsub.s32 %v2810, %v2812
        %v2814 = vrot.slane %v2806, %v2813
        %v2816 = vunpack.c.l.s4 1983009808
        %v2817 = vunpack.c.0.s8 %v2816
        %v2818 = vlaneseq
        %v2819 = vshrl.u32 %v2818, 7
        %v2820 = vsub.s32 %v2817, %v2819
        %v2821 = vrot.slane %v2807, %v2820
        %v2822 = vcombine.low %v2814, %v2821
        %v2825 = vadd.f32 %v2753, %v2805
        %v2826 = vadd.f32 %v2754, %v2822
        %vm2827 = vcmp.gt.f32.partialorder %v2825, 0.0
        %vm2828 = vcmp.gt.f32.partialorder %v2826, 0.0
        %v2829 = vmul.f32 %v2825, 0.01
        %v2830 = vmul.f32 %v2826, 0.01
        %v2831 = vsel %vm2827, %v2825, %v2829
        %v2832 = vsel %vm2828, %v2826, %v2830
        %v2833 = vld [vmem:[%s3] sm:$0xff]
        %v2834 = vld [vmem:[%s3 + $0x8] sm:$0xff]
        %v2835 = vld [vmem:[%s3 + $0x10] sm:$0xff]
        %v2836 = vld [vmem:[%s3 + $0x18] sm:$0xff]
        %v2837 = vld [vmem:[%s3 + $0x20] sm:$0xff]
        %v2838 = vld [vmem:[%s3 + $0x28] sm:$0xff]
        %v2839 = vld [vmem:[%s3 + $0x30] sm:$0xff]
        %v2840 = vld [vmem:[%s3 + $0x38] sm:$0xff]
        %v2841 = vld [vmem:[%s3 + $0x40] sm:$0xff]
        %v2842 = vld [vmem:[%s3 + $0x48] sm:$0xff]
        %v2843 = vld [vmem:[%s3 + $0x50] sm:$0xff]
        %v2844 = vld [vmem:[%s3 + $0x58] sm:$0xff]
        %v2845 = vld [vmem:[%s3 + $0x60] sm:$0xff]
        %v2846 = vld [vmem:[%s3 + $0x68] sm:$0xff]
        %v2847 = vld [vmem:[%s3 + $0x70] sm:$0xff]
        %v2848 = vld [vmem:[%s3 + $0x78] sm:$0xff]
        %v2849 = vld [vmem:[%s3 + $0x80] sm:$0xff]
        %v2850 = vld [vmem:[%s3 + $0x88] sm:$0xff]
        %v2851 = vld [vmem:[%s3 + $0x90] sm:$0xff]
        %v2852 = vld [vmem:[%s3 + $0x98] sm:$0xff]
        %v2853 = vld [vmem:[%s3 + $0xa0] sm:$0xff]
        %v2854 = vld [vmem:[%s3 + $0xa8] sm:$0xff]
        %v2855 = vld [vmem:[%s3 + $0xb0] sm:$0xff]
        %v2856 = vld [vmem:[%s3 + $0xb8] sm:$0xff]
        %v2857 = vld [vmem:[%s3 + $0xc0] sm:$0xff]
        %v2858 = vld [vmem:[%s3 + $0xc8] sm:$0xff]
        %v2859 = vld [vmem:[%s3 + $0xd0] sm:$0xff]
        %v2860 = vld [vmem:[%s3 + $0xd8] sm:$0xff]
        %v2861 = vld [vmem:[%s3 + $0xe0] sm:$0xff]
        %v2862 = vld [vmem:[%s3 + $0xe8] sm:$0xff]
        %v2863 = vld [vmem:[%s3 + $0xf0] sm:$0xff]
        %v2864 = vld [vmem:[%s3 + $0xf8] sm:$0xff]
        %v2865 = vld [vmem:[%s3 + $0x100] sm:$0xff]
        %v2866 = vld [vmem:[%s3 + $0x108] sm:$0xff]
        %v2867 = vld [vmem:[%s3 + $0x110] sm:$0xff]
        %v2868 = vld [vmem:[%s3 + $0x118] sm:$0xff]
        %v2869 = vld [vmem:[%s3 + $0x120] sm:$0xff]
        %v2870 = vld [vmem:[%s3 + $0x128] sm:$0xff]
        %v2871 = vld [vmem:[%s3 + $0x130] sm:$0xff]
        %v2872 = vld [vmem:[%s3 + $0x138] sm:$0xff]
        %v2873 = vld [vmem:[%s3 + $0x140] sm:$0xff]
        %v2874 = vld [vmem:[%s3 + $0x148] sm:$0xff]
        %v2875 = vld [vmem:[%s3 + $0x150] sm:$0xff]
        %v2876 = vld [vmem:[%s3 + $0x158] sm:$0xff]
        %v2877 = vld [vmem:[%s3 + $0x160] sm:$0xff]
        %v2878 = vld [vmem:[%s3 + $0x168] sm:$0xff]
        %v2879 = vld [vmem:[%s3 + $0x170] sm:$0xff]
        %v2880 = vld [vmem:[%s3 + $0x178] sm:$0xff]
        %v2881 = vld [vmem:[%s3 + $0x180] sm:$0xff]
        %v2882 = vld [vmem:[%s3 + $0x188] sm:$0xff]
        %v2883 = vld [vmem:[%s3 + $0x190] sm:$0xff]
        %v2884 = vld [vmem:[%s3 + $0x198] sm:$0xff]
        %v2885 = vld [vmem:[%s3 + $0x1a0] sm:$0xff]
        %v2886 = vld [vmem:[%s3 + $0x1a8] sm:$0xff]
        %v2887 = vld [vmem:[%s3 + $0x1b0] sm:$0xff]
        %v2888 = vld [vmem:[%s3 + $0x1b8] sm:$0xff]
        %v2889 = vld [vmem:[%s3 + $0x1c0] sm:$0xff]
        %v2890 = vld [vmem:[%s3 + $0x1c8] sm:$0xff]
        %v2891 = vld [vmem:[%s3 + $0x1d0] sm:$0xff]
        %v2892 = vld [vmem:[%s3 + $0x1d8] sm:$0xff]
        %v2893 = vld [vmem:[%s3 + $0x1e0] sm:$0xff]
        %v2894 = vld [vmem:[%s3 + $0x1e8] sm:$0xff]
        %v2895 = vld [vmem:[%s3 + $0x1f0] sm:$0xff]
        %v2896 = vld [vmem:[%s3 + $0x1f8] sm:$0xff]
        %v2897 = vld [vmem:[%s3 + $0x200] sm:$0xff]
        %v2898 = vld [vmem:[%s3 + $0x208] sm:$0xff]
        %v2899 = vld [vmem:[%s3 + $0x210] sm:$0xff]
        %v2900 = vld [vmem:[%s3 + $0x218] sm:$0xff]
        %v2901 = vld [vmem:[%s3 + $0x220] sm:$0xff]
        %v2902 = vld [vmem:[%s3 + $0x228] sm:$0xff]
        %v2903 = vld [vmem:[%s3 + $0x230] sm:$0xff]
        %v2904 = vld [vmem:[%s3 + $0x238] sm:$0xff]
        %v2905 = vld [vmem:[%s3 + $0x240] sm:$0xff]
        %v2906 = vld [vmem:[%s3 + $0x248] sm:$0xff]
        %v2907 = vld [vmem:[%s3 + $0x250] sm:$0xff]
        %v2908 = vld [vmem:[%s3 + $0x258] sm:$0xff]
        %v2909 = vld [vmem:[%s3 + $0x260] sm:$0xff]
        %v2910 = vld [vmem:[%s3 + $0x268] sm:$0xff]
        %v2911 = vld [vmem:[%s3 + $0x270] sm:$0xff]
        %v2912 = vld [vmem:[%s3 + $0x278] sm:$0xff]
        %v2913 = vld [vmem:[%s3 + $0x280] sm:$0xff]
        %v2914 = vld [vmem:[%s3 + $0x288] sm:$0xff]
        %v2915 = vld [vmem:[%s3 + $0x290] sm:$0xff]
        %v2916 = vld [vmem:[%s3 + $0x298] sm:$0xff]
        %v2917 = vld [vmem:[%s3 + $0x2a0] sm:$0xff]
        %v2918 = vld [vmem:[%s3 + $0x2a8] sm:$0xff]
        %v2919 = vld [vmem:[%s3 + $0x2b0] sm:$0xff]
        %v2920 = vld [vmem:[%s3 + $0x2b8] sm:$0xff]
        %v2921 = vld [vmem:[%s3 + $0x2c0] sm:$0xff]
        %v2922 = vld [vmem:[%s3 + $0x2c8] sm:$0xff]
        %v2923 = vld [vmem:[%s3 + $0x2d0] sm:$0xff]
        %v2924 = vld [vmem:[%s3 + $0x2d8] sm:$0xff]
        %v2925 = vld [vmem:[%s3 + $0x2e0] sm:$0xff]
        %v2926 = vld [vmem:[%s3 + $0x2e8] sm:$0xff]
        %v2927 = vld [vmem:[%s3 + $0x2f0] sm:$0xff]
        %v2928 = vld [vmem:[%s3 + $0x2f8] sm:$0xff]
        %v2929 = vld [vmem:[%s3 + $0x300] sm:$0xff]
        %v2930 = vld [vmem:[%s3 + $0x308] sm:$0xff]
        %v2931 = vld [vmem:[%s3 + $0x310] sm:$0xff]
        %v2932 = vld [vmem:[%s3 + $0x318] sm:$0xff]
        %v2933 = vld [vmem:[%s3 + $0x320] sm:$0xff]
        %v2934 = vld [vmem:[%s3 + $0x328] sm:$0xff]
        %v2935 = vld [vmem:[%s3 + $0x330] sm:$0xff]
        %v2936 = vld [vmem:[%s3 + $0x338] sm:$0xff]
        %v2937 = vld [vmem:[%s3 + $0x340] sm:$0xff]
        %v2938 = vld [vmem:[%s3 + $0x348] sm:$0xff]
        %v2939 = vld [vmem:[%s3 + $0x350] sm:$0xff]
        %v2940 = vld [vmem:[%s3 + $0x358] sm:$0xff]
        %v2941 = vld [vmem:[%s3 + $0x360] sm:$0xff]
        %v2942 = vld [vmem:[%s3 + $0x368] sm:$0xff]
        %v2943 = vld [vmem:[%s3 + $0x370] sm:$0xff]
        %v2944 = vld [vmem:[%s3 + $0x378] sm:$0xff]
        %v2945 = vld [vmem:[%s3 + $0x380] sm:$0xff]
        %v2946 = vld [vmem:[%s3 + $0x388] sm:$0xff]
        %v2947 = vld [vmem:[%s3 + $0x390] sm:$0xff]
        %v2948 = vld [vmem:[%s3 + $0x398] sm:$0xff]
        %v2949 = vld [vmem:[%s3 + $0x3a0] sm:$0xff]
        %v2950 = vld [vmem:[%s3 + $0x3a8] sm:$0xff]
        %v2951 = vld [vmem:[%s3 + $0x3b0] sm:$0xff]
        %v2952 = vld [vmem:[%s3 + $0x3b8] sm:$0xff]
        %v2953 = vld [vmem:[%s3 + $0x3c0] sm:$0xff]
        %v2954 = vld [vmem:[%s3 + $0x3c8] sm:$0xff]
        %v2955 = vld [vmem:[%s3 + $0x3d0] sm:$0xff]
        %v2956 = vld [vmem:[%s3 + $0x3d8] sm:$0xff]
        %v2957 = vld [vmem:[%s3 + $0x3e0] sm:$0xff]
        %v2958 = vld [vmem:[%s3 + $0x3e8] sm:$0xff]
        %v2959 = vld [vmem:[%s3 + $0x3f0] sm:$0xff]
        %v2960 = vld [vmem:[%s3 + $0x3f8] sm:$0xff]
        %v2961 = vld [vmem:[%s4] sm:$0x1]
        %v2963 = vlaneseq
        %v2964 = vshrl.u32 %v2963, 7
        %v2965 = vsub.s32 0, %v2964
        %v2966 = vrot.slane %v2961, %v2965
        %v2970 = vcombine.high %v2831, %v2831
        %v2972 = vunpack.c.l.s4 1983009808
        %v2973 = vunpack.c.0.s8 %v2972
        %v2974 = vlaneseq
        %v2975 = vshrl.u32 %v2974, 7
        %v2976 = vsub.s32 %v2973, %v2975
        %v2977 = vrot.slane %v2831, %v2976
        %v2979 = vunpack.c.l.s4 1983009808
        %v2980 = vunpack.c.0.s8 %v2979
        %v2981 = vlaneseq
        %v2982 = vshrl.u32 %v2981, 7
        %v2983 = vsub.s32 %v2980, %v2982
        %v2984 = vrot.slane %v2970, %v2983
        %v2985 = vcombine.high %v2977, %v2977
        %v2986 = vcombine.high %v2984, %v2984
        %v2987 = vcombine.high %v2832, %v2832
        %v2989 = vunpack.c.l.s4 1983009808
        %v2990 = vunpack.c.0.s8 %v2989
        %v2991 = vlaneseq
        %v2992 = vshrl.u32 %v2991, 7
        %v2993 = vsub.s32 %v2990, %v2992
        %v2994 = vrot.slane %v2832, %v2993
        %v2996 = vunpack.c.l.s4 1983009808
        %v2997 = vunpack.c.0.s8 %v2996
        %v2998 = vlaneseq
        %v2999 = vshrl.u32 %v2998, 7
        %v3000 = vsub.s32 %v2997, %v2999
        %v3001 = vrot.slane %v2987, %v3000
        %v3002 = vcombine.high %v2994, %v2994
        %v3003 = vcombine.high %v3001, %v3001
        %3012 = vmatprep.subr.mxu0 0.0
        %3013 = vmatpush1.msra.mxu0 %v2848
        %3014 = vmatprep.subr.mxu0 0.0
        %3015 = vmatpush1.msra.mxu0 %v2847
        %3016 = vmatprep.subr.mxu0 0.0
        %3017 = vmatpush1.msra.mxu0 %v2846
        %3018 = vmatprep.subr.mxu0 0.0
        %3019 = vmatpush1.msra.mxu0 %v2845
        %3020 = vmatprep.subr.mxu0 0.0
        %3021 = vmatpush1.msra.mxu0 %v2844
        %3022 = vmatprep.subr.mxu0 0.0
        %3023 = vmatpush1.msra.mxu0 %v2843
        %3024 = vmatprep.subr.mxu0 0.0
        %3025 = vmatpush1.msra.mxu0 %v2842
        %3026 = vmatprep.subr.mxu0 0.0
        %3027 = vmatpush1.msra.mxu0 %v2841
        %3028 = vmatprep.subr.mxu0 0.0
        %3029 = vmatpush1.msra.mxu0 %v2840
        %3030 = vmatprep.subr.mxu0 0.0
        %3031 = vmatpush1.msra.mxu0 %v2839
        %3032 = vmatprep.subr.mxu0 0.0
        %3033 = vmatpush1.msra.mxu0 %v2838
        %3034 = vmatprep.subr.mxu0 0.0
        %3035 = vmatpush1.msra.mxu0 %v2837
        %3036 = vmatprep.subr.mxu0 0.0
        %3037 = vmatpush1.msra.mxu0 %v2836
        %3038 = vmatprep.subr.mxu0 0.0
        %3039 = vmatpush1.msra.mxu0 %v2835
        %3040 = vmatprep.subr.mxu0 0.0
        %3041 = vmatpush1.msra.mxu0 %v2834
        %3042 = vmatprep.subr.mxu0 0.0
        %3043 = vmatpush1.msra.mxu0 %v2833
        %3044 = vmatprep.subr.mxu0 0.0
        %3045 = vmatpush2.msra.mxu0 %v2864
        %3046 = vmatprep.subr.mxu0 0.0
        %3047 = vmatpush2.msra.mxu0 %v2863
        %3048 = vmatprep.subr.mxu0 0.0
        %3049 = vmatpush2.msra.mxu0 %v2862
        %3050 = vmatprep.subr.mxu0 0.0
        %3051 = vmatpush2.msra.mxu0 %v2861
        %3052 = vmatprep.subr.mxu0 0.0
        %3053 = vmatpush2.msra.mxu0 %v2860
        %3054 = vmatprep.subr.mxu0 0.0
        %3055 = vmatpush2.msra.mxu0 %v2859
        %3056 = vmatprep.subr.mxu0 0.0
        %3057 = vmatpush2.msra.mxu0 %v2858
        %3058 = vmatprep.subr.mxu0 0.0
        %3059 = vmatpush2.msra.mxu0 %v2857
        %3060 = vmatprep.subr.mxu0 0.0
        %3061 = vmatpush2.msra.mxu0 %v2856
        %3062 = vmatprep.subr.mxu0 0.0
        %3063 = vmatpush2.msra.mxu0 %v2855
        %3064 = vmatprep.subr.mxu0 0.0
        %3065 = vmatpush2.msra.mxu0 %v2854
        %3066 = vmatprep.subr.mxu0 0.0
        %3067 = vmatpush2.msra.mxu0 %v2853
        %3068 = vmatprep.subr.mxu0 0.0
        %3069 = vmatpush2.msra.mxu0 %v2852
        %3070 = vmatprep.subr.mxu0 0.0
        %3071 = vmatpush2.msra.mxu0 %v2851
        %3072 = vmatprep.subr.mxu0 0.0
        %3073 = vmatpush2.msra.mxu0 %v2850
        %3074 = vmatprep.subr.mxu0 0.0
        %3075 = vmatpush2.msra.mxu0 %v2849
        %3076 = vmatprep.mubr.f32.mxu0 %v2985
        %3077 = vmatmul.mubr.f32.gmra.mxu0 %v2977
        %v3078 = vpop.f32.mrf.mxu0
        %v3079 = vadd.f32 %v2966, %v3078
        %v3080 = vpop.f32.mrf.mxu0
        %3081 = vdwg.mxu0
        %3082 = vmatprep.subr.mxu0 0.0
        %3083 = vmatpush1.msra.mxu0 %v2880
        %3084 = vmatprep.subr.mxu0 0.0
        %3085 = vmatpush1.msra.mxu0 %v2879
        %3086 = vmatprep.subr.mxu0 0.0
        %3087 = vmatpush1.msra.mxu0 %v2878
        %3088 = vmatprep.subr.mxu0 0.0
        %3089 = vmatpush1.msra.mxu0 %v2877
        %3090 = vmatprep.subr.mxu0 0.0
        %3091 = vmatpush1.msra.mxu0 %v2876
        %3092 = vmatprep.subr.mxu0 0.0
        %3093 = vmatpush1.msra.mxu0 %v2875
        %3094 = vmatprep.subr.mxu0 0.0
        %3095 = vmatpush1.msra.mxu0 %v2874
        %3096 = vmatprep.subr.mxu0 0.0
        %3097 = vmatpush1.msra.mxu0 %v2873
        %3098 = vmatprep.subr.mxu0 0.0
        %3099 = vmatpush1.msra.mxu0 %v2872
        %3100 = vmatprep.subr.mxu0 0.0
        %3101 = vmatpush1.msra.mxu0 %v2871
        %3102 = vmatprep.subr.mxu0 0.0
        %3103 = vmatpush1.msra.mxu0 %v2870
        %3104 = vmatprep.subr.mxu0 0.0
        %3105 = vmatpush1.msra.mxu0 %v2869
        %3106 = vmatprep.subr.mxu0 0.0
        %3107 = vmatpush1.msra.mxu0 %v2868
        %3108 = vmatprep.subr.mxu0 0.0
        %3109 = vmatpush1.msra.mxu0 %v2867
        %3110 = vmatprep.subr.mxu0 0.0
        %3111 = vmatpush1.msra.mxu0 %v2866
        %3112 = vmatprep.subr.mxu0 0.0
        %3113 = vmatpush1.msra.mxu0 %v2865
        %3114 = vmatprep.subr.mxu0 0.0
        %3115 = vmatpush2.msra.mxu0 %v2896
        %3116 = vmatprep.subr.mxu0 0.0
        %3117 = vmatpush2.msra.mxu0 %v2895
        %3118 = vmatprep.subr.mxu0 0.0
        %3119 = vmatpush2.msra.mxu0 %v2894
        %3120 = vmatprep.subr.mxu0 0.0
        %3121 = vmatpush2.msra.mxu0 %v2893
        %3122 = vmatprep.subr.mxu0 0.0
        %3123 = vmatpush2.msra.mxu0 %v2892
        %3124 = vmatprep.subr.mxu0 0.0
        %3125 = vmatpush2.msra.mxu0 %v2891
        %3126 = vmatprep.subr.mxu0 0.0
        %3127 = vmatpush2.msra.mxu0 %v2890
        %3128 = vmatprep.subr.mxu0 0.0
        %3129 = vmatpush2.msra.mxu0 %v2889
        %3130 = vmatprep.subr.mxu0 0.0
        %3131 = vmatpush2.msra.mxu0 %v2888
        %3132 = vmatprep.subr.mxu0 0.0
        %3133 = vmatpush2.msra.mxu0 %v2887
        %3134 = vmatprep.subr.mxu0 0.0
        %3135 = vmatpush2.msra.mxu0 %v2886
        %3136 = vmatprep.subr.mxu0 0.0
        %3137 = vmatpush2.msra.mxu0 %v2885
        %3138 = vmatprep.subr.mxu0 0.0
        %3139 = vmatpush2.msra.mxu0 %v2884
        %3140 = vmatprep.subr.mxu0 0.0
        %3141 = vmatpush2.msra.mxu0 %v2883
        %3142 = vmatprep.subr.mxu0 0.0
        %3143 = vmatpush2.msra.mxu0 %v2882
        %3144 = vmatprep.subr.mxu0 0.0
        %3145 = vmatpush2.msra.mxu0 %v2881
        %3146 = vmatprep.mubr.f32.mxu0 %v2986
        %3147 = vmatmul.mubr.f32.gmra.mxu0 %v2984
        %v3148 = vpop.f32.mrf.mxu0
        %v3149 = vadd.f32 %v3079, %v3148
        %v3150 = vpop.f32.mrf.mxu0
        %3151 = vdwg.mxu0
        %3152 = vmatprep.subr.mxu0 0.0
        %3153 = vmatpush1.msra.mxu0 %v2912
        %3154 = vmatprep.subr.mxu0 0.0
        %3155 = vmatpush1.msra.mxu0 %v2911
        %3156 = vmatprep.subr.mxu0 0.0
        %3157 = vmatpush1.msra.mxu0 %v2910
        %3158 = vmatprep.subr.mxu0 0.0
        %3159 = vmatpush1.msra.mxu0 %v2909
        %3160 = vmatprep.subr.mxu0 0.0
        %3161 = vmatpush1.msra.mxu0 %v2908
        %3162 = vmatprep.subr.mxu0 0.0
        %3163 = vmatpush1.msra.mxu0 %v2907
        %3164 = vmatprep.subr.mxu0 0.0
        %3165 = vmatpush1.msra.mxu0 %v2906
        %3166 = vmatprep.subr.mxu0 0.0
        %3167 = vmatpush1.msra.mxu0 %v2905
        %3168 = vmatprep.subr.mxu0 0.0
        %3169 = vmatpush1.msra.mxu0 %v2904
        %3170 = vmatprep.subr.mxu0 0.0
        %3171 = vmatpush1.msra.mxu0 %v2903
        %3172 = vmatprep.subr.mxu0 0.0
        %3173 = vmatpush1.msra.mxu0 %v2902
        %3174 = vmatprep.subr.mxu0 0.0
        %3175 = vmatpush1.msra.mxu0 %v2901
        %3176 = vmatprep.subr.mxu0 0.0
        %3177 = vmatpush1.msra.mxu0 %v2900
        %3178 = vmatprep.subr.mxu0 0.0
        %3179 = vmatpush1.msra.mxu0 %v2899
        %3180 = vmatprep.subr.mxu0 0.0
        %3181 = vmatpush1.msra.mxu0 %v2898
        %3182 = vmatprep.subr.mxu0 0.0
        %3183 = vmatpush1.msra.mxu0 %v2897
        %3184 = vmatprep.subr.mxu0 0.0
        %3185 = vmatpush2.msra.mxu0 %v2928
        %3186 = vmatprep.subr.mxu0 0.0
        %3187 = vmatpush2.msra.mxu0 %v2927
        %3188 = vmatprep.subr.mxu0 0.0
        %3189 = vmatpush2.msra.mxu0 %v2926
        %3190 = vmatprep.subr.mxu0 0.0
        %3191 = vmatpush2.msra.mxu0 %v2925
        %3192 = vmatprep.subr.mxu0 0.0
        %3193 = vmatpush2.msra.mxu0 %v2924
        %3194 = vmatprep.subr.mxu0 0.0
        %3195 = vmatpush2.msra.mxu0 %v2923
        %3196 = vmatprep.subr.mxu0 0.0
        %3197 = vmatpush2.msra.mxu0 %v2922
        %3198 = vmatprep.subr.mxu0 0.0
        %3199 = vmatpush2.msra.mxu0 %v2921
        %3200 = vmatprep.subr.mxu0 0.0
        %3201 = vmatpush2.msra.mxu0 %v2920
        %3202 = vmatprep.subr.mxu0 0.0
        %3203 = vmatpush2.msra.mxu0 %v2919
        %3204 = vmatprep.subr.mxu0 0.0
        %3205 = vmatpush2.msra.mxu0 %v2918
        %3206 = vmatprep.subr.mxu0 0.0
        %3207 = vmatpush2.msra.mxu0 %v2917
        %3208 = vmatprep.subr.mxu0 0.0
        %3209 = vmatpush2.msra.mxu0 %v2916
        %3210 = vmatprep.subr.mxu0 0.0
        %3211 = vmatpush2.msra.mxu0 %v2915
        %3212 = vmatprep.subr.mxu0 0.0
        %3213 = vmatpush2.msra.mxu0 %v2914
        %3214 = vmatprep.subr.mxu0 0.0
        %3215 = vmatpush2.msra.mxu0 %v2913
        %3216 = vmatprep.mubr.f32.mxu0 %v3002
        %3217 = vmatmul.mubr.f32.gmra.mxu0 %v2994
        %v3218 = vpop.f32.mrf.mxu0
        %v3219 = vadd.f32 %v3149, %v3218
        %v3220 = vpop.f32.mrf.mxu0
        %3221 = vdwg.mxu0
        %3222 = vmatprep.subr.mxu0 0.0
        %3223 = vmatpush1.msra.mxu0 %v2944
        %3224 = vmatprep.subr.mxu0 0.0
        %3225 = vmatpush1.msra.mxu0 %v2943
        %3226 = vmatprep.subr.mxu0 0.0
        %3227 = vmatpush1.msra.mxu0 %v2942
        %3228 = vmatprep.subr.mxu0 0.0
        %3229 = vmatpush1.msra.mxu0 %v2941
        %3230 = vmatprep.subr.mxu0 0.0
        %3231 = vmatpush1.msra.mxu0 %v2940
        %3232 = vmatprep.subr.mxu0 0.0
        %3233 = vmatpush1.msra.mxu0 %v2939
        %3234 = vmatprep.subr.mxu0 0.0
        %3235 = vmatpush1.msra.mxu0 %v2938
        %3236 = vmatprep.subr.mxu0 0.0
        %3237 = vmatpush1.msra.mxu0 %v2937
        %3238 = vmatprep.subr.mxu0 0.0
        %3239 = vmatpush1.msra.mxu0 %v2936
        %3240 = vmatprep.subr.mxu0 0.0
        %3241 = vmatpush1.msra.mxu0 %v2935
        %3242 = vmatprep.subr.mxu0 0.0
        %3243 = vmatpush1.msra.mxu0 %v2934
        %3244 = vmatprep.subr.mxu0 0.0
        %3245 = vmatpush1.msra.mxu0 %v2933
        %3246 = vmatprep.subr.mxu0 0.0
        %3247 = vmatpush1.msra.mxu0 %v2932
        %3248 = vmatprep.subr.mxu0 0.0
        %3249 = vmatpush1.msra.mxu0 %v2931
        %3250 = vmatprep.subr.mxu0 0.0
        %3251 = vmatpush1.msra.mxu0 %v2930
        %3252 = vmatprep.subr.mxu0 0.0
        %3253 = vmatpush1.msra.mxu0 %v2929
        %3254 = vmatprep.subr.mxu0 0.0
        %3255 = vmatpush2.msra.mxu0 %v2960
        %3256 = vmatprep.subr.mxu0 0.0
        %3257 = vmatpush2.msra.mxu0 %v2959
        %3258 = vmatprep.subr.mxu0 0.0
        %3259 = vmatpush2.msra.mxu0 %v2958
        %3260 = vmatprep.subr.mxu0 0.0
        %3261 = vmatpush2.msra.mxu0 %v2957
        %3262 = vmatprep.subr.mxu0 0.0
        %3263 = vmatpush2.msra.mxu0 %v2956
        %3264 = vmatprep.subr.mxu0 0.0
        %3265 = vmatpush2.msra.mxu0 %v2955
        %3266 = vmatprep.subr.mxu0 0.0
        %3267 = vmatpush2.msra.mxu0 %v2954
        %3268 = vmatprep.subr.mxu0 0.0
        %3269 = vmatpush2.msra.mxu0 %v2953
        %3270 = vmatprep.subr.mxu0 0.0
        %3271 = vmatpush2.msra.mxu0 %v2952
        %3272 = vmatprep.subr.mxu0 0.0
        %3273 = vmatpush2.msra.mxu0 %v2951
        %3274 = vmatprep.subr.mxu0 0.0
        %3275 = vmatpush2.msra.mxu0 %v2950
        %3276 = vmatprep.subr.mxu0 0.0
        %3277 = vmatpush2.msra.mxu0 %v2949
        %3278 = vmatprep.subr.mxu0 0.0
        %3279 = vmatpush2.msra.mxu0 %v2948
        %3280 = vmatprep.subr.mxu0 0.0
        %3281 = vmatpush2.msra.mxu0 %v2947
        %3282 = vmatprep.subr.mxu0 0.0
        %3283 = vmatpush2.msra.mxu0 %v2946
        %3284 = vmatprep.subr.mxu0 0.0
        %3285 = vmatpush2.msra.mxu0 %v2945
        %3286 = vmatprep.mubr.f32.mxu0 %v3003
        %3287 = vmatmul.mubr.f32.gmra.mxu0 %v3001
        %v3288 = vpop.f32.mrf.mxu0
        %v3289 = vadd.f32 %v3219, %v3288
        %v3290 = vpop.f32.mrf.mxu0
        %3291 = vdwg.mxu0
        %v3292 = vlaneseq
        %v3293 = vand.u32 %v3292, 127
        %vm3294 = vcmp.ge.s32.totalorder %v3293, 1
        %vm3295 = vcmp.lt.s32.totalorder %v3293, 7
        %vm3296 = vmand %vm3294, %vm3295
        %v3297 = vsel %vm3296, %v3289, 0.0
        %vm3298 = vcmask 1041408
        %v3299 = vsel %vm3298, %v3297, 0.0
        %3300 = vadd.xlane.f32.xlu0 %v3299
        %v3301 = vpop.xlane.xlu0 %3300
        %v3302 = vrot.slane %v3301, 4
        %v3303 = vadd.f32 %v3301, %v3302
        %v3304 = vrot.slane %v3303, 2
        %v3305 = vadd.f32 %v3303, %v3304
        %v3306 = vrot.slane %v3305, 1
        %v3307 = vadd.f32 %v3305, %v3306
        %s3308 = vtos %v3307
        %v3309 = vrcp.pop 12.0
        %s3310 = vtos %v3309
        %s3311 = smul.f32 %s3308, %s3310
        %v3312 = vstv %s3311
        %v3313 = vsub.f32 %v3289, %v3312
        %3315 = vset.pattern.permute.xlu0 0
        %3316 = vperm.xlu0 %3315, %v3289
        %v3317 = vpop.permute.xlu0 %3316
        %v3319 = vadd.f32 %v3317, %v3313
        %v3320 = vsel %vm3296, %v3319, 0.0
        %3321 = vst [vmem:[%s5] sm:$0x3] %v3320
      $region48: #{dueling_forward.7} parent=39 // pred_fallthru
        _
      // Predicated region
      $region49: #{dueling_forward.7} parent=39 // pred_check
        %p3322 = pneg %p144
      $region50: #{dueling_forward.7} parent=39 // pred_check_branch
        %3324 = sbr.rel (%p3322) target = $region52
      $region51: #{dueling_forward.7} parent=39 // pred_region
        _
      $region52: #{dueling_forward.7} parent=39 // pred_fallthru
        _
      // Predicated region
      $region53: #{dueling_forward.7} parent=39 // pred_check
        %p3325 = pneg %p144
      $region54: #{dueling_forward.7} parent=39 // pred_check_branch
        %3327 = sbr.rel (%p3325) target = $region56
      $region55: #{dueling_forward.7} parent=39 // pred_region
        _
      $region56: #{dueling_forward.7} parent=39 // pred_fallthru
        _
    $region40: #{dueling_forward.7} parent=5 // pred_fallthru
      _
    %p3328 = scmp.le.s32.totalorder 2, %s11
    // Predicated region
    $region57: #{dueling_forward.7} parent=5 // pred_check
      %p3329 = pneg %p3328
    $region58: #{dueling_forward.7} parent=5 // pred_check_branch
      %3331 = sbr.rel (%p3329) target = $region60
    $region59: #{dueling_forward.7} parent=5 // pred_region
      %s3332 = ssub.s32 %s11, 2
    $region60: #{dueling_forward.7} parent=5 // pred_fallthru
      _
  $region6: #{dueling_forward.7} parent=0 // loop_footer
    %s15 = sadd.s32 1, %s11
  $region7: #{dueling_forward.7} parent=0 // loop_footer_branch
    %10 = sbr.rel target = $region3
  $region8: #{dueling_forward.7} parent=0 // loop_exit
    _

</llo_original>
